<compile_context>
chip_gen: v7x
topology: tpu7x:2x2x1
jax: 0.10.0
libtpu: 0.0.40
codegen_flags: <defaults>
</compile_context>

<pallas_src>
import functools
import math

import jax
import jax.numpy as jnp
from jax.experimental import pallas as pl
from jax.experimental.pallas import tpu as pltpu

NUM_ORDERS = 4
LN_EPS = 1e-5  # PyTorch nn.LayerNorm default


def _layer_norm(x, w, b):
    mean = jnp.mean(x, axis=-1, keepdims=True)
    var = jnp.mean((x - mean) ** 2, axis=-1, keepdims=True)
    return (x - mean) * jax.lax.rsqrt(var + LN_EPS) * w + b


def _recip(x, approx):
    if approx:
        return pl.reciprocal(x, approx=True)  # EUP slot, nearly free
    return 1.0 / x


def _erf(x, approx):
    # Abramowitz & Stegun 7.1.26, |abs err| < 1.5e-7 (fp32-adequate).
    a1, a2, a3, a4, a5 = 0.254829592, -0.284496736, 1.421413741, -1.453152027, 1.061405429
    p = 0.3275911
    ax = jnp.abs(x)
    t = _recip(1.0 + p * ax, approx)
    poly = ((((a5 * t + a4) * t + a3) * t + a2) * t + a1) * t
    y = 1.0 - poly * jnp.exp(-ax * ax)
    return jnp.where(x >= 0, y, -y)


def _gelu_exact(x, approx):
    # matches torch.nn.GELU() (exact erf formulation)
    return 0.5 * x * (1.0 + _erf(x * (1.0 / math.sqrt(2.0)), approx))


def encoder_layer_kernel(
    x_ref, perm_ref,
    ln1_w_ref, ln1_b_ref,
    ord_w_ref, ord_b_ref,
    q_w_ref, q_b_ref, k_w_ref, k_b_ref, v_w_ref, v_b_ref,
    out_w_ref, out_b_ref,
    ln2_w_ref, ln2_b_ref,
    mlp_w1_ref, mlp_b1_ref, mlp_w2_ref, mlp_b2_ref,
    o_ref,
    zo_ref, zcat_ref, h2_ref, acc_ref,
    *, num_heads_per_order, scale, mm_dtype, approx,
):
    c = pl.program_id(1)  # mlp-chunk index (inner, "arbitrary" axis)

    # ---------------- attention block: only on the first mlp-chunk step ----------------
    @pl.when(c == 0)
    def _attention_block():
        x = x_ref[0]                                   # (L, D) f32, original token order
        L, D = x.shape
        d4 = D // NUM_ORDERS
        hd = d4 // num_heads_per_order

        # LayerNorm1 once (attention is permutation-equivariant, permute z instead)
        h = _layer_norm(x, ln1_w_ref[...], ln1_b_ref[...])
        h_c = h.astype(mm_dtype)

        for o in range(NUM_ORDERS):
            y = jnp.dot(h_c, ord_w_ref[o], preferred_element_type=jnp.float32) + ord_b_ref[o]
            y_c = y.astype(mm_dtype)
            # fold attention scale into q once per order (not per (L, L) logits)
            q = (jnp.dot(y_c, q_w_ref[o], preferred_element_type=jnp.float32) + q_b_ref[o]) * scale
            k = jnp.dot(y_c, k_w_ref[o], preferred_element_type=jnp.float32) + k_b_ref[o]
            v = jnp.dot(y_c, v_w_ref[o], preferred_element_type=jnp.float32) + v_b_ref[o]
            q_c, k_c, v_c = q.astype(mm_dtype), k.astype(mm_dtype), v.astype(mm_dtype)

            for head in range(num_heads_per_order):
                lo = head * hd
                qh = q_c[:, lo:lo + hd]
                kh = k_c[:, lo:lo + hd]
                vh = v_c[:, lo:lo + hd]
                dots = jax.lax.dot_general(qh, kh, (((1,), (1,)), ((), ())),
                                           preferred_element_type=jnp.float32)   # (L, L)
                dots = dots - jnp.max(dots, axis=-1, keepdims=True)
                e = jnp.exp(dots)
                attn = e * _recip(jnp.sum(e, axis=-1, keepdims=True), approx)
                # attention dropout: identity in eval mode
                zh = jnp.dot(attn.astype(mm_dtype), vh, preferred_element_type=jnp.float32)
                zo_ref[:, lo:lo + hd] = zh              # assemble heads of this order

            zo = zo_ref[...]                            # (L, d4), unpermuted sequence order
            if o > 0:
                # apply this order's sequence permutation (exact one-hot matmul on MXU)
                zo = jnp.dot(perm_ref[o - 1], zo.astype(mm_dtype),
                             preferred_element_type=jnp.float32)
            zcat_ref[:, o * d4:(o + 1) * d4] = zo

        # single full-depth out_nn projection (hoisted out of the head/order loops)
        msa = jnp.dot(zcat_ref[...].astype(mm_dtype), out_w_ref[...],
                      preferred_element_type=jnp.float32) + out_b_ref[...]
        x_res = msa + x                                 # residual 1
        h2 = _layer_norm(x_res, ln2_w_ref[...], ln2_b_ref[...])
        h2_ref[...] = h2.astype(mm_dtype)
        acc_ref[...] = x_res + mlp_b2_ref[...]          # seed MLP accumulator: residual + b2

    # ---------------- MLP: one mlp_dim chunk per grid step along axis 1 ----------------
    m = jnp.dot(h2_ref[...], mlp_w1_ref[...], preferred_element_type=jnp.float32) + mlp_b1_ref[...]
    m = _gelu_exact(m, approx)                          # Dropout: identity (eval)
    acc_ref[...] += jnp.dot(m.astype(mm_dtype), mlp_w2_ref[...],
                            preferred_element_type=jnp.float32)

    @pl.when(c == pl.num_programs(1) - 1)
    def _finalize():
        o_ref[0] = acc_ref[...].astype(o_ref.dtype)     # residual 2 already folded into acc


def perm_indices(l):
    s = int(math.isqrt(l))
    assert s * s == l, "sequence length must be a perfect square for orders 3/4"
    idx = jnp.arange(l)
    i1 = idx
    i2 = idx[::-1]
    i3 = idx.reshape(s, s).T.reshape(-1)
    i4 = i3[::-1]
    return i1, i2, i3, i4


def _pick_mlp_chunk(mlp_dim):
    # Keep the (L, chunk) intermediate + mlp weight blocks bounded (v7x: 64 MiB VMEM);
    # chunks are multiples of 256 to match the v6e/v7x MXU tile.
    if mlp_dim <= 2048:
        return mlp_dim
    for c in (2048, 1536, 1024, 512, 256, 128):
        if mlp_dim % c == 0:
            return c
    return mlp_dim


def encoder_layer_forward(params, x, *, num_heads, matmul_dtype=jnp.bfloat16):
    B, L, D = x.shape
    nh_per_order = num_heads // NUM_ORDERS
    d4 = D // NUM_ORDERS
    scale = float(d4) ** (-0.5)
    mmd = jnp.dtype(matmul_dtype)
    approx = bool(mmd != jnp.float32)   # fast EUP reciprocal only in the low-precision config

    # One-hot permutation matrices for orders 2..4 (order 1 is identity).
    _, i2, i3, i4 = perm_indices(L)
    perm_mats = jnp.stack([jax.nn.one_hot(i, L, dtype=mmd) for i in (i2, i3, i4)])  # (3, L, L)

    mlp_dim = params["mlp_w1"].shape[1]
    C = _pick_mlp_chunk(mlp_dim)
    NC = mlp_dim // C

    def cast(name):   # matmul operands in mm dtype; LN params / biases stay f32
        return params[name].astype(mmd)

    inputs = [
        x,
        perm_mats,
        params["ln1_w"], params["ln1_b"],
        cast("ord_w"), params["ord_b"],
        cast("q_w"), params["q_b"],
        cast("k_w"), params["k_b"],
        cast("v_w"), params["v_b"],
        cast("out_w"), params["out_b"],
        params["ln2_w"], params["ln2_b"],
        cast("mlp_w1"), params["mlp_b1"],
        cast("mlp_w2"), params["mlp_b2"],
    ]

    def rep(a):
        nd = a.ndim
        return pl.BlockSpec(a.shape, lambda b, c, _nd=nd: (0,) * _nd)

    in_specs = [
        pl.BlockSpec((1, L, D), lambda b, c: (b, 0, 0)),   # x
        rep(perm_mats),
        rep(params["ln1_w"]), rep(params["ln1_b"]),
        rep(params["ord_w"]), rep(params["ord_b"]),
        rep(params["q_w"]), rep(params["q_b"]),
        rep(params["k_w"]), rep(params["k_b"]),
        rep(params["v_w"]), rep(params["v_b"]),
        rep(params["out_w"]), rep(params["out_b"]),
        rep(params["ln2_w"]), rep(params["ln2_b"]),
        pl.BlockSpec((D, C), lambda b, c: (0, c)),          # mlp_w1, chunked over mlp_dim
        pl.BlockSpec((1, C), lambda b, c: (0, c)),          # mlp_b1, chunked over mlp_dim
        pl.BlockSpec((C, D), lambda b, c: (c, 0)),          # mlp_w2, chunked over mlp_dim
        rep(params["mlp_b2"]),
    ]

    scratch_shapes = [
        pltpu.VMEM((L, d4), jnp.float32),   # per-order head-assembled z
        pltpu.VMEM((L, D), jnp.float32),    # permuted z of all orders (feeds out_nn matmul)
        pltpu.VMEM((L, D), mmd),            # LN2 output, reused by every mlp chunk
        pltpu.VMEM((L, D), jnp.float32),    # output accumulator (residual + mlp partials)
    ]

    # Size the scoped VMEM limit from the actual working set (conservative upper bound:
    # double-buffered operands + output block + scratch + headroom).
    operand_bytes = sum(int(a.size) * a.dtype.itemsize for a in inputs)
    out_block_bytes = L * D * x.dtype.itemsize
    scratch_bytes = L * d4 * 4 + 2 * (L * D * 4) + L * D * mmd.itemsize
    est = 2 * (operand_bytes + out_block_bytes) + scratch_bytes + (8 << 20)
    vmem_limit = int(min(96 << 20, max(32 << 20, est)))

    kernel = functools.partial(
        encoder_layer_kernel,
        num_heads_per_order=nh_per_order,
        scale=scale,
        mm_dtype=mmd,
        approx=approx,
    )

    out = pl.pallas_call(
        kernel,
        out_shape=jax.ShapeDtypeStruct((B, L, D), x.dtype),
        grid_spec=pltpu.PrefetchScalarGridSpec(
            num_scalar_prefetch=0,
            grid=(B, NC),
            in_specs=in_specs,
            out_specs=pl.BlockSpec((1, L, D), lambda b, c: (b, 0, 0)),
            scratch_shapes=scratch_shapes,
        ),
        compiler_params=pltpu.CompilerParams(
            dimension_semantics=("parallel", "arbitrary"),
            vmem_limit_bytes=vmem_limit,
        ),
    )(*inputs)
    return out, 0


# ---------------- deterministic parameter construction (synthetic) ----------------

def xavier_uniform(key, shape, fan_in, fan_out):
    bound = math.sqrt(6.0 / (fan_in + fan_out))
    return jax.random.uniform(key, shape, jnp.float32, -bound, bound)


def make_params(key, dim, mlp_dim):
    d4 = dim // NUM_ORDERS
    ks = jax.random.split(key, 16)
    params = {
        "ln1_w": jnp.ones((1, dim), jnp.float32),
        "ln1_b": jnp.zeros((1, dim), jnp.float32),
        # order{1..4}_nn: Linear(dim -> dim/4), stacked; weights stored (in, out)
        "ord_w": xavier_uniform(ks[0], (NUM_ORDERS, dim, d4), dim, d4),
        "ord_b": 0.02 * jax.random.normal(ks[1], (NUM_ORDERS, 1, d4), jnp.float32),
        # per-order q/k/v: Linear(d4 -> d4), xavier weights, zero biases (as in init_layers)
        "q_w": xavier_uniform(ks[2], (NUM_ORDERS, d4, d4), d4, d4),
        "q_b": jnp.zeros((NUM_ORDERS, 1, d4), jnp.float32),
        "k_w": xavier_uniform(ks[3], (NUM_ORDERS, d4, d4), d4, d4),
        "k_b": jnp.zeros((NUM_ORDERS, 1, d4), jnp.float32),
        "v_w": xavier_uniform(ks[4], (NUM_ORDERS, d4, d4), d4, d4),
        "v_b": jnp.zeros((NUM_ORDERS, 1, d4), jnp.float32),
        # out_nn: Linear(dim -> dim)
        "out_w": xavier_uniform(ks[5], (dim, dim), dim, dim),
        "out_b": 0.02 * jax.random.normal(ks[6], (1, dim), jnp.float32),
        "ln2_w": jnp.ones((1, dim), jnp.float32),
        "ln2_b": jnp.zeros((1, dim), jnp.float32),
        # MLP: xavier weights, normal(std=1e-6) biases (as in init_weights)
        "mlp_w1": xavier_uniform(ks[7], (dim, mlp_dim), dim, mlp_dim),
        "mlp_b1": 1e-6 * jax.random.normal(ks[8], (1, mlp_dim), jnp.float32),
        "mlp_w2": xavier_uniform(ks[9], (mlp_dim, dim), mlp_dim, dim),
        "mlp_b2": 1e-6 * jax.random.normal(ks[10], (1, dim), jnp.float32),
    }
    return params


# ---------------- pure-JAX reference (mirrors the PyTorch forward) ----------------

def reference_forward(params, x, *, num_heads):
    B, L, D = x.shape
    d4 = D // NUM_ORDERS
    nh = num_heads // NUM_ORDERS
    hd = d4 // nh
    scale = float(d4) ** (-0.5)

    def ln(v, w, b):
        mu = jnp.mean(v, axis=-1, keepdims=True)
        var = jnp.mean((v - mu) ** 2, axis=-1, keepdims=True)
        return (v - mu) / jnp.sqrt(var + LN_EPS) * w + b

    h = ln(x, params["ln1_w"], params["ln1_b"])
    _, i2, i3, i4 = perm_indices(L)
    xs = [h, h[:, i2, :], h[:, i3, :], h[:, i4, :]]

    outs = []
    for o in range(NUM_ORDERS):
        y = xs[o] @ params["ord_w"][o] + params["ord_b"][o]
        q = y @ params["q_w"][o] + params["q_b"][o]
        k = y @ params["k_w"][o] + params["k_b"][o]
        v = y @ params["v_w"][o] + params["v_b"][o]
        # the permute/view dance in MultiOrderHeadAttention == standard head split
        q = q.reshape(B, L, nh, hd).transpose(0, 2, 1, 3)
        k = k.reshape(B, L, nh, hd).transpose(0, 2, 1, 3)
        v = v.reshape(B, L, nh, hd).transpose(0, 2, 1, 3)
        dots = jnp.einsum("bhid,bhjd->bhij", q, k) * scale
        attn = jax.nn.softmax(dots, axis=-1)
        z = jnp.einsum("bhij,bhjd->bhid", attn, v)
        outs.append(z.transpose(0, 2, 1, 3).reshape(B, L, d4))

    cat = jnp.concatenate(outs, axis=-1)
    msa = cat @ params["out_w"] + params["out_b"]
    xr = msa + x

    h2 = ln(xr, params["ln2_w"], params["ln2_b"])
    m = h2 @ params["mlp_w1"] + params["mlp_b1"]
    m = jax.nn.gelu(m, approximate=False)
    m = m @ params["mlp_w2"] + params["mlp_b2"]
    return m + xr, 0


if __name__ == "__main__":
    # Small shapes consistent with the module: dim divisible by 4 and by num_heads,
    # seq length a perfect square (perm_orders requires it).
    B, L, DIM, MLP_DIM, NUM_HEADS = 2, 16, 32, 64, 8

    key = jax.random.PRNGKey(0)
    pkey, xkey = jax.random.split(key)
    params = make_params(pkey, DIM, MLP_DIM)
    x = jax.random.normal(xkey, (B, L, DIM), jnp.float32)

    ref, _ = reference_forward(params, x, num_heads=NUM_HEADS)

    # Strict semantic check: f32 matmul path must match the reference tightly.
    out_f32, _ = encoder_layer_forward(params, x, num_heads=NUM_HEADS,
                                       matmul_dtype=jnp.float32)
    out_f32 = jax.block_until_ready(out_f32)
    assert out_f32.shape == (B, L, DIM)
    assert jnp.allclose(out_f32, ref, atol=1e-4, rtol=1e-4), "f32 kernel mismatch vs reference"

    # Performance configuration: bf16 MXU inputs (f32 accumulate) + approx EUP reciprocal.
    out_bf16, _ = encoder_layer_forward(params, x, num_heads=NUM_HEADS,
                                        matmul_dtype=jnp.bfloat16)
    out_bf16 = jax.block_until_ready(out_bf16)
    assert out_bf16.shape == (B, L, DIM)
    assert jnp.allclose(out_bf16, ref, atol=1e-1, rtol=1e-1), "bf16 kernel mismatch vs reference"

    print("KERNEL_OK")
</pallas_src>

<mosaic_0001>
module attributes {stable_mosaic.version = 11 : i64} {
  func.func @encoder_layer_kernel(%arg0: i32, %arg1: i32, %arg2: memref<1x16x32xf32, #tpu.memory_space<vmem>>, %arg3: memref<3x16x16xf32, #tpu.memory_space<vmem>>, %arg4: memref<1x32xf32, #tpu.memory_space<vmem>>, %arg5: memref<1x32xf32, #tpu.memory_space<vmem>>, %arg6: memref<4x32x8xf32, #tpu.memory_space<vmem>>, %arg7: memref<4x1x8xf32, #tpu.memory_space<vmem>>, %arg8: memref<4x8x8xf32, #tpu.memory_space<vmem>>, %arg9: memref<4x1x8xf32, #tpu.memory_space<vmem>>, %arg10: memref<4x8x8xf32, #tpu.memory_space<vmem>>, %arg11: memref<4x1x8xf32, #tpu.memory_space<vmem>>, %arg12: memref<4x8x8xf32, #tpu.memory_space<vmem>>, %arg13: memref<4x1x8xf32, #tpu.memory_space<vmem>>, %arg14: memref<32x32xf32, #tpu.memory_space<vmem>>, %arg15: memref<1x32xf32, #tpu.memory_space<vmem>>, %arg16: memref<1x32xf32, #tpu.memory_space<vmem>>, %arg17: memref<1x32xf32, #tpu.memory_space<vmem>>, %arg18: memref<32x64xf32, #tpu.memory_space<vmem>>, %arg19: memref<1x64xf32, #tpu.memory_space<vmem>>, %arg20: memref<64x32xf32, #tpu.memory_space<vmem>>, %arg21: memref<1x32xf32, #tpu.memory_space<vmem>>, %arg22: memref<1x16x32xf32, #tpu.memory_space<vmem>>, %arg23: memref<16x8xf32, #tpu.memory_space<vmem>>, %arg24: memref<16x32xf32, #tpu.memory_space<vmem>>, %arg25: memref<16x32xf32, #tpu.memory_space<vmem>>, %arg26: memref<16x32xf32, #tpu.memory_space<vmem>>) attributes {dimension_semantics = [#tpu.dimension_semantics<parallel>, #tpu.dimension_semantics<arbitrary>], iteration_bounds = array<i64: 2, 1>, scalar_prefetch = 0 : i64, scratch_operands = 4 : i64, tpu.core_type = #tpu.core_type<tc>, window_params = [{transform_indices = @transform_0, window_bounds = array<i64: 1, 16, 32>}, {pipeline_mode = #tpu.pipeline_mode<synchronous>, transform_indices = @transform_1, window_bounds = array<i64: 3, 16, 16>}, {pipeline_mode = #tpu.pipeline_mode<synchronous>, transform_indices = @transform_2, window_bounds = array<i64: 1, 32>}, {pipeline_mode = #tpu.pipeline_mode<synchronous>, transform_indices = @transform_3, window_bounds = array<i64: 1, 32>}, {pipeline_mode = #tpu.pipeline_mode<synchronous>, transform_indices = @transform_4, window_bounds = array<i64: 4, 32, 8>}, {pipeline_mode = #tpu.pipeline_mode<synchronous>, transform_indices = @transform_5, window_bounds = array<i64: 4, 1, 8>}, {pipeline_mode = #tpu.pipeline_mode<synchronous>, transform_indices = @transform_6, window_bounds = array<i64: 4, 8, 8>}, {pipeline_mode = #tpu.pipeline_mode<synchronous>, transform_indices = @transform_7, window_bounds = array<i64: 4, 1, 8>}, {pipeline_mode = #tpu.pipeline_mode<synchronous>, transform_indices = @transform_8, window_bounds = array<i64: 4, 8, 8>}, {pipeline_mode = #tpu.pipeline_mode<synchronous>, transform_indices = @transform_9, window_bounds = array<i64: 4, 1, 8>}, {pipeline_mode = #tpu.pipeline_mode<synchronous>, transform_indices = @transform_10, window_bounds = array<i64: 4, 8, 8>}, {pipeline_mode = #tpu.pipeline_mode<synchronous>, transform_indices = @transform_11, window_bounds = array<i64: 4, 1, 8>}, {pipeline_mode = #tpu.pipeline_mode<synchronous>, transform_indices = @transform_12, window_bounds = array<i64: 32, 32>}, {pipeline_mode = #tpu.pipeline_mode<synchronous>, transform_indices = @transform_13, window_bounds = array<i64: 1, 32>}, {pipeline_mode = #tpu.pipeline_mode<synchronous>, transform_indices = @transform_14, window_bounds = array<i64: 1, 32>}, {pipeline_mode = #tpu.pipeline_mode<synchronous>, transform_indices = @transform_15, window_bounds = array<i64: 1, 32>}, {transform_indices = @transform_16, window_bounds = array<i64: 32, 64>}, {transform_indices = @transform_17, window_bounds = array<i64: 1, 64>}, {transform_indices = @transform_18, window_bounds = array<i64: 64, 32>}, {pipeline_mode = #tpu.pipeline_mode<synchronous>, transform_indices = @transform_19, window_bounds = array<i64: 1, 32>}, {transform_indices = @transform_20, window_bounds = array<i64: 1, 16, 32>}]} {
    %c0_i32 = arith.constant 0 : i32
    %0 = arith.cmpi eq, %arg1, %c0_i32 : i32
    %1 = arith.extui %0 : i1 to i32
    %c0_i32_0 = arith.constant 0 : i32
    %2 = arith.cmpi ne, %1, %c0_i32_0 : i32
    scf.if %2 {
      %c0_30 = arith.constant 0 : index
      %c0_31 = arith.constant 0 : index
      %c0_32 = arith.constant 0 : index
      %57 = vector.load %arg2[%c0_30, %c0_31, %c0_32] : memref<1x16x32xf32, #tpu.memory_space<vmem>>, vector<1x16x32xf32>
      %58 = vector.shape_cast %57 : vector<1x16x32xf32> to vector<16x32xf32>
      %c0_33 = arith.constant 0 : index
      %c0_34 = arith.constant 0 : index
      %59 = vector.load %arg4[%c0_33, %c0_34] : memref<1x32xf32, #tpu.memory_space<vmem>>, vector<1x32xf32>
      %c0_35 = arith.constant 0 : index
      %c0_36 = arith.constant 0 : index
      %60 = vector.load %arg5[%c0_35, %c0_36] : memref<1x32xf32, #tpu.memory_space<vmem>>, vector<1x32xf32>
      %cst_37 = arith.constant dense<0.000000e+00> : vector<16xf32>
      %61 = vector.multi_reduction <add>, %58, %cst_37 [1] : vector<16x32xf32> to vector<16xf32>
      %62 = vector.shape_cast %61 : vector<16xf32> to vector<16x1xf32>
      %cst_38 = arith.constant 3.200000e+01 : f32
      %63 = vector.broadcast %cst_38 : f32 to vector<16x1xf32>
      %64 = arith.divf %62, %63 : vector<16x1xf32>
      %65 = vector.broadcast %64 : vector<16x1xf32> to vector<16x32xf32>
      %66 = arith.subf %58, %65 : vector<16x32xf32>
      %67 = arith.mulf %66, %66 : vector<16x32xf32>
      %cst_39 = arith.constant dense<0.000000e+00> : vector<16xf32>
      %68 = vector.multi_reduction <add>, %67, %cst_39 [1] : vector<16x32xf32> to vector<16xf32>
      %69 = vector.shape_cast %68 : vector<16xf32> to vector<16x1xf32>
      %cst_40 = arith.constant 3.200000e+01 : f32
      %70 = vector.broadcast %cst_40 : f32 to vector<16x1xf32>
      %71 = arith.divf %69, %70 : vector<16x1xf32>
      %72 = vector.broadcast %64 : vector<16x1xf32> to vector<16x32xf32>
      %73 = arith.subf %58, %72 : vector<16x32xf32>
      %cst_41 = arith.constant 9.99999974E-6 : f32
      %74 = vector.broadcast %cst_41 : f32 to vector<16x1xf32>
      %75 = arith.addf %71, %74 : vector<16x1xf32>
      %76 = math.rsqrt %75 : vector<16x1xf32>
      %77 = vector.broadcast %76 : vector<16x1xf32> to vector<16x32xf32>
      %78 = arith.mulf %73, %77 : vector<16x32xf32>
      %79 = vector.broadcast %59 : vector<1x32xf32> to vector<16x32xf32>
      %80 = arith.mulf %78, %79 : vector<16x32xf32>
      %81 = vector.broadcast %60 : vector<1x32xf32> to vector<16x32xf32>
      %82 = arith.addf %80, %81 : vector<16x32xf32>
      %c0_42 = arith.constant 0 : index
      %c0_43 = arith.constant 0 : index
      %c0_44 = arith.constant 0 : index
      %83 = vector.load %arg6[%c0_42, %c0_43, %c0_44] : memref<4x32x8xf32, #tpu.memory_space<vmem>>, vector<1x32x8xf32>
      %84 = vector.shape_cast %83 : vector<1x32x8xf32> to vector<32x8xf32>
      %cst_45 = arith.constant dense<0.000000e+00> : vector<16x8xf32>
      %85 = tpu.matmul %82, %84, %cst_45 {dimension_numbers = #tpu.dot_dimension_numbers<[1], [0], [0], [1], [0, 0, 1, 1], [], []>} : vector<16x32xf32>, vector<32x8xf32>, vector<16x8xf32> -> vector<16x8xf32>
      %c0_46 = arith.constant 0 : index
      %c0_47 = arith.constant 0 : index
      %c0_48 = arith.constant 0 : index
      %86 = vector.load %arg7[%c0_46, %c0_47, %c0_48] : memref<4x1x8xf32, #tpu.memory_space<vmem>>, vector<1x1x8xf32>
      %87 = vector.shape_cast %86 : vector<1x1x8xf32> to vector<1x8xf32>
      %88 = vector.broadcast %87 : vector<1x8xf32> to vector<16x8xf32>
      %89 = arith.addf %85, %88 : vector<16x8xf32>
      %c0_49 = arith.constant 0 : index
      %c0_50 = arith.constant 0 : index
      %c0_51 = arith.constant 0 : index
      %90 = vector.load %arg8[%c0_49, %c0_50, %c0_51] : memref<4x8x8xf32, #tpu.memory_space<vmem>>, vector<1x8x8xf32>
      %91 = vector.shape_cast %90 : vector<1x8x8xf32> to vector<8x8xf32>
      %cst_52 = arith.constant dense<0.000000e+00> : vector<16x8xf32>
      %92 = tpu.matmul %89, %91, %cst_52 {dimension_numbers = #tpu.dot_dimension_numbers<[1], [0], [0], [1], [0, 0, 1, 1], [], []>} : vector<16x8xf32>, vector<8x8xf32>, vector<16x8xf32> -> vector<16x8xf32>
      %c0_53 = arith.constant 0 : index
      %c0_54 = arith.constant 0 : index
      %c0_55 = arith.constant 0 : index
      %93 = vector.load %arg9[%c0_53, %c0_54, %c0_55] : memref<4x1x8xf32, #tpu.memory_space<vmem>>, vector<1x1x8xf32>
      %94 = vector.shape_cast %93 : vector<1x1x8xf32> to vector<1x8xf32>
      %95 = vector.broadcast %94 : vector<1x8xf32> to vector<16x8xf32>
      %96 = arith.addf %92, %95 : vector<16x8xf32>
      %cst_56 = arith.constant 0.353553385 : f32
      %97 = vector.broadcast %cst_56 : f32 to vector<16x8xf32>
      %98 = arith.mulf %96, %97 : vector<16x8xf32>
      %c0_57 = arith.constant 0 : index
      %c0_58 = arith.constant 0 : index
      %c0_59 = arith.constant 0 : index
      %99 = vector.load %arg10[%c0_57, %c0_58, %c0_59] : memref<4x8x8xf32, #tpu.memory_space<vmem>>, vector<1x8x8xf32>
      %100 = vector.shape_cast %99 : vector<1x8x8xf32> to vector<8x8xf32>
      %cst_60 = arith.constant dense<0.000000e+00> : vector<16x8xf32>
      %101 = tpu.matmul %89, %100, %cst_60 {dimension_numbers = #tpu.dot_dimension_numbers<[1], [0], [0], [1], [0, 0, 1, 1], [], []>} : vector<16x8xf32>, vector<8x8xf32>, vector<16x8xf32> -> vector<16x8xf32>
      %c0_61 = arith.constant 0 : index
      %c0_62 = arith.constant 0 : index
      %c0_63 = arith.constant 0 : index
      %102 = vector.load %arg11[%c0_61, %c0_62, %c0_63] : memref<4x1x8xf32, #tpu.memory_space<vmem>>, vector<1x1x8xf32>
      %103 = vector.shape_cast %102 : vector<1x1x8xf32> to vector<1x8xf32>
      %104 = vector.broadcast %103 : vector<1x8xf32> to vector<16x8xf32>
      %105 = arith.addf %101, %104 : vector<16x8xf32>
      %c0_64 = arith.constant 0 : index
      %c0_65 = arith.constant 0 : index
      %c0_66 = arith.constant 0 : index
      %106 = vector.load %arg12[%c0_64, %c0_65, %c0_66] : memref<4x8x8xf32, #tpu.memory_space<vmem>>, vector<1x8x8xf32>
      %107 = vector.shape_cast %106 : vector<1x8x8xf32> to vector<8x8xf32>
      %cst_67 = arith.constant dense<0.000000e+00> : vector<16x8xf32>
      %108 = tpu.matmul %89, %107, %cst_67 {dimension_numbers = #tpu.dot_dimension_numbers<[1], [0], [0], [1], [0, 0, 1, 1], [], []>} : vector<16x8xf32>, vector<8x8xf32>, vector<16x8xf32> -> vector<16x8xf32>
      %c0_68 = arith.constant 0 : index
      %c0_69 = arith.constant 0 : index
      %c0_70 = arith.constant 0 : index
      %109 = vector.load %arg13[%c0_68, %c0_69, %c0_70] : memref<4x1x8xf32, #tpu.memory_space<vmem>>, vector<1x1x8xf32>
      %110 = vector.shape_cast %109 : vector<1x1x8xf32> to vector<1x8xf32>
      %111 = vector.broadcast %110 : vector<1x8xf32> to vector<16x8xf32>
      %112 = arith.addf %108, %111 : vector<16x8xf32>
      %113 = vector.extract_strided_slice %98 {offsets = [0, 0], sizes = [16, 4], strides = [1, 1]} : vector<16x8xf32> to vector<16x4xf32>
      %114 = vector.extract_strided_slice %105 {offsets = [0, 0], sizes = [16, 4], strides = [1, 1]} : vector<16x8xf32> to vector<16x4xf32>
      %115 = vector.extract_strided_slice %112 {offsets = [0, 0], sizes = [16, 4], strides = [1, 1]} : vector<16x8xf32> to vector<16x4xf32>
      %cst_71 = arith.constant dense<0.000000e+00> : vector<16x16xf32>
      %116 = tpu.matmul %113, %114, %cst_71 {dimension_numbers = #tpu.dot_dimension_numbers<[1], [1], [0], [0], [0, 0, 1, 0], [], []>} : vector<16x4xf32>, vector<16x4xf32>, vector<16x16xf32> -> vector<16x16xf32>
      %cst_72 = arith.constant dense<0xFF800000> : vector<16xf32>
      %117 = vector.multi_reduction <maximumf>, %116, %cst_72 [1] : vector<16x16xf32> to vector<16xf32>
      %118 = vector.shape_cast %117 : vector<16xf32> to vector<16x1xf32>
      %119 = vector.broadcast %118 : vector<16x1xf32> to vector<16x16xf32>
      %120 = arith.subf %116, %119 : vector<16x16xf32>
      %121 = math.exp %120 : vector<16x16xf32>
      %cst_73 = arith.constant dense<0.000000e+00> : vector<16xf32>
      %122 = vector.multi_reduction <add>, %121, %cst_73 [1] : vector<16x16xf32> to vector<16xf32>
      %123 = vector.shape_cast %122 : vector<16xf32> to vector<16x1xf32>
      %cst_74 = arith.constant 1.000000e+00 : f32
      %124 = vector.broadcast %cst_74 : f32 to vector<16x1xf32>
      %125 = arith.divf %124, %123 : vector<16x1xf32>
      %126 = vector.broadcast %125 : vector<16x1xf32> to vector<16x16xf32>
      %127 = arith.mulf %121, %126 : vector<16x16xf32>
      %cst_75 = arith.constant dense<0.000000e+00> : vector<16x4xf32>
      %128 = tpu.matmul %127, %115, %cst_75 {dimension_numbers = #tpu.dot_dimension_numbers<[1], [0], [0], [1], [0, 0, 1, 1], [], []>} : vector<16x16xf32>, vector<16x4xf32>, vector<16x4xf32> -> vector<16x4xf32>
      %c0_76 = arith.constant 0 : index
      %c0_77 = arith.constant 0 : index
      %129 = vector.load %arg23[%c0_76, %c0_77] : memref<16x8xf32, #tpu.memory_space<vmem>>, vector<16x4xf32>
      tpu.vector_store %arg23[%c0_76, %c0_77], %128 {strides = array<i32>} : memref<16x8xf32, #tpu.memory_space<vmem>>, vector<16x4xf32>,
      %130 = vector.extract_strided_slice %98 {offsets = [0, 4], sizes = [16, 4], strides = [1, 1]} : vector<16x8xf32> to vector<16x4xf32>
      %131 = vector.extract_strided_slice %105 {offsets = [0, 4], sizes = [16, 4], strides = [1, 1]} : vector<16x8xf32> to vector<16x4xf32>
      %132 = vector.extract_strided_slice %112 {offsets = [0, 4], sizes = [16, 4], strides = [1, 1]} : vector<16x8xf32> to vector<16x4xf32>
      %cst_78 = arith.constant dense<0.000000e+00> : vector<16x16xf32>
      %133 = tpu.matmul %130, %131, %cst_78 {dimension_numbers = #tpu.dot_dimension_numbers<[1], [1], [0], [0], [0, 0, 1, 0], [], []>} : vector<16x4xf32>, vector<16x4xf32>, vector<16x16xf32> -> vector<16x16xf32>
      %cst_79 = arith.constant dense<0xFF800000> : vector<16xf32>
      %134 = vector.multi_reduction <maximumf>, %133, %cst_79 [1] : vector<16x16xf32> to vector<16xf32>
      %135 = vector.shape_cast %134 : vector<16xf32> to vector<16x1xf32>
      %136 = vector.broadcast %135 : vector<16x1xf32> to vector<16x16xf32>
      %137 = arith.subf %133, %136 : vector<16x16xf32>
      %138 = math.exp %137 : vector<16x16xf32>
      %cst_80 = arith.constant dense<0.000000e+00> : vector<16xf32>
      %139 = vector.multi_reduction <add>, %138, %cst_80 [1] : vector<16x16xf32> to vector<16xf32>
      %140 = vector.shape_cast %139 : vector<16xf32> to vector<16x1xf32>
      %cst_81 = arith.constant 1.000000e+00 : f32
      %141 = vector.broadcast %cst_81 : f32 to vector<16x1xf32>
      %142 = arith.divf %141, %140 : vector<16x1xf32>
      %143 = vector.broadcast %142 : vector<16x1xf32> to vector<16x16xf32>
      %144 = arith.mulf %138, %143 : vector<16x16xf32>
      %cst_82 = arith.constant dense<0.000000e+00> : vector<16x4xf32>
      %145 = tpu.matmul %144, %132, %cst_82 {dimension_numbers = #tpu.dot_dimension_numbers<[1], [0], [0], [1], [0, 0, 1, 1], [], []>} : vector<16x16xf32>, vector<16x4xf32>, vector<16x4xf32> -> vector<16x4xf32>
      %c0_83 = arith.constant 0 : index
      %c4 = arith.constant 4 : index
      %146 = vector.load %arg23[%c0_83, %c4] : memref<16x8xf32, #tpu.memory_space<vmem>>, vector<16x4xf32>
      tpu.vector_store %arg23[%c0_83, %c4], %145 {strides = array<i32>} : memref<16x8xf32, #tpu.memory_space<vmem>>, vector<16x4xf32>,
      %c0_84 = arith.constant 0 : index
      %c0_85 = arith.constant 0 : index
      %147 = vector.load %arg23[%c0_84, %c0_85] : memref<16x8xf32, #tpu.memory_space<vmem>>, vector<16x8xf32>
      %c0_86 = arith.constant 0 : index
      %c0_87 = arith.constant 0 : index
      %148 = vector.load %arg24[%c0_86, %c0_87] : memref<16x32xf32, #tpu.memory_space<vmem>>, vector<16x8xf32>
      tpu.vector_store %arg24[%c0_86, %c0_87], %147 {strides = array<i32>} : memref<16x32xf32, #tpu.memory_space<vmem>>, vector<16x8xf32>,
      %c1 = arith.constant 1 : index
      %c0_88 = arith.constant 0 : index
      %c0_89 = arith.constant 0 : index
      %149 = vector.load %arg6[%c1, %c0_88, %c0_89] : memref<4x32x8xf32, #tpu.memory_space<vmem>>, vector<1x32x8xf32>
      %150 = vector.shape_cast %149 : vector<1x32x8xf32> to vector<32x8xf32>
      %cst_90 = arith.constant dense<0.000000e+00> : vector<16x8xf32>
      %151 = tpu.matmul %82, %150, %cst_90 {dimension_numbers = #tpu.dot_dimension_numbers<[1], [0], [0], [1], [0, 0, 1, 1], [], []>} : vector<16x32xf32>, vector<32x8xf32>, vector<16x8xf32> -> vector<16x8xf32>
      %c1_91 = arith.constant 1 : index
      %c0_92 = arith.constant 0 : index
      %c0_93 = arith.constant 0 : index
      %152 = vector.load %arg7[%c1_91, %c0_92, %c0_93] : memref<4x1x8xf32, #tpu.memory_space<vmem>>, vector<1x1x8xf32>
      %153 = vector.shape_cast %152 : vector<1x1x8xf32> to vector<1x8xf32>
      %154 = vector.broadcast %153 : vector<1x8xf32> to vector<16x8xf32>
      %155 = arith.addf %151, %154 : vector<16x8xf32>
      %c1_94 = arith.constant 1 : index
      %c0_95 = arith.constant 0 : index
      %c0_96 = arith.constant 0 : index
      %156 = vector.load %arg8[%c1_94, %c0_95, %c0_96] : memref<4x8x8xf32, #tpu.memory_space<vmem>>, vector<1x8x8xf32>
      %157 = vector.shape_cast %156 : vector<1x8x8xf32> to vector<8x8xf32>
      %cst_97 = arith.constant dense<0.000000e+00> : vector<16x8xf32>
      %158 = tpu.matmul %155, %157, %cst_97 {dimension_numbers = #tpu.dot_dimension_numbers<[1], [0], [0], [1], [0, 0, 1, 1], [], []>} : vector<16x8xf32>, vector<8x8xf32>, vector<16x8xf32> -> vector<16x8xf32>
      %c1_98 = arith.constant 1 : index
      %c0_99 = arith.constant 0 : index
      %c0_100 = arith.constant 0 : index
      %159 = vector.load %arg9[%c1_98, %c0_99, %c0_100] : memref<4x1x8xf32, #tpu.memory_space<vmem>>, vector<1x1x8xf32>
      %160 = vector.shape_cast %159 : vector<1x1x8xf32> to vector<1x8xf32>
      %161 = vector.broadcast %160 : vector<1x8xf32> to vector<16x8xf32>
      %162 = arith.addf %158, %161 : vector<16x8xf32>
      %cst_101 = arith.constant 0.353553385 : f32
      %163 = vector.broadcast %cst_101 : f32 to vector<16x8xf32>
      %164 = arith.mulf %162, %163 : vector<16x8xf32>
      %c1_102 = arith.constant 1 : index
      %c0_103 = arith.constant 0 : index
      %c0_104 = arith.constant 0 : index
      %165 = vector.load %arg10[%c1_102, %c0_103, %c0_104] : memref<4x8x8xf32, #tpu.memory_space<vmem>>, vector<1x8x8xf32>
      %166 = vector.shape_cast %165 : vector<1x8x8xf32> to vector<8x8xf32>
      %cst_105 = arith.constant dense<0.000000e+00> : vector<16x8xf32>
      %167 = tpu.matmul %155, %166, %cst_105 {dimension_numbers = #tpu.dot_dimension_numbers<[1], [0], [0], [1], [0, 0, 1, 1], [], []>} : vector<16x8xf32>, vector<8x8xf32>, vector<16x8xf32> -> vector<16x8xf32>
      %c1_106 = arith.constant 1 : index
      %c0_107 = arith.constant 0 : index
      %c0_108 = arith.constant 0 : index
      %168 = vector.load %arg11[%c1_106, %c0_107, %c0_108] : memref<4x1x8xf32, #tpu.memory_space<vmem>>, vector<1x1x8xf32>
      %169 = vector.shape_cast %168 : vector<1x1x8xf32> to vector<1x8xf32>
      %170 = vector.broadcast %169 : vector<1x8xf32> to vector<16x8xf32>
      %171 = arith.addf %167, %170 : vector<16x8xf32>
      %c1_109 = arith.constant 1 : index
      %c0_110 = arith.constant 0 : index
      %c0_111 = arith.constant 0 : index
      %172 = vector.load %arg12[%c1_109, %c0_110, %c0_111] : memref<4x8x8xf32, #tpu.memory_space<vmem>>, vector<1x8x8xf32>
      %173 = vector.shape_cast %172 : vector<1x8x8xf32> to vector<8x8xf32>
      %cst_112 = arith.constant dense<0.000000e+00> : vector<16x8xf32>
      %174 = tpu.matmul %155, %173, %cst_112 {dimension_numbers = #tpu.dot_dimension_numbers<[1], [0], [0], [1], [0, 0, 1, 1], [], []>} : vector<16x8xf32>, vector<8x8xf32>, vector<16x8xf32> -> vector<16x8xf32>
      %c1_113 = arith.constant 1 : index
      %c0_114 = arith.constant 0 : index
      %c0_115 = arith.constant 0 : index
      %175 = vector.load %arg13[%c1_113, %c0_114, %c0_115] : memref<4x1x8xf32, #tpu.memory_space<vmem>>, vector<1x1x8xf32>
      %176 = vector.shape_cast %175 : vector<1x1x8xf32> to vector<1x8xf32>
      %177 = vector.broadcast %176 : vector<1x8xf32> to vector<16x8xf32>
      %178 = arith.addf %174, %177 : vector<16x8xf32>
      %179 = vector.extract_strided_slice %164 {offsets = [0, 0], sizes = [16, 4], strides = [1, 1]} : vector<16x8xf32> to vector<16x4xf32>
      %180 = vector.extract_strided_slice %171 {offsets = [0, 0], sizes = [16, 4], strides = [1, 1]} : vector<16x8xf32> to vector<16x4xf32>
      %181 = vector.extract_strided_slice %178 {offsets = [0, 0], sizes = [16, 4], strides = [1, 1]} : vector<16x8xf32> to vector<16x4xf32>
      %cst_116 = arith.constant dense<0.000000e+00> : vector<16x16xf32>
      %182 = tpu.matmul %179, %180, %cst_116 {dimension_numbers = #tpu.dot_dimension_numbers<[1], [1], [0], [0], [0, 0, 1, 0], [], []>} : vector<16x4xf32>, vector<16x4xf32>, vector<16x16xf32> -> vector<16x16xf32>
      %cst_117 = arith.constant dense<0xFF800000> : vector<16xf32>
      %183 = vector.multi_reduction <maximumf>, %182, %cst_117 [1] : vector<16x16xf32> to vector<16xf32>
      %184 = vector.shape_cast %183 : vector<16xf32> to vector<16x1xf32>
      %185 = vector.broadcast %184 : vector<16x1xf32> to vector<16x16xf32>
      %186 = arith.subf %182, %185 : vector<16x16xf32>
      %187 = math.exp %186 : vector<16x16xf32>
      %cst_118 = arith.constant dense<0.000000e+00> : vector<16xf32>
      %188 = vector.multi_reduction <add>, %187, %cst_118 [1] : vector<16x16xf32> to vector<16xf32>
      %189 = vector.shape_cast %188 : vector<16xf32> to vector<16x1xf32>
      %cst_119 = arith.constant 1.000000e+00 : f32
      %190 = vector.broadcast %cst_119 : f32 to vector<16x1xf32>
      %191 = arith.divf %190, %189 : vector<16x1xf32>
      %192 = vector.broadcast %191 : vector<16x1xf32> to vector<16x16xf32>
      %193 = arith.mulf %187, %192 : vector<16x16xf32>
      %cst_120 = arith.constant dense<0.000000e+00> : vector<16x4xf32>
      %194 = tpu.matmul %193, %181, %cst_120 {dimension_numbers = #tpu.dot_dimension_numbers<[1], [0], [0], [1], [0, 0, 1, 1], [], []>} : vector<16x16xf32>, vector<16x4xf32>, vector<16x4xf32> -> vector<16x4xf32>
      %c0_121 = arith.constant 0 : index
      %c0_122 = arith.constant 0 : index
      %195 = vector.load %arg23[%c0_121, %c0_122] : memref<16x8xf32, #tpu.memory_space<vmem>>, vector<16x4xf32>
      tpu.vector_store %arg23[%c0_121, %c0_122], %194 {strides = array<i32>} : memref<16x8xf32, #tpu.memory_space<vmem>>, vector<16x4xf32>,
      %196 = vector.extract_strided_slice %164 {offsets = [0, 4], sizes = [16, 4], strides = [1, 1]} : vector<16x8xf32> to vector<16x4xf32>
      %197 = vector.extract_strided_slice %171 {offsets = [0, 4], sizes = [16, 4], strides = [1, 1]} : vector<16x8xf32> to vector<16x4xf32>
      %198 = vector.extract_strided_slice %178 {offsets = [0, 4], sizes = [16, 4], strides = [1, 1]} : vector<16x8xf32> to vector<16x4xf32>
      %cst_123 = arith.constant dense<0.000000e+00> : vector<16x16xf32>
      %199 = tpu.matmul %196, %197, %cst_123 {dimension_numbers = #tpu.dot_dimension_numbers<[1], [1], [0], [0], [0, 0, 1, 0], [], []>} : vector<16x4xf32>, vector<16x4xf32>, vector<16x16xf32> -> vector<16x16xf32>
      %cst_124 = arith.constant dense<0xFF800000> : vector<16xf32>
      %200 = vector.multi_reduction <maximumf>, %199, %cst_124 [1] : vector<16x16xf32> to vector<16xf32>
      %201 = vector.shape_cast %200 : vector<16xf32> to vector<16x1xf32>
      %202 = vector.broadcast %201 : vector<16x1xf32> to vector<16x16xf32>
      %203 = arith.subf %199, %202 : vector<16x16xf32>
      %204 = math.exp %203 : vector<16x16xf32>
      %cst_125 = arith.constant dense<0.000000e+00> : vector<16xf32>
      %205 = vector.multi_reduction <add>, %204, %cst_125 [1] : vector<16x16xf32> to vector<16xf32>
      %206 = vector.shape_cast %205 : vector<16xf32> to vector<16x1xf32>
      %cst_126 = arith.constant 1.000000e+00 : f32
      %207 = vector.broadcast %cst_126 : f32 to vector<16x1xf32>
      %208 = arith.divf %207, %206 : vector<16x1xf32>
      %209 = vector.broadcast %208 : vector<16x1xf32> to vector<16x16xf32>
      %210 = arith.mulf %204, %209 : vector<16x16xf32>
      %cst_127 = arith.constant dense<0.000000e+00> : vector<16x4xf32>
      %211 = tpu.matmul %210, %198, %cst_127 {dimension_numbers = #tpu.dot_dimension_numbers<[1], [0], [0], [1], [0, 0, 1, 1], [], []>} : vector<16x16xf32>, vector<16x4xf32>, vector<16x4xf32> -> vector<16x4xf32>
      %c0_128 = arith.constant 0 : index
      %c4_129 = arith.constant 4 : index
      %212 = vector.load %arg23[%c0_128, %c4_129] : memref<16x8xf32, #tpu.memory_space<vmem>>, vector<16x4xf32>
      tpu.vector_store %arg23[%c0_128, %c4_129], %211 {strides = array<i32>} : memref<16x8xf32, #tpu.memory_space<vmem>>, vector<16x4xf32>,
      %c0_130 = arith.constant 0 : index
      %c0_131 = arith.constant 0 : index
      %213 = vector.load %arg23[%c0_130, %c0_131] : memref<16x8xf32, #tpu.memory_space<vmem>>, vector<16x8xf32>
      %c0_132 = arith.constant 0 : index
      %c0_133 = arith.constant 0 : index
      %c0_134 = arith.constant 0 : index
      %214 = vector.load %arg3[%c0_132, %c0_133, %c0_134] : memref<3x16x16xf32, #tpu.memory_space<vmem>>, vector<1x16x16xf32>
      %215 = vector.shape_cast %214 : vector<1x16x16xf32> to vector<16x16xf32>
      %cst_135 = arith.constant dense<0.000000e+00> : vector<16x8xf32>
      %216 = tpu.matmul %215, %213, %cst_135 {dimension_numbers = #tpu.dot_dimension_numbers<[1], [0], [0], [1], [0, 0, 1, 1], [], []>} : vector<16x16xf32>, vector<16x8xf32>, vector<16x8xf32> -> vector<16x8xf32>
      %c0_136 = arith.constant 0 : index
      %c8 = arith.constant 8 : index
      %217 = vector.load %arg24[%c0_136, %c8] : memref<16x32xf32, #tpu.memory_space<vmem>>, vector<16x8xf32>
      tpu.vector_store %arg24[%c0_136, %c8], %216 {strides = array<i32>} : memref<16x32xf32, #tpu.memory_space<vmem>>, vector<16x8xf32>,
      %c2 = arith.constant 2 : index
      %c0_137 = arith.constant 0 : index
      %c0_138 = arith.constant 0 : index
      %218 = vector.load %arg6[%c2, %c0_137, %c0_138] : memref<4x32x8xf32, #tpu.memory_space<vmem>>, vector<1x32x8xf32>
      %219 = vector.shape_cast %218 : vector<1x32x8xf32> to vector<32x8xf32>
      %cst_139 = arith.constant dense<0.000000e+00> : vector<16x8xf32>
      %220 = tpu.matmul %82, %219, %cst_139 {dimension_numbers = #tpu.dot_dimension_numbers<[1], [0], [0], [1], [0, 0, 1, 1], [], []>} : vector<16x32xf32>, vector<32x8xf32>, vector<16x8xf32> -> vector<16x8xf32>
      %c2_140 = arith.constant 2 : index
      %c0_141 = arith.constant 0 : index
      %c0_142 = arith.constant 0 : index
      %221 = vector.load %arg7[%c2_140, %c0_141, %c0_142] : memref<4x1x8xf32, #tpu.memory_space<vmem>>, vector<1x1x8xf32>
      %222 = vector.shape_cast %221 : vector<1x1x8xf32> to vector<1x8xf32>
      %223 = vector.broadcast %222 : vector<1x8xf32> to vector<16x8xf32>
      %224 = arith.addf %220, %223 : vector<16x8xf32>
      %c2_143 = arith.constant 2 : index
      %c0_144 = arith.constant 0 : index
      %c0_145 = arith.constant 0 : index
      %225 = vector.load %arg8[%c2_143, %c0_144, %c0_145] : memref<4x8x8xf32, #tpu.memory_space<vmem>>, vector<1x8x8xf32>
      %226 = vector.shape_cast %225 : vector<1x8x8xf32> to vector<8x8xf32>
      %cst_146 = arith.constant dense<0.000000e+00> : vector<16x8xf32>
      %227 = tpu.matmul %224, %226, %cst_146 {dimension_numbers = #tpu.dot_dimension_numbers<[1], [0], [0], [1], [0, 0, 1, 1], [], []>} : vector<16x8xf32>, vector<8x8xf32>, vector<16x8xf32> -> vector<16x8xf32>
      %c2_147 = arith.constant 2 : index
      %c0_148 = arith.constant 0 : index
      %c0_149 = arith.constant 0 : index
      %228 = vector.load %arg9[%c2_147, %c0_148, %c0_149] : memref<4x1x8xf32, #tpu.memory_space<vmem>>, vector<1x1x8xf32>
      %229 = vector.shape_cast %228 : vector<1x1x8xf32> to vector<1x8xf32>
      %230 = vector.broadcast %229 : vector<1x8xf32> to vector<16x8xf32>
      %231 = arith.addf %227, %230 : vector<16x8xf32>
      %cst_150 = arith.constant 0.353553385 : f32
      %232 = vector.broadcast %cst_150 : f32 to vector<16x8xf32>
      %233 = arith.mulf %231, %232 : vector<16x8xf32>
      %c2_151 = arith.constant 2 : index
      %c0_152 = arith.constant 0 : index
      %c0_153 = arith.constant 0 : index
      %234 = vector.load %arg10[%c2_151, %c0_152, %c0_153] : memref<4x8x8xf32, #tpu.memory_space<vmem>>, vector<1x8x8xf32>
      %235 = vector.shape_cast %234 : vector<1x8x8xf32> to vector<8x8xf32>
      %cst_154 = arith.constant dense<0.000000e+00> : vector<16x8xf32>
      %236 = tpu.matmul %224, %235, %cst_154 {dimension_numbers = #tpu.dot_dimension_numbers<[1], [0], [0], [1], [0, 0, 1, 1], [], []>} : vector<16x8xf32>, vector<8x8xf32>, vector<16x8xf32> -> vector<16x8xf32>
      %c2_155 = arith.constant 2 : index
      %c0_156 = arith.constant 0 : index
      %c0_157 = arith.constant 0 : index
      %237 = vector.load %arg11[%c2_155, %c0_156, %c0_157] : memref<4x1x8xf32, #tpu.memory_space<vmem>>, vector<1x1x8xf32>
      %238 = vector.shape_cast %237 : vector<1x1x8xf32> to vector<1x8xf32>
      %239 = vector.broadcast %238 : vector<1x8xf32> to vector<16x8xf32>
      %240 = arith.addf %236, %239 : vector<16x8xf32>
      %c2_158 = arith.constant 2 : index
      %c0_159 = arith.constant 0 : index
      %c0_160 = arith.constant 0 : index
      %241 = vector.load %arg12[%c2_158, %c0_159, %c0_160] : memref<4x8x8xf32, #tpu.memory_space<vmem>>, vector<1x8x8xf32>
      %242 = vector.shape_cast %241 : vector<1x8x8xf32> to vector<8x8xf32>
      %cst_161 = arith.constant dense<0.000000e+00> : vector<16x8xf32>
      %243 = tpu.matmul %224, %242, %cst_161 {dimension_numbers = #tpu.dot_dimension_numbers<[1], [0], [0], [1], [0, 0, 1, 1], [], []>} : vector<16x8xf32>, vector<8x8xf32>, vector<16x8xf32> -> vector<16x8xf32>
      %c2_162 = arith.constant 2 : index
      %c0_163 = arith.constant 0 : index
      %c0_164 = arith.constant 0 : index
      %244 = vector.load %arg13[%c2_162, %c0_163, %c0_164] : memref<4x1x8xf32, #tpu.memory_space<vmem>>, vector<1x1x8xf32>
      %245 = vector.shape_cast %244 : vector<1x1x8xf32> to vector<1x8xf32>
      %246 = vector.broadcast %245 : vector<1x8xf32> to vector<16x8xf32>
      %247 = arith.addf %243, %246 : vector<16x8xf32>
      %248 = vector.extract_strided_slice %233 {offsets = [0, 0], sizes = [16, 4], strides = [1, 1]} : vector<16x8xf32> to vector<16x4xf32>
      %249 = vector.extract_strided_slice %240 {offsets = [0, 0], sizes = [16, 4], strides = [1, 1]} : vector<16x8xf32> to vector<16x4xf32>
      %250 = vector.extract_strided_slice %247 {offsets = [0, 0], sizes = [16, 4], strides = [1, 1]} : vector<16x8xf32> to vector<16x4xf32>
      %cst_165 = arith.constant dense<0.000000e+00> : vector<16x16xf32>
      %251 = tpu.matmul %248, %249, %cst_165 {dimension_numbers = #tpu.dot_dimension_numbers<[1], [1], [0], [0], [0, 0, 1, 0], [], []>} : vector<16x4xf32>, vector<16x4xf32>, vector<16x16xf32> -> vector<16x16xf32>
      %cst_166 = arith.constant dense<0xFF800000> : vector<16xf32>
      %252 = vector.multi_reduction <maximumf>, %251, %cst_166 [1] : vector<16x16xf32> to vector<16xf32>
      %253 = vector.shape_cast %252 : vector<16xf32> to vector<16x1xf32>
      %254 = vector.broadcast %253 : vector<16x1xf32> to vector<16x16xf32>
      %255 = arith.subf %251, %254 : vector<16x16xf32>
      %256 = math.exp %255 : vector<16x16xf32>
      %cst_167 = arith.constant dense<0.000000e+00> : vector<16xf32>
      %257 = vector.multi_reduction <add>, %256, %cst_167 [1] : vector<16x16xf32> to vector<16xf32>
      %258 = vector.shape_cast %257 : vector<16xf32> to vector<16x1xf32>
      %cst_168 = arith.constant 1.000000e+00 : f32
      %259 = vector.broadcast %cst_168 : f32 to vector<16x1xf32>
      %260 = arith.divf %259, %258 : vector<16x1xf32>
      %261 = vector.broadcast %260 : vector<16x1xf32> to vector<16x16xf32>
      %262 = arith.mulf %256, %261 : vector<16x16xf32>
      %cst_169 = arith.constant dense<0.000000e+00> : vector<16x4xf32>
      %263 = tpu.matmul %262, %250, %cst_169 {dimension_numbers = #tpu.dot_dimension_numbers<[1], [0], [0], [1], [0, 0, 1, 1], [], []>} : vector<16x16xf32>, vector<16x4xf32>, vector<16x4xf32> -> vector<16x4xf32>
      %c0_170 = arith.constant 0 : index
      %c0_171 = arith.constant 0 : index
      %264 = vector.load %arg23[%c0_170, %c0_171] : memref<16x8xf32, #tpu.memory_space<vmem>>, vector<16x4xf32>
      tpu.vector_store %arg23[%c0_170, %c0_171], %263 {strides = array<i32>} : memref<16x8xf32, #tpu.memory_space<vmem>>, vector<16x4xf32>,
      %265 = vector.extract_strided_slice %233 {offsets = [0, 4], sizes = [16, 4], strides = [1, 1]} : vector<16x8xf32> to vector<16x4xf32>
      %266 = vector.extract_strided_slice %240 {offsets = [0, 4], sizes = [16, 4], strides = [1, 1]} : vector<16x8xf32> to vector<16x4xf32>
      %267 = vector.extract_strided_slice %247 {offsets = [0, 4], sizes = [16, 4], strides = [1, 1]} : vector<16x8xf32> to vector<16x4xf32>
      %cst_172 = arith.constant dense<0.000000e+00> : vector<16x16xf32>
      %268 = tpu.matmul %265, %266, %cst_172 {dimension_numbers = #tpu.dot_dimension_numbers<[1], [1], [0], [0], [0, 0, 1, 0], [], []>} : vector<16x4xf32>, vector<16x4xf32>, vector<16x16xf32> -> vector<16x16xf32>
      %cst_173 = arith.constant dense<0xFF800000> : vector<16xf32>
      %269 = vector.multi_reduction <maximumf>, %268, %cst_173 [1] : vector<16x16xf32> to vector<16xf32>
      %270 = vector.shape_cast %269 : vector<16xf32> to vector<16x1xf32>
      %271 = vector.broadcast %270 : vector<16x1xf32> to vector<16x16xf32>
      %272 = arith.subf %268, %271 : vector<16x16xf32>
      %273 = math.exp %272 : vector<16x16xf32>
      %cst_174 = arith.constant dense<0.000000e+00> : vector<16xf32>
      %274 = vector.multi_reduction <add>, %273, %cst_174 [1] : vector<16x16xf32> to vector<16xf32>
      %275 = vector.shape_cast %274 : vector<16xf32> to vector<16x1xf32>
      %cst_175 = arith.constant 1.000000e+00 : f32
      %276 = vector.broadcast %cst_175 : f32 to vector<16x1xf32>
      %277 = arith.divf %276, %275 : vector<16x1xf32>
      %278 = vector.broadcast %277 : vector<16x1xf32> to vector<16x16xf32>
      %279 = arith.mulf %273, %278 : vector<16x16xf32>
      %cst_176 = arith.constant dense<0.000000e+00> : vector<16x4xf32>
      %280 = tpu.matmul %279, %267, %cst_176 {dimension_numbers = #tpu.dot_dimension_numbers<[1], [0], [0], [1], [0, 0, 1, 1], [], []>} : vector<16x16xf32>, vector<16x4xf32>, vector<16x4xf32> -> vector<16x4xf32>
      %c0_177 = arith.constant 0 : index
      %c4_178 = arith.constant 4 : index
      %281 = vector.load %arg23[%c0_177, %c4_178] : memref<16x8xf32, #tpu.memory_space<vmem>>, vector<16x4xf32>
      tpu.vector_store %arg23[%c0_177, %c4_178], %280 {strides = array<i32>} : memref<16x8xf32, #tpu.memory_space<vmem>>, vector<16x4xf32>,
      %c0_179 = arith.constant 0 : index
      %c0_180 = arith.constant 0 : index
      %282 = vector.load %arg23[%c0_179, %c0_180] : memref<16x8xf32, #tpu.memory_space<vmem>>, vector<16x8xf32>
      %c1_181 = arith.constant 1 : index
      %c0_182 = arith.constant 0 : index
      %c0_183 = arith.constant 0 : index
      %283 = vector.load %arg3[%c1_181, %c0_182, %c0_183] : memref<3x16x16xf32, #tpu.memory_space<vmem>>, vector<1x16x16xf32>
      %284 = vector.shape_cast %283 : vector<1x16x16xf32> to vector<16x16xf32>
      %cst_184 = arith.constant dense<0.000000e+00> : vector<16x8xf32>
      %285 = tpu.matmul %284, %282, %cst_184 {dimension_numbers = #tpu.dot_dimension_numbers<[1], [0], [0], [1], [0, 0, 1, 1], [], []>} : vector<16x16xf32>, vector<16x8xf32>, vector<16x8xf32> -> vector<16x8xf32>
      %c0_185 = arith.constant 0 : index
      %c16 = arith.constant 16 : index
      %286 = vector.load %arg24[%c0_185, %c16] : memref<16x32xf32, #tpu.memory_space<vmem>>, vector<16x8xf32>
      tpu.vector_store %arg24[%c0_185, %c16], %285 {strides = array<i32>} : memref<16x32xf32, #tpu.memory_space<vmem>>, vector<16x8xf32>,
      %c3 = arith.constant 3 : index
      %c0_186 = arith.constant 0 : index
      %c0_187 = arith.constant 0 : index
      %287 = vector.load %arg6[%c3, %c0_186, %c0_187] : memref<4x32x8xf32, #tpu.memory_space<vmem>>, vector<1x32x8xf32>
      %288 = vector.shape_cast %287 : vector<1x32x8xf32> to vector<32x8xf32>
      %cst_188 = arith.constant dense<0.000000e+00> : vector<16x8xf32>
      %289 = tpu.matmul %82, %288, %cst_188 {dimension_numbers = #tpu.dot_dimension_numbers<[1], [0], [0], [1], [0, 0, 1, 1], [], []>} : vector<16x32xf32>, vector<32x8xf32>, vector<16x8xf32> -> vector<16x8xf32>
      %c3_189 = arith.constant 3 : index
      %c0_190 = arith.constant 0 : index
      %c0_191 = arith.constant 0 : index
      %290 = vector.load %arg7[%c3_189, %c0_190, %c0_191] : memref<4x1x8xf32, #tpu.memory_space<vmem>>, vector<1x1x8xf32>
      %291 = vector.shape_cast %290 : vector<1x1x8xf32> to vector<1x8xf32>
      %292 = vector.broadcast %291 : vector<1x8xf32> to vector<16x8xf32>
      %293 = arith.addf %289, %292 : vector<16x8xf32>
      %c3_192 = arith.constant 3 : index
      %c0_193 = arith.constant 0 : index
      %c0_194 = arith.constant 0 : index
      %294 = vector.load %arg8[%c3_192, %c0_193, %c0_194] : memref<4x8x8xf32, #tpu.memory_space<vmem>>, vector<1x8x8xf32>
      %295 = vector.shape_cast %294 : vector<1x8x8xf32> to vector<8x8xf32>
      %cst_195 = arith.constant dense<0.000000e+00> : vector<16x8xf32>
      %296 = tpu.matmul %293, %295, %cst_195 {dimension_numbers = #tpu.dot_dimension_numbers<[1], [0], [0], [1], [0, 0, 1, 1], [], []>} : vector<16x8xf32>, vector<8x8xf32>, vector<16x8xf32> -> vector<16x8xf32>
      %c3_196 = arith.constant 3 : index
      %c0_197 = arith.constant 0 : index
      %c0_198 = arith.constant 0 : index
      %297 = vector.load %arg9[%c3_196, %c0_197, %c0_198] : memref<4x1x8xf32, #tpu.memory_space<vmem>>, vector<1x1x8xf32>
      %298 = vector.shape_cast %297 : vector<1x1x8xf32> to vector<1x8xf32>
      %299 = vector.broadcast %298 : vector<1x8xf32> to vector<16x8xf32>
      %300 = arith.addf %296, %299 : vector<16x8xf32>
      %cst_199 = arith.constant 0.353553385 : f32
      %301 = vector.broadcast %cst_199 : f32 to vector<16x8xf32>
      %302 = arith.mulf %300, %301 : vector<16x8xf32>
      %c3_200 = arith.constant 3 : index
      %c0_201 = arith.constant 0 : index
      %c0_202 = arith.constant 0 : index
      %303 = vector.load %arg10[%c3_200, %c0_201, %c0_202] : memref<4x8x8xf32, #tpu.memory_space<vmem>>, vector<1x8x8xf32>
      %304 = vector.shape_cast %303 : vector<1x8x8xf32> to vector<8x8xf32>
      %cst_203 = arith.constant dense<0.000000e+00> : vector<16x8xf32>
      %305 = tpu.matmul %293, %304, %cst_203 {dimension_numbers = #tpu.dot_dimension_numbers<[1], [0], [0], [1], [0, 0, 1, 1], [], []>} : vector<16x8xf32>, vector<8x8xf32>, vector<16x8xf32> -> vector<16x8xf32>
      %c3_204 = arith.constant 3 : index
      %c0_205 = arith.constant 0 : index
      %c0_206 = arith.constant 0 : index
      %306 = vector.load %arg11[%c3_204, %c0_205, %c0_206] : memref<4x1x8xf32, #tpu.memory_space<vmem>>, vector<1x1x8xf32>
      %307 = vector.shape_cast %306 : vector<1x1x8xf32> to vector<1x8xf32>
      %308 = vector.broadcast %307 : vector<1x8xf32> to vector<16x8xf32>
      %309 = arith.addf %305, %308 : vector<16x8xf32>
      %c3_207 = arith.constant 3 : index
      %c0_208 = arith.constant 0 : index
      %c0_209 = arith.constant 0 : index
      %310 = vector.load %arg12[%c3_207, %c0_208, %c0_209] : memref<4x8x8xf32, #tpu.memory_space<vmem>>, vector<1x8x8xf32>
      %311 = vector.shape_cast %310 : vector<1x8x8xf32> to vector<8x8xf32>
      %cst_210 = arith.constant dense<0.000000e+00> : vector<16x8xf32>
      %312 = tpu.matmul %293, %311, %cst_210 {dimension_numbers = #tpu.dot_dimension_numbers<[1], [0], [0], [1], [0, 0, 1, 1], [], []>} : vector<16x8xf32>, vector<8x8xf32>, vector<16x8xf32> -> vector<16x8xf32>
      %c3_211 = arith.constant 3 : index
      %c0_212 = arith.constant 0 : index
      %c0_213 = arith.constant 0 : index
      %313 = vector.load %arg13[%c3_211, %c0_212, %c0_213] : memref<4x1x8xf32, #tpu.memory_space<vmem>>, vector<1x1x8xf32>
      %314 = vector.shape_cast %313 : vector<1x1x8xf32> to vector<1x8xf32>
      %315 = vector.broadcast %314 : vector<1x8xf32> to vector<16x8xf32>
      %316 = arith.addf %312, %315 : vector<16x8xf32>
      %317 = vector.extract_strided_slice %302 {offsets = [0, 0], sizes = [16, 4], strides = [1, 1]} : vector<16x8xf32> to vector<16x4xf32>
      %318 = vector.extract_strided_slice %309 {offsets = [0, 0], sizes = [16, 4], strides = [1, 1]} : vector<16x8xf32> to vector<16x4xf32>
      %319 = vector.extract_strided_slice %316 {offsets = [0, 0], sizes = [16, 4], strides = [1, 1]} : vector<16x8xf32> to vector<16x4xf32>
      %cst_214 = arith.constant dense<0.000000e+00> : vector<16x16xf32>
      %320 = tpu.matmul %317, %318, %cst_214 {dimension_numbers = #tpu.dot_dimension_numbers<[1], [1], [0], [0], [0, 0, 1, 0], [], []>} : vector<16x4xf32>, vector<16x4xf32>, vector<16x16xf32> -> vector<16x16xf32>
      %cst_215 = arith.constant dense<0xFF800000> : vector<16xf32>
      %321 = vector.multi_reduction <maximumf>, %320, %cst_215 [1] : vector<16x16xf32> to vector<16xf32>
      %322 = vector.shape_cast %321 : vector<16xf32> to vector<16x1xf32>
      %323 = vector.broadcast %322 : vector<16x1xf32> to vector<16x16xf32>
      %324 = arith.subf %320, %323 : vector<16x16xf32>
      %325 = math.exp %324 : vector<16x16xf32>
      %cst_216 = arith.constant dense<0.000000e+00> : vector<16xf32>
      %326 = vector.multi_reduction <add>, %325, %cst_216 [1] : vector<16x16xf32> to vector<16xf32>
      %327 = vector.shape_cast %326 : vector<16xf32> to vector<16x1xf32>
      %cst_217 = arith.constant 1.000000e+00 : f32
      %328 = vector.broadcast %cst_217 : f32 to vector<16x1xf32>
      %329 = arith.divf %328, %327 : vector<16x1xf32>
      %330 = vector.broadcast %329 : vector<16x1xf32> to vector<16x16xf32>
      %331 = arith.mulf %325, %330 : vector<16x16xf32>
      %cst_218 = arith.constant dense<0.000000e+00> : vector<16x4xf32>
      %332 = tpu.matmul %331, %319, %cst_218 {dimension_numbers = #tpu.dot_dimension_numbers<[1], [0], [0], [1], [0, 0, 1, 1], [], []>} : vector<16x16xf32>, vector<16x4xf32>, vector<16x4xf32> -> vector<16x4xf32>
      %c0_219 = arith.constant 0 : index
      %c0_220 = arith.constant 0 : index
      %333 = vector.load %arg23[%c0_219, %c0_220] : memref<16x8xf32, #tpu.memory_space<vmem>>, vector<16x4xf32>
      tpu.vector_store %arg23[%c0_219, %c0_220], %332 {strides = array<i32>} : memref<16x8xf32, #tpu.memory_space<vmem>>, vector<16x4xf32>,
      %334 = vector.extract_strided_slice %302 {offsets = [0, 4], sizes = [16, 4], strides = [1, 1]} : vector<16x8xf32> to vector<16x4xf32>
      %335 = vector.extract_strided_slice %309 {offsets = [0, 4], sizes = [16, 4], strides = [1, 1]} : vector<16x8xf32> to vector<16x4xf32>
      %336 = vector.extract_strided_slice %316 {offsets = [0, 4], sizes = [16, 4], strides = [1, 1]} : vector<16x8xf32> to vector<16x4xf32>
      %cst_221 = arith.constant dense<0.000000e+00> : vector<16x16xf32>
      %337 = tpu.matmul %334, %335, %cst_221 {dimension_numbers = #tpu.dot_dimension_numbers<[1], [1], [0], [0], [0, 0, 1, 0], [], []>} : vector<16x4xf32>, vector<16x4xf32>, vector<16x16xf32> -> vector<16x16xf32>
      %cst_222 = arith.constant dense<0xFF800000> : vector<16xf32>
      %338 = vector.multi_reduction <maximumf>, %337, %cst_222 [1] : vector<16x16xf32> to vector<16xf32>
      %339 = vector.shape_cast %338 : vector<16xf32> to vector<16x1xf32>
      %340 = vector.broadcast %339 : vector<16x1xf32> to vector<16x16xf32>
      %341 = arith.subf %337, %340 : vector<16x16xf32>
      %342 = math.exp %341 : vector<16x16xf32>
      %cst_223 = arith.constant dense<0.000000e+00> : vector<16xf32>
      %343 = vector.multi_reduction <add>, %342, %cst_223 [1] : vector<16x16xf32> to vector<16xf32>
      %344 = vector.shape_cast %343 : vector<16xf32> to vector<16x1xf32>
      %cst_224 = arith.constant 1.000000e+00 : f32
      %345 = vector.broadcast %cst_224 : f32 to vector<16x1xf32>
      %346 = arith.divf %345, %344 : vector<16x1xf32>
      %347 = vector.broadcast %346 : vector<16x1xf32> to vector<16x16xf32>
      %348 = arith.mulf %342, %347 : vector<16x16xf32>
      %cst_225 = arith.constant dense<0.000000e+00> : vector<16x4xf32>
      %349 = tpu.matmul %348, %336, %cst_225 {dimension_numbers = #tpu.dot_dimension_numbers<[1], [0], [0], [1], [0, 0, 1, 1], [], []>} : vector<16x16xf32>, vector<16x4xf32>, vector<16x4xf32> -> vector<16x4xf32>
      %c0_226 = arith.constant 0 : index
      %c4_227 = arith.constant 4 : index
      %350 = vector.load %arg23[%c0_226, %c4_227] : memref<16x8xf32, #tpu.memory_space<vmem>>, vector<16x4xf32>
      tpu.vector_store %arg23[%c0_226, %c4_227], %349 {strides = array<i32>} : memref<16x8xf32, #tpu.memory_space<vmem>>, vector<16x4xf32>,
      %c0_228 = arith.constant 0 : index
      %c0_229 = arith.constant 0 : index
      %351 = vector.load %arg23[%c0_228, %c0_229] : memref<16x8xf32, #tpu.memory_space<vmem>>, vector<16x8xf32>
      %c2_230 = arith.constant 2 : index
      %c0_231 = arith.constant 0 : index
      %c0_232 = arith.constant 0 : index
      %352 = vector.load %arg3[%c2_230, %c0_231, %c0_232] : memref<3x16x16xf32, #tpu.memory_space<vmem>>, vector<1x16x16xf32>
      %353 = vector.shape_cast %352 : vector<1x16x16xf32> to vector<16x16xf32>
      %cst_233 = arith.constant dense<0.000000e+00> : vector<16x8xf32>
      %354 = tpu.matmul %353, %351, %cst_233 {dimension_numbers = #tpu.dot_dimension_numbers<[1], [0], [0], [1], [0, 0, 1, 1], [], []>} : vector<16x16xf32>, vector<16x8xf32>, vector<16x8xf32> -> vector<16x8xf32>
      %c0_234 = arith.constant 0 : index
      %c24 = arith.constant 24 : index
      %355 = vector.load %arg24[%c0_234, %c24] : memref<16x32xf32, #tpu.memory_space<vmem>>, vector<16x8xf32>
      tpu.vector_store %arg24[%c0_234, %c24], %354 {strides = array<i32>} : memref<16x32xf32, #tpu.memory_space<vmem>>, vector<16x8xf32>,
      %c0_235 = arith.constant 0 : index
      %c0_236 = arith.constant 0 : index
      %356 = vector.load %arg24[%c0_235, %c0_236] : memref<16x32xf32, #tpu.memory_space<vmem>>, vector<16x32xf32>
      %c0_237 = arith.constant 0 : index
      %c0_238 = arith.constant 0 : index
      %357 = vector.load %arg14[%c0_237, %c0_238] : memref<32x32xf32, #tpu.memory_space<vmem>>, vector<32x32xf32>
      %cst_239 = arith.constant dense<0.000000e+00> : vector<16x32xf32>
      %358 = tpu.matmul %356, %357, %cst_239 {dimension_numbers = #tpu.dot_dimension_numbers<[1], [0], [0], [1], [0, 0, 1, 1], [], []>} : vector<16x32xf32>, vector<32x32xf32>, vector<16x32xf32> -> vector<16x32xf32>
      %c0_240 = arith.constant 0 : index
      %c0_241 = arith.constant 0 : index
      %359 = vector.load %arg15[%c0_240, %c0_241] : memref<1x32xf32, #tpu.memory_space<vmem>>, vector<1x32xf32>
      %360 = vector.broadcast %359 : vector<1x32xf32> to vector<16x32xf32>
      %361 = arith.addf %358, %360 : vector<16x32xf32>
      %362 = arith.addf %361, %58 : vector<16x32xf32>
      %c0_242 = arith.constant 0 : index
      %c0_243 = arith.constant 0 : index
      %363 = vector.load %arg16[%c0_242, %c0_243] : memref<1x32xf32, #tpu.memory_space<vmem>>, vector<1x32xf32>
      %c0_244 = arith.constant 0 : index
      %c0_245 = arith.constant 0 : index
      %364 = vector.load %arg17[%c0_244, %c0_245] : memref<1x32xf32, #tpu.memory_space<vmem>>, vector<1x32xf32>
      %cst_246 = arith.constant dense<0.000000e+00> : vector<16xf32>
      %365 = vector.multi_reduction <add>, %362, %cst_246 [1] : vector<16x32xf32> to vector<16xf32>
      %366 = vector.shape_cast %365 : vector<16xf32> to vector<16x1xf32>
      %cst_247 = arith.constant 3.200000e+01 : f32
      %367 = vector.broadcast %cst_247 : f32 to vector<16x1xf32>
      %368 = arith.divf %366, %367 : vector<16x1xf32>
      %369 = vector.broadcast %368 : vector<16x1xf32> to vector<16x32xf32>
      %370 = arith.subf %362, %369 : vector<16x32xf32>
      %371 = arith.mulf %370, %370 : vector<16x32xf32>
      %cst_248 = arith.constant dense<0.000000e+00> : vector<16xf32>
      %372 = vector.multi_reduction <add>, %371, %cst_248 [1] : vector<16x32xf32> to vector<16xf32>
      %373 = vector.shape_cast %372 : vector<16xf32> to vector<16x1xf32>
      %cst_249 = arith.constant 3.200000e+01 : f32
      %374 = vector.broadcast %cst_249 : f32 to vector<16x1xf32>
      %375 = arith.divf %373, %374 : vector<16x1xf32>
      %376 = vector.broadcast %368 : vector<16x1xf32> to vector<16x32xf32>
      %377 = arith.subf %362, %376 : vector<16x32xf32>
      %cst_250 = arith.constant 9.99999974E-6 : f32
      %378 = vector.broadcast %cst_250 : f32 to vector<16x1xf32>
      %379 = arith.addf %375, %378 : vector<16x1xf32>
      %380 = math.rsqrt %379 : vector<16x1xf32>
      %381 = vector.broadcast %380 : vector<16x1xf32> to vector<16x32xf32>
      %382 = arith.mulf %377, %381 : vector<16x32xf32>
      %383 = vector.broadcast %363 : vector<1x32xf32> to vector<16x32xf32>
      %384 = arith.mulf %382, %383 : vector<16x32xf32>
      %385 = vector.broadcast %364 : vector<1x32xf32> to vector<16x32xf32>
      %386 = arith.addf %384, %385 : vector<16x32xf32>
      %c0_251 = arith.constant 0 : index
      %c0_252 = arith.constant 0 : index
      %387 = vector.load %arg25[%c0_251, %c0_252] : memref<16x32xf32, #tpu.memory_space<vmem>>, vector<16x32xf32>
      tpu.vector_store %arg25[%c0_251, %c0_252], %386 {strides = array<i32>} : memref<16x32xf32, #tpu.memory_space<vmem>>, vector<16x32xf32>,
      %c0_253 = arith.constant 0 : index
      %c0_254 = arith.constant 0 : index
      %388 = vector.load %arg21[%c0_253, %c0_254] : memref<1x32xf32, #tpu.memory_space<vmem>>, vector<1x32xf32>
      %389 = vector.broadcast %388 : vector<1x32xf32> to vector<16x32xf32>
      %390 = arith.addf %362, %389 : vector<16x32xf32>
      %c0_255 = arith.constant 0 : index
      %c0_256 = arith.constant 0 : index
      %391 = vector.load %arg26[%c0_255, %c0_256] : memref<16x32xf32, #tpu.memory_space<vmem>>, vector<16x32xf32>
      tpu.vector_store %arg26[%c0_255, %c0_256], %390 {strides = array<i32>} : memref<16x32xf32, #tpu.memory_space<vmem>>, vector<16x32xf32>,
    } else {
    }
    %c0 = arith.constant 0 : index
    %c0_1 = arith.constant 0 : index
    %3 = vector.load %arg25[%c0, %c0_1] : memref<16x32xf32, #tpu.memory_space<vmem>>, vector<16x32xf32>
    %c0_2 = arith.constant 0 : index
    %c0_3 = arith.constant 0 : index
    %4 = vector.load %arg18[%c0_2, %c0_3] : memref<32x64xf32, #tpu.memory_space<vmem>>, vector<32x64xf32>
    %cst = arith.constant dense<0.000000e+00> : vector<16x64xf32>
    %5 = tpu.matmul %3, %4, %cst {dimension_numbers = #tpu.dot_dimension_numbers<[1], [0], [0], [1], [0, 0, 1, 1], [], []>} : vector<16x32xf32>, vector<32x64xf32>, vector<16x64xf32> -> vector<16x64xf32>
    %c0_4 = arith.constant 0 : index
    %c0_5 = arith.constant 0 : index
    %6 = vector.load %arg19[%c0_4, %c0_5] : memref<1x64xf32, #tpu.memory_space<vmem>>, vector<1x64xf32>
    %7 = vector.broadcast %6 : vector<1x64xf32> to vector<16x64xf32>
    %8 = arith.addf %5, %7 : vector<16x64xf32>
    %cst_6 = arith.constant 5.000000e-01 : f32
    %9 = vector.broadcast %cst_6 : f32 to vector<16x64xf32>
    %10 = arith.mulf %9, %8 : vector<16x64xf32>
    %cst_7 = arith.constant 0.707106769 : f32
    %11 = vector.broadcast %cst_7 : f32 to vector<16x64xf32>
    %12 = arith.mulf %8, %11 : vector<16x64xf32>
    %13 = math.absf %12 : vector<16x64xf32>
    %cst_8 = arith.constant 0.327591091 : f32
    %14 = vector.broadcast %cst_8 : f32 to vector<16x64xf32>
    %15 = arith.mulf %14, %13 : vector<16x64xf32>
    %cst_9 = arith.constant 1.000000e+00 : f32
    %16 = vector.broadcast %cst_9 : f32 to vector<16x64xf32>
    %17 = arith.addf %16, %15 : vector<16x64xf32>
    %cst_10 = arith.constant 1.000000e+00 : f32
    %18 = vector.broadcast %cst_10 : f32 to vector<16x64xf32>
    %19 = arith.divf %18, %17 : vector<16x64xf32>
    %cst_11 = arith.constant 1.06140542 : f32
    %20 = vector.broadcast %cst_11 : f32 to vector<16x64xf32>
    %21 = arith.mulf %20, %19 : vector<16x64xf32>
    %cst_12 = arith.constant -1.45315206 : f32
    %22 = vector.broadcast %cst_12 : f32 to vector<16x64xf32>
    %23 = arith.addf %21, %22 : vector<16x64xf32>
    %24 = arith.mulf %23, %19 : vector<16x64xf32>
    %cst_13 = arith.constant 1.42141378 : f32
    %25 = vector.broadcast %cst_13 : f32 to vector<16x64xf32>
    %26 = arith.addf %24, %25 : vector<16x64xf32>
    %27 = arith.mulf %26, %19 : vector<16x64xf32>
    %cst_14 = arith.constant -0.284496725 : f32
    %28 = vector.broadcast %cst_14 : f32 to vector<16x64xf32>
    %29 = arith.addf %27, %28 : vector<16x64xf32>
    %30 = arith.mulf %29, %19 : vector<16x64xf32>
    %cst_15 = arith.constant 0.254829586 : f32
    %31 = vector.broadcast %cst_15 : f32 to vector<16x64xf32>
    %32 = arith.addf %30, %31 : vector<16x64xf32>
    %33 = arith.mulf %32, %19 : vector<16x64xf32>
    %cst_16 = arith.constant 0.000000e+00 : f32
    %34 = vector.broadcast %cst_16 : f32 to vector<16x64xf32>
    %35 = arith.subf %34, %13 : vector<16x64xf32>
    %36 = arith.mulf %35, %13 : vector<16x64xf32>
    %37 = math.exp %36 : vector<16x64xf32>
    %38 = arith.mulf %33, %37 : vector<16x64xf32>
    %cst_17 = arith.constant 1.000000e+00 : f32
    %39 = vector.broadcast %cst_17 : f32 to vector<16x64xf32>
    %40 = arith.subf %39, %38 : vector<16x64xf32>
    %cst_18 = arith.constant 0.000000e+00 : f32
    %41 = vector.broadcast %cst_18 : f32 to vector<16x64xf32>
    %42 = arith.cmpf oge, %12, %41 : vector<16x64xf32>
    %cst_19 = arith.constant 0.000000e+00 : f32
    %43 = vector.broadcast %cst_19 : f32 to vector<16x64xf32>
    %44 = arith.subf %43, %40 : vector<16x64xf32>
    %45 = arith.select %42, %40, %44 : vector<16x64xi1>, vector<16x64xf32>
    %cst_20 = arith.constant 1.000000e+00 : f32
    %46 = vector.broadcast %cst_20 : f32 to vector<16x64xf32>
    %47 = arith.addf %46, %45 : vector<16x64xf32>
    %48 = arith.mulf %10, %47 : vector<16x64xf32>
    %c0_21 = arith.constant 0 : index
    %c0_22 = arith.constant 0 : index
    %49 = vector.load %arg26[%c0_21, %c0_22] : memref<16x32xf32, #tpu.memory_space<vmem>>, vector<16x32xf32>
    %c0_23 = arith.constant 0 : index
    %c0_24 = arith.constant 0 : index
    %50 = vector.load %arg20[%c0_23, %c0_24] : memref<64x32xf32, #tpu.memory_space<vmem>>, vector<64x32xf32>
    %cst_25 = arith.constant dense<0.000000e+00> : vector<16x32xf32>
    %51 = tpu.matmul %48, %50, %cst_25 {dimension_numbers = #tpu.dot_dimension_numbers<[1], [0], [0], [1], [0, 0, 1, 1], [], []>} : vector<16x64xf32>, vector<64x32xf32>, vector<16x32xf32> -> vector<16x32xf32>
    %52 = arith.addf %49, %51 : vector<16x32xf32>
    %c0_26 = arith.constant 0 : index
    %c0_27 = arith.constant 0 : index
    %53 = vector.load %arg26[%c0_26, %c0_27] : memref<16x32xf32, #tpu.memory_space<vmem>>, vector<16x32xf32>
    tpu.vector_store %arg26[%c0_26, %c0_27], %52 {strides = array<i32>} : memref<16x32xf32, #tpu.memory_space<vmem>>, vector<16x32xf32>,
    %c0_i32_28 = arith.constant 0 : i32
    %54 = arith.cmpi eq, %arg1, %c0_i32_28 : i32
    %55 = arith.extui %54 : i1 to i32
    %c0_i32_29 = arith.constant 0 : i32
    %56 = arith.cmpi ne, %55, %c0_i32_29 : i32
    scf.if %56 {
      %c0_30 = arith.constant 0 : index
      %c0_31 = arith.constant 0 : index
      %57 = vector.load %arg26[%c0_30, %c0_31] : memref<16x32xf32, #tpu.memory_space<vmem>>, vector<16x32xf32>
      %c0_32 = arith.constant 0 : index
      %c0_33 = arith.constant 0 : index
      %c0_34 = arith.constant 0 : index
      %58 = vector.load %arg22[%c0_32, %c0_33, %c0_34] : memref<1x16x32xf32, #tpu.memory_space<vmem>>, vector<1x16x32xf32>
      %59 = vector.shape_cast %58 : vector<1x16x32xf32> to vector<16x32xf32>
      %60 = vector.shape_cast %57 : vector<16x32xf32> to vector<1x16x32xf32>
      tpu.vector_store %arg22[%c0_32, %c0_33, %c0_34], %60 {strides = array<i32>} : memref<1x16x32xf32, #tpu.memory_space<vmem>>, vector<1x16x32xf32>,
    } else {
    }
    return
  }
  func.func @transform_0(%arg0: i32, %arg1: i32) -> (i32, i32, i32) {
    %c0_i32 = arith.constant 0 : i32
    %c0_i32_0 = arith.constant 0 : i32
    %c0_i32_1 = arith.constant 0 : i32
    return %arg0, %c0_i32, %c0_i32_0 : i32, i32, i32
  }
  func.func @transform_1(%arg0: i32, %arg1: i32) -> (i32, i32, i32) {
    %c0_i32 = arith.constant 0 : i32
    %c0_i32_0 = arith.constant 0 : i32
    %c0_i32_1 = arith.constant 0 : i32
    %c0_i32_2 = arith.constant 0 : i32
    return %c0_i32, %c0_i32_0, %c0_i32_1 : i32, i32, i32
  }
  func.func @transform_2(%arg0: i32, %arg1: i32) -> (i32, i32) {
    %c0_i32 = arith.constant 0 : i32
    %c0_i32_0 = arith.constant 0 : i32
    %c0_i32_1 = arith.constant 0 : i32
    return %c0_i32, %c0_i32_0 : i32, i32
  }
  func.func @transform_3(%arg0: i32, %arg1: i32) -> (i32, i32) {
    %c0_i32 = arith.constant 0 : i32
    %c0_i32_0 = arith.constant 0 : i32
    %c0_i32_1 = arith.constant 0 : i32
    return %c0_i32, %c0_i32_0 : i32, i32
  }
  func.func @transform_4(%arg0: i32, %arg1: i32) -> (i32, i32, i32) {
    %c0_i32 = arith.constant 0 : i32
    %c0_i32_0 = arith.constant 0 : i32
    %c0_i32_1 = arith.constant 0 : i32
    %c0_i32_2 = arith.constant 0 : i32
    return %c0_i32, %c0_i32_0, %c0_i32_1 : i32, i32, i32
  }
  func.func @transform_5(%arg0: i32, %arg1: i32) -> (i32, i32, i32) {
    %c0_i32 = arith.constant 0 : i32
    %c0_i32_0 = arith.constant 0 : i32
    %c0_i32_1 = arith.constant 0 : i32
    %c0_i32_2 = arith.constant 0 : i32
    return %c0_i32, %c0_i32_0, %c0_i32_1 : i32, i32, i32
  }
  func.func @transform_6(%arg0: i32, %arg1: i32) -> (i32, i32, i32) {
    %c0_i32 = arith.constant 0 : i32
    %c0_i32_0 = arith.constant 0 : i32
    %c0_i32_1 = arith.constant 0 : i32
    %c0_i32_2 = arith.constant 0 : i32
    return %c0_i32, %c0_i32_0, %c0_i32_1 : i32, i32, i32
  }
  func.func @transform_7(%arg0: i32, %arg1: i32) -> (i32, i32, i32) {
    %c0_i32 = arith.constant 0 : i32
    %c0_i32_0 = arith.constant 0 : i32
    %c0_i32_1 = arith.constant 0 : i32
    %c0_i32_2 = arith.constant 0 : i32
    return %c0_i32, %c0_i32_0, %c0_i32_1 : i32, i32, i32
  }
  func.func @transform_8(%arg0: i32, %arg1: i32) -> (i32, i32, i32) {
    %c0_i32 = arith.constant 0 : i32
    %c0_i32_0 = arith.constant 0 : i32
    %c0_i32_1 = arith.constant 0 : i32
    %c0_i32_2 = arith.constant 0 : i32
    return %c0_i32, %c0_i32_0, %c0_i32_1 : i32, i32, i32
  }
  func.func @transform_9(%arg0: i32, %arg1: i32) -> (i32, i32, i32) {
    %c0_i32 = arith.constant 0 : i32
    %c0_i32_0 = arith.constant 0 : i32
    %c0_i32_1 = arith.constant 0 : i32
    %c0_i32_2 = arith.constant 0 : i32
    return %c0_i32, %c0_i32_0, %c0_i32_1 : i32, i32, i32
  }
  func.func @transform_10(%arg0: i32, %arg1: i32) -> (i32, i32, i32) {
    %c0_i32 = arith.constant 0 : i32
    %c0_i32_0 = arith.constant 0 : i32
    %c0_i32_1 = arith.constant 0 : i32
    %c0_i32_2 = arith.constant 0 : i32
    return %c0_i32, %c0_i32_0, %c0_i32_1 : i32, i32, i32
  }
  func.func @transform_11(%arg0: i32, %arg1: i32) -> (i32, i32, i32) {
    %c0_i32 = arith.constant 0 : i32
    %c0_i32_0 = arith.constant 0 : i32
    %c0_i32_1 = arith.constant 0 : i32
    %c0_i32_2 = arith.constant 0 : i32
    return %c0_i32, %c0_i32_0, %c0_i32_1 : i32, i32, i32
  }
  func.func @transform_12(%arg0: i32, %arg1: i32) -> (i32, i32) {
    %c0_i32 = arith.constant 0 : i32
    %c0_i32_0 = arith.constant 0 : i32
    %c0_i32_1 = arith.constant 0 : i32
    return %c0_i32, %c0_i32_0 : i32, i32
  }
  func.func @transform_13(%arg0: i32, %arg1: i32) -> (i32, i32) {
    %c0_i32 = arith.constant 0 : i32
    %c0_i32_0 = arith.constant 0 : i32
    %c0_i32_1 = arith.constant 0 : i32
    return %c0_i32, %c0_i32_0 : i32, i32
  }
  func.func @transform_14(%arg0: i32, %arg1: i32) -> (i32, i32) {
    %c0_i32 = arith.constant 0 : i32
    %c0_i32_0 = arith.constant 0 : i32
    %c0_i32_1 = arith.constant 0 : i32
    return %c0_i32, %c0_i32_0 : i32, i32
  }
  func.func @transform_15(%arg0: i32, %arg1: i32) -> (i32, i32) {
    %c0_i32 = arith.constant 0 : i32
    %c0_i32_0 = arith.constant 0 : i32
    %c0_i32_1 = arith.constant 0 : i32
    return %c0_i32, %c0_i32_0 : i32, i32
  }
  func.func @transform_16(%arg0: i32, %arg1: i32) -> (i32, i32) {
    %c0_i32 = arith.constant 0 : i32
    %c0_i32_0 = arith.constant 0 : i32
    return %c0_i32, %arg1 : i32, i32
  }
  func.func @transform_17(%arg0: i32, %arg1: i32) -> (i32, i32) {
    %c0_i32 = arith.constant 0 : i32
    %c0_i32_0 = arith.constant 0 : i32
    return %c0_i32, %arg1 : i32, i32
  }
  func.func @transform_18(%arg0: i32, %arg1: i32) -> (i32, i32) {
    %c0_i32 = arith.constant 0 : i32
    %c0_i32_0 = arith.constant 0 : i32
    return %arg1, %c0_i32 : i32, i32
  }
  func.func @transform_19(%arg0: i32, %arg1: i32) -> (i32, i32) {
    %c0_i32 = arith.constant 0 : i32
    %c0_i32_0 = arith.constant 0 : i32
    %c0_i32_1 = arith.constant 0 : i32
    return %c0_i32, %c0_i32_0 : i32, i32
  }
  func.func @transform_20(%arg0: i32, %arg1: i32) -> (i32, i32, i32) {
    %c0_i32 = arith.constant 0 : i32
    %c0_i32_0 = arith.constant 0 : i32
    %c0_i32_1 = arith.constant 0 : i32
    return %arg0, %c0_i32, %c0_i32_0 : i32, i32, i32
  }
}

</mosaic_0001>

<llo_original>
// kernel: tpu_custom_call.1
$region0: #{tpu_custom_call.1}
  #allocation0 [shape = 'u32[]', space=smem, size = 0x4, offset = 0x4, fixed_abs, tag = 'smem constant byte address 0x4 - core index']
  #allocation1 [shape = 'u32[144,128]{1,0:T(1,128)}', space=vmem, size = 0x12000, scoped, tag = 'internal scratch']
  #allocation2 [shape = 'f32[16,8]{1,0:T(8,128)}', space=vmem, size = 0x2000, scoped, tag = 'scratch operand']
  #allocation3 [shape = 'f32[16,32]{1,0:T(8,128)}', space=vmem, size = 0x2000, scoped, tag = 'scratch operand']
  #allocation4 [shape = 'f32[16,32]{1,0:T(8,128)}', space=vmem, size = 0x2000, scoped, tag = 'scratch operand']
  #allocation5 [shape = 'f32[16,32]{1,0:T(8,128)}', space=vmem, size = 0x2000, scoped, tag = 'scratch operand']
  %s0 = inlined_call_operand.vmem [shape: f32[2,16,32], index: 0, kind: input, shape index: {}]
  %s1 = inlined_call_operand.vmem [shape: f32[3,16,16], index: 1, kind: input, shape index: {}]
  %s2 = inlined_call_operand.vmem [shape: f32[1,32], index: 2, kind: input, shape index: {}]
  %s3 = inlined_call_operand.vmem [shape: f32[1,32], index: 3, kind: input, shape index: {}]
  %s4 = inlined_call_operand.vmem [shape: f32[4,32,8], index: 4, kind: input, shape index: {}]
  %s5 = inlined_call_operand.hbm [shape: f32[4,1,8], index: 5, kind: input, shape index: {}]
  %s6 = inlined_call_operand.vmem [shape: f32[4,8,8], index: 6, kind: input, shape index: {}]
  %s7 = inlined_call_operand.vmem [shape: f32[4,1,8], index: 7, kind: input, shape index: {}]
  %s8 = inlined_call_operand.vmem [shape: f32[4,8,8], index: 8, kind: input, shape index: {}]
  %s9 = inlined_call_operand.vmem [shape: f32[4,1,8], index: 9, kind: input, shape index: {}]
  %s10 = inlined_call_operand.vmem [shape: f32[4,8,8], index: 10, kind: input, shape index: {}]
  %s11 = inlined_call_operand.vmem [shape: f32[4,1,8], index: 11, kind: input, shape index: {}]
  %s12 = inlined_call_operand.vmem [shape: f32[32,32], index: 12, kind: input, shape index: {}]
  %s13 = inlined_call_operand.vmem [shape: f32[1,32], index: 13, kind: input, shape index: {}]
  %s14 = inlined_call_operand.vmem [shape: f32[1,32], index: 14, kind: input, shape index: {}]
  %s15 = inlined_call_operand.hbm [shape: f32[1,32], index: 15, kind: input, shape index: {}]
  %s16 = inlined_call_operand.vmem [shape: f32[32,64], index: 16, kind: input, shape index: {}]
  %s17 = inlined_call_operand.hbm [shape: f32[1,64], index: 17, kind: input, shape index: {}]
  %s18 = inlined_call_operand.vmem [shape: f32[64,32], index: 18, kind: input, shape index: {}]
  %s19 = inlined_call_operand.vmem [shape: f32[1,32], index: 19, kind: input, shape index: {}]
  %s20 = inlined_call_operand.hbm [shape: f32[2,16,32], index: 20, kind: output, shape index: {}]
  %s21 = sld [smem:[#allocation0]]
  $region133: #{tpu_custom_call.1} parent=0
    _
  %s23 = ssub.s32 1, %s21
  %s24 = scalar_select 0, %s23, %s21
  $region1: #{tpu_custom_call.1} parent=0
    #allocation6 [shape = 'u8[2048]{0}', space=vmem, size = 0x800, scoped, tag = 'input window, operand 5, single buffered']
    #allocation7 [shape = 's32[2]{0}', space=sflag, size = 0x8, scoped, tag = 'scoped memory for tpu_custom_call.1']
    #allocation8 [shape = 's32[2]{0}', space=sflag, size = 0x8, scoped, tag = 'scoped memory for tpu_custom_call.1']
    #allocation9 [shape = 'u8[512]{0}', space=vmem, size = 0x400, scoped, tag = 'input window, operand 15, single buffered']
    #allocation10 [shape = 's32[1]{0}', space=sflag, size = 0x4, scoped, tag = 'scoped memory for tpu_custom_call.1']
    #allocation11 [shape = 'u8[512]{0}', space=vmem, size = 0x400, scoped, tag = 'input window, operand 17, single buffered']
    #allocation12 [shape = 'u8[16384]{0}', space=vmem, size = 0x4000, scoped, tag = 'output window, operand 0']
    %25 = vsyncpa [#allocation7], 0
    %26 = vsyncpa [#allocation10], 0
    %27 = vsyncpa [#allocation8], 0
    %s28 = scalar_lea.sflag [#allocation8], 1
    %29 = vsyncpa %s28, 0
    loop: start=0, step=1, limit=4
    $region2: #{tpu_custom_call.1} parent=1 // loop_pre_header
      _
    $region3: #{tpu_custom_call.1} parent=1 // loop_header
      %s31 = sphi 0, %s35
      %p32 = scmp.ge.s32.totalorder %s31, 4
      %s38 = sphi 0, %s50
      %s39 = sphi 0, %s46
      %s40 = sphi 0, %s38
      %s41 = sphi 0, %s39
      %s42 = sphi 0, %s40
      %s43 = sphi 0, %s41
      %s53 = sphi 0, %s55
      %s56 = sphi 0, %s53
      %s57 = sphi 0, %s56
      %s73 = sphi 0, %s57
      %s77 = sphi 0, %s77
      %s79 = sphi 0, %s77
      %s80 = sphi 0, %s79
      %s94 = sphi 0, %s80
      %s98 = sphi 0, %s98
      %s100 = sphi 0, %s98
      %s101 = sphi 0, %s100
      %s115 = sphi 0, %s101
      %s119 = sphi 0, %s119
      %s121 = sphi 0, %s119
      %s122 = sphi 0, %s121
      %s136 = sphi 0, %s122
      %s140 = sphi 0, %s140
      %s142 = sphi 0, %s140
      %s143 = sphi 0, %s142
      %s157 = sphi 0, %s143
      %s161 = sphi 0, %s161
      %s163 = sphi 0, %s161
      %s164 = sphi 0, %s163
      %s178 = sphi 0, %s164
      %s182 = sphi 0, %s182
      %s184 = sphi 0, %s182
      %s185 = sphi 0, %s184
      %s199 = sphi 0, %s185
      %s203 = sphi 0, %s203
      %s205 = sphi 0, %s203
      %s206 = sphi 0, %s205
      %s220 = sphi 0, %s206
      %s224 = sphi 0, %s224
      %s226 = sphi 0, %s224
      %s227 = sphi 0, %s226
      %s241 = sphi 0, %s227
      %s245 = sphi 0, %s245
      %s247 = sphi 0, %s245
      %s248 = sphi 0, %s247
      %s262 = sphi 0, %s248
      %s266 = sphi 0, %s266
      %s268 = sphi 0, %s266
      %s269 = sphi 0, %s268
      %s283 = sphi 0, %s269
      %s287 = sphi 0, %s287
      %s289 = sphi 0, %s287
      %s290 = sphi 0, %s289
      %s304 = sphi 0, %s290
      %s308 = sphi 0, %s308
      %s310 = sphi 0, %s308
      %s311 = sphi 0, %s310
      %s325 = sphi 0, %s311
      %s329 = sphi 0, %s329
      %s331 = sphi 0, %s329
      %s332 = sphi 0, %s331
      %s346 = sphi 0, %s332
      %s350 = sphi 0, %s350
      %s352 = sphi 0, %s350
      %s353 = sphi 0, %s352
      %s367 = sphi 0, %s353
      %s371 = sphi 0, %s371
      %s373 = sphi 0, %s371
      %s374 = sphi 0, %s373
      %s388 = sphi 0, %s374
      %s394 = sphi 0, %s396
      %s397 = sphi 0, %s394
      %s398 = sphi 0, %s397
      %s414 = sphi 0, %s398
      %s420 = sphi 0, %s422
      %s423 = sphi 0, %s420
      %s424 = sphi 0, %s423
      %s440 = sphi 0, %s424
      %s446 = sphi 0, %s448
      %s449 = sphi 0, %s446
      %s450 = sphi 0, %s449
      %s466 = sphi 0, %s450
      %s470 = sphi 0, %s470
      %s472 = sphi 0, %s470
      %s473 = sphi 0, %s472
      %s487 = sphi 0, %s473
      %s493 = sphi 0, %s495
      %s496 = sphi 0, %s493
      %s497 = sphi 0, %s496
      %s513 = sphi 0, %s497
    $region4: #{tpu_custom_call.1} parent=1 // loop_header_branch
      %34 = sbr.rel (%p32) target = $region8
    $region5: #{tpu_custom_call.1} parent=1 // loop_body
      %s36 = ssub.s32 %s31, 1
      %s37 = ssub.s32 %s31, 2
      %s44 = sadd.s32 1, %s39
      %p45 = scmp.ge.s32.totalorder %s44, 1
      %s46 = scalar_select %p45, 0, %s44
      %s47 = sadd.s32 1, %s38
      %s48 = scalar_select %p45, %s47, %s38
      %p49 = scmp.ge.s32.totalorder %s48, 2
      %s50 = scalar_select %p49, 0, %s48
      %s51 = ssub.s32 %s38, %s50
      %p52 = scmp.eq.s32.totalorder %s51, 0
      %s54 = sadd.s32 %s53, 1
      %s55 = scalar_select %p52, %s53, %s54
      %p58 = pneg %p52
      %p59 = scmp.eq.s32.totalorder %s31, 1
      %p60 = por %p58, %p59
      %p61 = scmp.ne.s32.totalorder %s53, %s56
      %p62 = scmp.eq.s32.totalorder %s31, 0
      %p63 = por %p61, %p62
      %p64 = scmp.ne.s32.totalorder %s53, %s56
      %p65 = scmp.eq.s32.totalorder %s36, 1
      %p66 = por %p64, %p65
      %p67 = scmp.ne.s32.totalorder %s56, %s57
      %p68 = scmp.eq.s32.totalorder %s36, 0
      %p69 = por %p67, %p68
      %p70 = scmp.ne.s32.totalorder %s56, %s57
      %p71 = scmp.eq.s32.totalorder %s37, 1
      %p72 = por %p70, %p71
      %p74 = scmp.ne.s32.totalorder %s57, %s73
      %p75 = scmp.eq.s32.totalorder %s37, 0
      %p76 = por %p74, %p75
      %s78 = sadd.s32 %s77, 1
      %p81 = scmp.eq.s32.totalorder %s31, 1
      %p82 = scmp.ne.s32.totalorder %s77, %s79
      %p83 = scmp.eq.s32.totalorder %s31, 0
      %p84 = por %p82, %p83
      %p85 = scmp.ne.s32.totalorder %s77, %s79
      %p86 = scmp.eq.s32.totalorder %s36, 1
      %p87 = por %p85, %p86
      %p88 = scmp.ne.s32.totalorder %s79, %s80
      %p89 = scmp.eq.s32.totalorder %s36, 0
      %p90 = por %p88, %p89
      %p91 = scmp.ne.s32.totalorder %s79, %s80
      %p92 = scmp.eq.s32.totalorder %s37, 1
      %p93 = por %p91, %p92
      %p95 = scmp.ne.s32.totalorder %s80, %s94
      %p96 = scmp.eq.s32.totalorder %s37, 0
      %p97 = por %p95, %p96
      %s99 = sadd.s32 %s98, 1
      %p102 = scmp.eq.s32.totalorder %s31, 1
      %p103 = scmp.ne.s32.totalorder %s98, %s100
      %p104 = scmp.eq.s32.totalorder %s31, 0
      %p105 = por %p103, %p104
      %p106 = scmp.ne.s32.totalorder %s98, %s100
      %p107 = scmp.eq.s32.totalorder %s36, 1
      %p108 = por %p106, %p107
      %p109 = scmp.ne.s32.totalorder %s100, %s101
      %p110 = scmp.eq.s32.totalorder %s36, 0
      %p111 = por %p109, %p110
      %p112 = scmp.ne.s32.totalorder %s100, %s101
      %p113 = scmp.eq.s32.totalorder %s37, 1
      %p114 = por %p112, %p113
      %p116 = scmp.ne.s32.totalorder %s101, %s115
      %p117 = scmp.eq.s32.totalorder %s37, 0
      %p118 = por %p116, %p117
      %s120 = sadd.s32 %s119, 1
      %p123 = scmp.eq.s32.totalorder %s31, 1
      %p124 = scmp.ne.s32.totalorder %s119, %s121
      %p125 = scmp.eq.s32.totalorder %s31, 0
      %p126 = por %p124, %p125
      %p127 = scmp.ne.s32.totalorder %s119, %s121
      %p128 = scmp.eq.s32.totalorder %s36, 1
      %p129 = por %p127, %p128
      %p130 = scmp.ne.s32.totalorder %s121, %s122
      %p131 = scmp.eq.s32.totalorder %s36, 0
      %p132 = por %p130, %p131
      %p133 = scmp.ne.s32.totalorder %s121, %s122
      %p134 = scmp.eq.s32.totalorder %s37, 1
      %p135 = por %p133, %p134
      %p137 = scmp.ne.s32.totalorder %s122, %s136
      %p138 = scmp.eq.s32.totalorder %s37, 0
      %p139 = por %p137, %p138
      %s141 = sadd.s32 %s140, 1
      %p144 = scmp.eq.s32.totalorder %s31, 1
      %p145 = scmp.ne.s32.totalorder %s140, %s142
      %p146 = scmp.eq.s32.totalorder %s31, 0
      %p147 = por %p145, %p146
      %p148 = scmp.ne.s32.totalorder %s140, %s142
      %p149 = scmp.eq.s32.totalorder %s36, 1
      %p150 = por %p148, %p149
      %p151 = scmp.ne.s32.totalorder %s142, %s143
      %p152 = scmp.eq.s32.totalorder %s36, 0
      %p153 = por %p151, %p152
      %p154 = scmp.ne.s32.totalorder %s142, %s143
      %p155 = scmp.eq.s32.totalorder %s37, 1
      %p156 = por %p154, %p155
      %p158 = scmp.ne.s32.totalorder %s143, %s157
      %p159 = scmp.eq.s32.totalorder %s37, 0
      %p160 = por %p158, %p159
      %s162 = sadd.s32 %s161, 1
      %p165 = scmp.eq.s32.totalorder %s31, 1
      %p166 = scmp.ne.s32.totalorder %s161, %s163
      %p167 = scmp.eq.s32.totalorder %s31, 0
      %p168 = por %p166, %p167
      %p169 = scmp.ne.s32.totalorder %s161, %s163
      %p170 = scmp.eq.s32.totalorder %s36, 1
      %p171 = por %p169, %p170
      %p172 = scmp.ne.s32.totalorder %s163, %s164
      %p173 = scmp.eq.s32.totalorder %s36, 0
      %p174 = por %p172, %p173
      %p175 = scmp.ne.s32.totalorder %s163, %s164
      %p176 = scmp.eq.s32.totalorder %s37, 1
      %p177 = por %p175, %p176
      %p179 = scmp.ne.s32.totalorder %s164, %s178
      %p180 = scmp.eq.s32.totalorder %s37, 0
      %p181 = por %p179, %p180
      %s183 = sadd.s32 %s182, 1
      %p186 = scmp.eq.s32.totalorder %s31, 1
      %p187 = scmp.ne.s32.totalorder %s182, %s184
      %p188 = scmp.eq.s32.totalorder %s31, 0
      %p189 = por %p187, %p188
      %p190 = scmp.ne.s32.totalorder %s182, %s184
      %p191 = scmp.eq.s32.totalorder %s36, 1
      %p192 = por %p190, %p191
      %p193 = scmp.ne.s32.totalorder %s184, %s185
      %p194 = scmp.eq.s32.totalorder %s36, 0
      %p195 = por %p193, %p194
      %p196 = scmp.ne.s32.totalorder %s184, %s185
      %p197 = scmp.eq.s32.totalorder %s37, 1
      %p198 = por %p196, %p197
      %p200 = scmp.ne.s32.totalorder %s185, %s199
      %p201 = scmp.eq.s32.totalorder %s37, 0
      %p202 = por %p200, %p201
      %s204 = sadd.s32 %s203, 1
      %p207 = scmp.eq.s32.totalorder %s31, 1
      %p208 = scmp.ne.s32.totalorder %s203, %s205
      %p209 = scmp.eq.s32.totalorder %s31, 0
      %p210 = por %p208, %p209
      %p211 = scmp.ne.s32.totalorder %s203, %s205
      %p212 = scmp.eq.s32.totalorder %s36, 1
      %p213 = por %p211, %p212
      %p214 = scmp.ne.s32.totalorder %s205, %s206
      %p215 = scmp.eq.s32.totalorder %s36, 0
      %p216 = por %p214, %p215
      %p217 = scmp.ne.s32.totalorder %s205, %s206
      %p218 = scmp.eq.s32.totalorder %s37, 1
      %p219 = por %p217, %p218
      %p221 = scmp.ne.s32.totalorder %s206, %s220
      %p222 = scmp.eq.s32.totalorder %s37, 0
      %p223 = por %p221, %p222
      %s225 = sadd.s32 %s224, 1
      %p228 = scmp.eq.s32.totalorder %s31, 1
      %p229 = scmp.ne.s32.totalorder %s224, %s226
      %p230 = scmp.eq.s32.totalorder %s31, 0
      %p231 = por %p229, %p230
      %p232 = scmp.ne.s32.totalorder %s224, %s226
      %p233 = scmp.eq.s32.totalorder %s36, 1
      %p234 = por %p232, %p233
      %p235 = scmp.ne.s32.totalorder %s226, %s227
      %p236 = scmp.eq.s32.totalorder %s36, 0
      %p237 = por %p235, %p236
      %p238 = scmp.ne.s32.totalorder %s226, %s227
      %p239 = scmp.eq.s32.totalorder %s37, 1
      %p240 = por %p238, %p239
      %p242 = scmp.ne.s32.totalorder %s227, %s241
      %p243 = scmp.eq.s32.totalorder %s37, 0
      %p244 = por %p242, %p243
      %s246 = sadd.s32 %s245, 1
      %p249 = scmp.eq.s32.totalorder %s31, 1
      %p250 = scmp.ne.s32.totalorder %s245, %s247
      %p251 = scmp.eq.s32.totalorder %s31, 0
      %p252 = por %p250, %p251
      %p253 = scmp.ne.s32.totalorder %s245, %s247
      %p254 = scmp.eq.s32.totalorder %s36, 1
      %p255 = por %p253, %p254
      %p256 = scmp.ne.s32.totalorder %s247, %s248
      %p257 = scmp.eq.s32.totalorder %s36, 0
      %p258 = por %p256, %p257
      %p259 = scmp.ne.s32.totalorder %s247, %s248
      %p260 = scmp.eq.s32.totalorder %s37, 1
      %p261 = por %p259, %p260
      %p263 = scmp.ne.s32.totalorder %s248, %s262
      %p264 = scmp.eq.s32.totalorder %s37, 0
      %p265 = por %p263, %p264
      %s267 = sadd.s32 %s266, 1
      %p270 = scmp.eq.s32.totalorder %s31, 1
      %p271 = scmp.ne.s32.totalorder %s266, %s268
      %p272 = scmp.eq.s32.totalorder %s31, 0
      %p273 = por %p271, %p272
      %p274 = scmp.ne.s32.totalorder %s266, %s268
      %p275 = scmp.eq.s32.totalorder %s36, 1
      %p276 = por %p274, %p275
      %p277 = scmp.ne.s32.totalorder %s268, %s269
      %p278 = scmp.eq.s32.totalorder %s36, 0
      %p279 = por %p277, %p278
      %p280 = scmp.ne.s32.totalorder %s268, %s269
      %p281 = scmp.eq.s32.totalorder %s37, 1
      %p282 = por %p280, %p281
      %p284 = scmp.ne.s32.totalorder %s269, %s283
      %p285 = scmp.eq.s32.totalorder %s37, 0
      %p286 = por %p284, %p285
      %s288 = sadd.s32 %s287, 1
      %p291 = scmp.eq.s32.totalorder %s31, 1
      %p292 = scmp.ne.s32.totalorder %s287, %s289
      %p293 = scmp.eq.s32.totalorder %s31, 0
      %p294 = por %p292, %p293
      %p295 = scmp.ne.s32.totalorder %s287, %s289
      %p296 = scmp.eq.s32.totalorder %s36, 1
      %p297 = por %p295, %p296
      %p298 = scmp.ne.s32.totalorder %s289, %s290
      %p299 = scmp.eq.s32.totalorder %s36, 0
      %p300 = por %p298, %p299
      %p301 = scmp.ne.s32.totalorder %s289, %s290
      %p302 = scmp.eq.s32.totalorder %s37, 1
      %p303 = por %p301, %p302
      %p305 = scmp.ne.s32.totalorder %s290, %s304
      %p306 = scmp.eq.s32.totalorder %s37, 0
      %p307 = por %p305, %p306
      %s309 = sadd.s32 %s308, 1
      %p312 = scmp.eq.s32.totalorder %s31, 1
      %p313 = scmp.ne.s32.totalorder %s308, %s310
      %p314 = scmp.eq.s32.totalorder %s31, 0
      %p315 = por %p313, %p314
      %p316 = scmp.ne.s32.totalorder %s308, %s310
      %p317 = scmp.eq.s32.totalorder %s36, 1
      %p318 = por %p316, %p317
      %p319 = scmp.ne.s32.totalorder %s310, %s311
      %p320 = scmp.eq.s32.totalorder %s36, 0
      %p321 = por %p319, %p320
      %p322 = scmp.ne.s32.totalorder %s310, %s311
      %p323 = scmp.eq.s32.totalorder %s37, 1
      %p324 = por %p322, %p323
      %p326 = scmp.ne.s32.totalorder %s311, %s325
      %p327 = scmp.eq.s32.totalorder %s37, 0
      %p328 = por %p326, %p327
      %s330 = sadd.s32 %s329, 1
      %p333 = scmp.eq.s32.totalorder %s31, 1
      %p334 = scmp.ne.s32.totalorder %s329, %s331
      %p335 = scmp.eq.s32.totalorder %s31, 0
      %p336 = por %p334, %p335
      %p337 = scmp.ne.s32.totalorder %s329, %s331
      %p338 = scmp.eq.s32.totalorder %s36, 1
      %p339 = por %p337, %p338
      %p340 = scmp.ne.s32.totalorder %s331, %s332
      %p341 = scmp.eq.s32.totalorder %s36, 0
      %p342 = por %p340, %p341
      %p343 = scmp.ne.s32.totalorder %s331, %s332
      %p344 = scmp.eq.s32.totalorder %s37, 1
      %p345 = por %p343, %p344
      %p347 = scmp.ne.s32.totalorder %s332, %s346
      %p348 = scmp.eq.s32.totalorder %s37, 0
      %p349 = por %p347, %p348
      %s351 = sadd.s32 %s350, 1
      %p354 = scmp.eq.s32.totalorder %s31, 1
      %p355 = scmp.ne.s32.totalorder %s350, %s352
      %p356 = scmp.eq.s32.totalorder %s31, 0
      %p357 = por %p355, %p356
      %p358 = scmp.ne.s32.totalorder %s350, %s352
      %p359 = scmp.eq.s32.totalorder %s36, 1
      %p360 = por %p358, %p359
      %p361 = scmp.ne.s32.totalorder %s352, %s353
      %p362 = scmp.eq.s32.totalorder %s36, 0
      %p363 = por %p361, %p362
      %p364 = scmp.ne.s32.totalorder %s352, %s353
      %p365 = scmp.eq.s32.totalorder %s37, 1
      %p366 = por %p364, %p365
      %p368 = scmp.ne.s32.totalorder %s353, %s367
      %p369 = scmp.eq.s32.totalorder %s37, 0
      %p370 = por %p368, %p369
      %s372 = sadd.s32 %s371, 1
      %p375 = scmp.eq.s32.totalorder %s31, 1
      %p376 = scmp.ne.s32.totalorder %s371, %s373
      %p377 = scmp.eq.s32.totalorder %s31, 0
      %p378 = por %p376, %p377
      %p379 = scmp.ne.s32.totalorder %s371, %s373
      %p380 = scmp.eq.s32.totalorder %s36, 1
      %p381 = por %p379, %p380
      %p382 = scmp.ne.s32.totalorder %s373, %s374
      %p383 = scmp.eq.s32.totalorder %s36, 0
      %p384 = por %p382, %p383
      %p385 = scmp.ne.s32.totalorder %s373, %s374
      %p386 = scmp.eq.s32.totalorder %s37, 1
      %p387 = por %p385, %p386
      %p389 = scmp.ne.s32.totalorder %s374, %s388
      %p390 = scmp.eq.s32.totalorder %s37, 0
      %p391 = por %p389, %p390
      %s392 = ssub.s32 %s39, %s46
      %p393 = scmp.eq.s32.totalorder %s392, 0
      %s395 = sadd.s32 %s394, 1
      %s396 = scalar_select %p393, %s394, %s395
      %p399 = pneg %p393
      %p400 = scmp.eq.s32.totalorder %s31, 1
      %p401 = por %p399, %p400
      %p402 = scmp.ne.s32.totalorder %s394, %s397
      %p403 = scmp.eq.s32.totalorder %s31, 0
      %p404 = por %p402, %p403
      %p405 = scmp.ne.s32.totalorder %s394, %s397
      %p406 = scmp.eq.s32.totalorder %s36, 1
      %p407 = por %p405, %p406
      %p408 = scmp.ne.s32.totalorder %s397, %s398
      %p409 = scmp.eq.s32.totalorder %s36, 0
      %p410 = por %p408, %p409
      %p411 = scmp.ne.s32.totalorder %s397, %s398
      %p412 = scmp.eq.s32.totalorder %s37, 1
      %p413 = por %p411, %p412
      %p415 = scmp.ne.s32.totalorder %s398, %s414
      %p416 = scmp.eq.s32.totalorder %s37, 0
      %p417 = por %p415, %p416
      %s418 = ssub.s32 %s39, %s46
      %p419 = scmp.eq.s32.totalorder %s418, 0
      %s421 = sadd.s32 %s420, 1
      %s422 = scalar_select %p419, %s420, %s421
      %p425 = pneg %p419
      %p426 = scmp.eq.s32.totalorder %s31, 1
      %p427 = por %p425, %p426
      %p428 = scmp.ne.s32.totalorder %s420, %s423
      %p429 = scmp.eq.s32.totalorder %s31, 0
      %p430 = por %p428, %p429
      %p431 = scmp.ne.s32.totalorder %s420, %s423
      %p432 = scmp.eq.s32.totalorder %s36, 1
      %p433 = por %p431, %p432
      %p434 = scmp.ne.s32.totalorder %s423, %s424
      %p435 = scmp.eq.s32.totalorder %s36, 0
      %p436 = por %p434, %p435
      %p437 = scmp.ne.s32.totalorder %s423, %s424
      %p438 = scmp.eq.s32.totalorder %s37, 1
      %p439 = por %p437, %p438
      %p441 = scmp.ne.s32.totalorder %s424, %s440
      %p442 = scmp.eq.s32.totalorder %s37, 0
      %p443 = por %p441, %p442
      %s444 = ssub.s32 %s39, %s46
      %p445 = scmp.eq.s32.totalorder %s444, 0
      %s447 = sadd.s32 %s446, 1
      %s448 = scalar_select %p445, %s446, %s447
      %p451 = pneg %p445
      %p452 = scmp.eq.s32.totalorder %s31, 1
      %p453 = por %p451, %p452
      %p454 = scmp.ne.s32.totalorder %s446, %s449
      %p455 = scmp.eq.s32.totalorder %s31, 0
      %p456 = por %p454, %p455
      %p457 = scmp.ne.s32.totalorder %s446, %s449
      %p458 = scmp.eq.s32.totalorder %s36, 1
      %p459 = por %p457, %p458
      %p460 = scmp.ne.s32.totalorder %s449, %s450
      %p461 = scmp.eq.s32.totalorder %s36, 0
      %p462 = por %p460, %p461
      %p463 = scmp.ne.s32.totalorder %s449, %s450
      %p464 = scmp.eq.s32.totalorder %s37, 1
      %p465 = por %p463, %p464
      %p467 = scmp.ne.s32.totalorder %s450, %s466
      %p468 = scmp.eq.s32.totalorder %s37, 0
      %p469 = por %p467, %p468
      %s471 = sadd.s32 %s470, 1
      %p474 = scmp.eq.s32.totalorder %s31, 1
      %p475 = scmp.ne.s32.totalorder %s470, %s472
      %p476 = scmp.eq.s32.totalorder %s31, 0
      %p477 = por %p475, %p476
      %p478 = scmp.ne.s32.totalorder %s470, %s472
      %p479 = scmp.eq.s32.totalorder %s36, 1
      %p480 = por %p478, %p479
      %p481 = scmp.ne.s32.totalorder %s472, %s473
      %p482 = scmp.eq.s32.totalorder %s36, 0
      %p483 = por %p481, %p482
      %p484 = scmp.ne.s32.totalorder %s472, %s473
      %p485 = scmp.eq.s32.totalorder %s37, 1
      %p486 = por %p484, %p485
      %p488 = scmp.ne.s32.totalorder %s473, %s487
      %p489 = scmp.eq.s32.totalorder %s37, 0
      %p490 = por %p488, %p489
      %s491 = ssub.s32 %s38, %s50
      %p492 = scmp.eq.s32.totalorder %s491, 0
      %s494 = sadd.s32 %s493, 1
      %s495 = scalar_select %p492, %s493, %s494
      %p498 = pneg %p492
      %p499 = scmp.eq.s32.totalorder %s31, 1
      %p500 = por %p498, %p499
      %p501 = scmp.ne.s32.totalorder %s493, %s496
      %p502 = scmp.eq.s32.totalorder %s31, 0
      %p503 = por %p501, %p502
      %p504 = scmp.ne.s32.totalorder %s493, %s496
      %p505 = scmp.eq.s32.totalorder %s36, 1
      %p506 = por %p504, %p505
      %p507 = scmp.ne.s32.totalorder %s496, %s497
      %p508 = scmp.eq.s32.totalorder %s36, 0
      %p509 = por %p507, %p508
      %p510 = scmp.ne.s32.totalorder %s496, %s497
      %p511 = scmp.eq.s32.totalorder %s37, 1
      %p512 = por %p510, %p511
      %p514 = scmp.ne.s32.totalorder %s497, %s513
      %p515 = scmp.eq.s32.totalorder %s37, 0
      %p516 = por %p514, %p515
      %p517 = scmp.le.s32.totalorder 1, %s31
      %p518 = scmp.lt.s32.totalorder %s31, 3
      %p519 = pnand %p517, %p518
      %p520 = pneg %p519
      // Predicated region
      $region9: #{tpu_custom_call.1} parent=5 // pred_check
        _
      $region10: #{tpu_custom_call.1} parent=5 // pred_check_branch
        %522 = sbr.rel (%p519) target = $region12
      $region11: #{tpu_custom_call.1} parent=5 // pred_region
        %s523 = ssub.s32 %s31, 1
        // Predicated region
        $region13: #{tpu_custom_call.1} parent=11 // pred_check
          %p524 = pneg %p90
        $region14: #{tpu_custom_call.1} parent=11 // pred_check_branch
          %526 = sbr.rel (%p524) target = $region16
        $region15: #{tpu_custom_call.1} parent=11 // pred_region
          _
        $region16: #{tpu_custom_call.1} parent=11 // pred_fallthru
          _
        // Predicated region
        $region17: #{tpu_custom_call.1} parent=11 // pred_check
          %p527 = pneg %p111
        $region18: #{tpu_custom_call.1} parent=11 // pred_check_branch
          %529 = sbr.rel (%p527) target = $region20
        $region19: #{tpu_custom_call.1} parent=11 // pred_region
          _
        $region20: #{tpu_custom_call.1} parent=11 // pred_fallthru
          _
        // Predicated region
        $region21: #{tpu_custom_call.1} parent=11 // pred_check
          %p530 = pneg %p132
        $region22: #{tpu_custom_call.1} parent=11 // pred_check_branch
          %532 = sbr.rel (%p530) target = $region24
        $region23: #{tpu_custom_call.1} parent=11 // pred_region
          _
        $region24: #{tpu_custom_call.1} parent=11 // pred_fallthru
          _
        // Predicated region
        $region25: #{tpu_custom_call.1} parent=11 // pred_check
          %p533 = pneg %p153
        $region26: #{tpu_custom_call.1} parent=11 // pred_check_branch
          %535 = sbr.rel (%p533) target = $region28
        $region27: #{tpu_custom_call.1} parent=11 // pred_region
          _
        $region28: #{tpu_custom_call.1} parent=11 // pred_fallthru
          _
        // Predicated region
        $region29: #{tpu_custom_call.1} parent=11 // pred_check
          %p536 = pneg %p174
        $region30: #{tpu_custom_call.1} parent=11 // pred_check_branch
          %538 = sbr.rel (%p536) target = $region32
        $region31: #{tpu_custom_call.1} parent=11 // pred_region
          %s540 = ssub.s32 64, 64
          %541 = vsyncadd [#allocation7], %s540
          %s542 = sshll.u32 [#allocation6], 4
          %s543 = int_to_ptr.vmem [resolvable:$true] %s542
          %548 = dma.hbm_to_vmem [thread:$0]  %s5, 64, %s543, [#allocation7], 16, 16, 1
        $region32: #{tpu_custom_call.1} parent=11 // pred_fallthru
          _
        // Predicated region
        $region33: #{tpu_custom_call.1} parent=11 // pred_check
          %p549 = pneg %p195
        $region34: #{tpu_custom_call.1} parent=11 // pred_check_branch
          %551 = sbr.rel (%p549) target = $region36
        $region35: #{tpu_custom_call.1} parent=11 // pred_region
          _
        $region36: #{tpu_custom_call.1} parent=11 // pred_fallthru
          _
        // Predicated region
        $region37: #{tpu_custom_call.1} parent=11 // pred_check
          %p552 = pneg %p216
        $region38: #{tpu_custom_call.1} parent=11 // pred_check_branch
          %554 = sbr.rel (%p552) target = $region40
        $region39: #{tpu_custom_call.1} parent=11 // pred_region
          _
        $region40: #{tpu_custom_call.1} parent=11 // pred_fallthru
          _
        // Predicated region
        $region41: #{tpu_custom_call.1} parent=11 // pred_check
          %p555 = pneg %p237
        $region42: #{tpu_custom_call.1} parent=11 // pred_check_branch
          %557 = sbr.rel (%p555) target = $region44
        $region43: #{tpu_custom_call.1} parent=11 // pred_region
          _
        $region44: #{tpu_custom_call.1} parent=11 // pred_fallthru
          _
        // Predicated region
        $region45: #{tpu_custom_call.1} parent=11 // pred_check
          %p558 = pneg %p258
        $region46: #{tpu_custom_call.1} parent=11 // pred_check_branch
          %560 = sbr.rel (%p558) target = $region48
        $region47: #{tpu_custom_call.1} parent=11 // pred_region
          _
        $region48: #{tpu_custom_call.1} parent=11 // pred_fallthru
          _
        // Predicated region
        $region49: #{tpu_custom_call.1} parent=11 // pred_check
          %p561 = pneg %p279
        $region50: #{tpu_custom_call.1} parent=11 // pred_check_branch
          %563 = sbr.rel (%p561) target = $region52
        $region51: #{tpu_custom_call.1} parent=11 // pred_region
          _
        $region52: #{tpu_custom_call.1} parent=11 // pred_fallthru
          _
        // Predicated region
        $region53: #{tpu_custom_call.1} parent=11 // pred_check
          %p564 = pneg %p300
        $region54: #{tpu_custom_call.1} parent=11 // pred_check_branch
          %566 = sbr.rel (%p564) target = $region56
        $region55: #{tpu_custom_call.1} parent=11 // pred_region
          _
        $region56: #{tpu_custom_call.1} parent=11 // pred_fallthru
          _
        // Predicated region
        $region57: #{tpu_custom_call.1} parent=11 // pred_check
          %p567 = pneg %p321
        $region58: #{tpu_custom_call.1} parent=11 // pred_check_branch
          %569 = sbr.rel (%p567) target = $region60
        $region59: #{tpu_custom_call.1} parent=11 // pred_region
          _
        $region60: #{tpu_custom_call.1} parent=11 // pred_fallthru
          _
        // Predicated region
        $region61: #{tpu_custom_call.1} parent=11 // pred_check
          %p570 = pneg %p342
        $region62: #{tpu_custom_call.1} parent=11 // pred_check_branch
          %572 = sbr.rel (%p570) target = $region64
        $region63: #{tpu_custom_call.1} parent=11 // pred_region
          _
        $region64: #{tpu_custom_call.1} parent=11 // pred_fallthru
          _
        // Predicated region
        $region65: #{tpu_custom_call.1} parent=11 // pred_check
          %p573 = pneg %p363
        $region66: #{tpu_custom_call.1} parent=11 // pred_check_branch
          %575 = sbr.rel (%p573) target = $region68
        $region67: #{tpu_custom_call.1} parent=11 // pred_region
          _
        $region68: #{tpu_custom_call.1} parent=11 // pred_fallthru
          _
        // Predicated region
        $region69: #{tpu_custom_call.1} parent=11 // pred_check
          %p576 = pneg %p384
        $region70: #{tpu_custom_call.1} parent=11 // pred_check_branch
          %578 = sbr.rel (%p576) target = $region72
        $region71: #{tpu_custom_call.1} parent=11 // pred_region
          %s580 = ssub.s32 16, 16
          %581 = vsyncadd [#allocation10], %s580
          %s583 = sshll.u32 [#allocation9], 4
          %s584 = int_to_ptr.vmem [resolvable:$true] %s583
          %586 = dma.hbm_to_vmem [thread:$0]  %s15, 16, %s584, [#allocation10]
        $region72: #{tpu_custom_call.1} parent=11 // pred_fallthru
          _
        // Predicated region
        $region73: #{tpu_custom_call.1} parent=11 // pred_check
          %p587 = pneg %p410
        $region74: #{tpu_custom_call.1} parent=11 // pred_check_branch
          %589 = sbr.rel (%p587) target = $region76
        $region75: #{tpu_custom_call.1} parent=11 // pred_region
          %p590 = scmp.lt.s32.totalorder %s41, 0
          %s591 = scalar_select %p590, %s41, 0
          %s592 = smul.addr %s591, 8
          %s593 = scalar_lea.vmem %s16, %s592
        $region76: #{tpu_custom_call.1} parent=11 // pred_fallthru
          _
        // Predicated region
        $region77: #{tpu_custom_call.1} parent=11 // pred_check
          %p594 = pneg %p436
        $region78: #{tpu_custom_call.1} parent=11 // pred_check_branch
          %596 = sbr.rel (%p594) target = $region80
        $region79: #{tpu_custom_call.1} parent=11 // pred_region
          %s598 = ssub.s32 16, 16
          %599 = vsyncadd [#allocation10], %s598
          %s600 = smul.addr %s41, 16
          %s601 = scalar_lea.hbm %s17, %s600
          %s603 = sshll.u32 [#allocation11], 4
          %s604 = int_to_ptr.vmem [resolvable:$true] %s603
          %606 = dma.hbm_to_vmem [thread:$0]  %s601, 16, %s604, [#allocation10]
        $region80: #{tpu_custom_call.1} parent=11 // pred_fallthru
          _
        // Predicated region
        $region81: #{tpu_custom_call.1} parent=11 // pred_check
          %p607 = pneg %p462
        $region82: #{tpu_custom_call.1} parent=11 // pred_check_branch
          %609 = sbr.rel (%p607) target = $region84
        $region83: #{tpu_custom_call.1} parent=11 // pred_region
          %s610 = smul.u32 8, %s41
          %p611 = scmp.lt.s32.totalorder %s610, 7
          %s612 = scalar_select %p611, %s610, 7
          %s613 = smul.addr %s612, 8
          %s614 = scalar_lea.vmem %s18, %s613
          %s615 = smul.u32 8, %s41
        $region84: #{tpu_custom_call.1} parent=11 // pred_fallthru
          _
        // Predicated region
        $region85: #{tpu_custom_call.1} parent=11 // pred_check
          %p616 = pneg %p483
        $region86: #{tpu_custom_call.1} parent=11 // pred_check_branch
          %618 = sbr.rel (%p616) target = $region88
        $region87: #{tpu_custom_call.1} parent=11 // pred_region
          _
        $region88: #{tpu_custom_call.1} parent=11 // pred_fallthru
          _
      $region12: #{tpu_custom_call.1} parent=5 // pred_fallthru
        _
      %p619 = scmp.lt.s32.totalorder %s31, 2
      // Predicated region
      $region89: #{tpu_custom_call.1} parent=5 // pred_check
        %p620 = pneg %p619
      $region90: #{tpu_custom_call.1} parent=5 // pred_check_branch
        %622 = sbr.rel (%p620) target = $region92
      $region91: #{tpu_custom_call.1} parent=5 // pred_region
        // Predicated region
        $region93: #{tpu_custom_call.1} parent=91 // pred_check
          %p623 = pneg %p63
        $region94: #{tpu_custom_call.1} parent=91 // pred_check_branch
          %625 = sbr.rel (%p623) target = $region96
        $region95: #{tpu_custom_call.1} parent=91 // pred_region
          %p626 = scmp.lt.s32.totalorder %s38, 1
          %s627 = scalar_select %p626, %s38, 1
          %s628 = smul.addr %s627, 2
          %s629 = smul.addr %s628, 8
          %s630 = scalar_lea.vmem %s0, %s629
        $region96: #{tpu_custom_call.1} parent=91 // pred_fallthru
          _
      $region92: #{tpu_custom_call.1} parent=5 // pred_fallthru
        _
      %p631 = scmp.le.s32.totalorder 1, %s31
      %p632 = scmp.lt.s32.totalorder %s31, 3
      %p633 = pnand %p631, %p632
      %p634 = pneg %p633
      // Predicated region
      $region97: #{tpu_custom_call.1} parent=5 // pred_check
        _
      $region98: #{tpu_custom_call.1} parent=5 // pred_check_branch
        %636 = sbr.rel (%p633) target = $region100
      $region99: #{tpu_custom_call.1} parent=5 // pred_region
        %s637 = ssub.s32 %s31, 1
        // Predicated region
        $region101: #{tpu_custom_call.1} parent=99 // pred_check
          %p638 = pneg %p174
        $region102: #{tpu_custom_call.1} parent=99 // pred_check_branch
          %640 = sbr.rel (%p638) target = $region104
        $region103: #{tpu_custom_call.1} parent=99 // pred_region
          %641 = dma.done [#allocation7], 64
        $region104: #{tpu_custom_call.1} parent=99 // pred_fallthru
          _
        // Predicated region
        $region105: #{tpu_custom_call.1} parent=99 // pred_check
          %p642 = pneg %p384
        $region106: #{tpu_custom_call.1} parent=99 // pred_check_branch
          %644 = sbr.rel (%p642) target = $region108
        $region107: #{tpu_custom_call.1} parent=99 // pred_region
          %645 = dma.done [#allocation10], 16
        $region108: #{tpu_custom_call.1} parent=99 // pred_fallthru
          _
        // Predicated region
        $region109: #{tpu_custom_call.1} parent=99 // pred_check
          %p646 = pneg %p436
        $region110: #{tpu_custom_call.1} parent=99 // pred_check_branch
          %648 = sbr.rel (%p646) target = $region112
        $region111: #{tpu_custom_call.1} parent=99 // pred_region
          %649 = dma.done [#allocation10], 16
        $region112: #{tpu_custom_call.1} parent=99 // pred_fallthru
          _
        %p650 = scmp.lt.s32.totalorder %s40, 1
        %s651 = scalar_select %p650, %s40, 1
        %s652 = smul.addr %s651, 2
        %s653 = smul.addr %s652, 8
        %s654 = scalar_lea.vmem %s0, %s653
        %p655 = pneg %p69
        %p656 = pneg %p66
        %p657 = pneg %p90
        %p658 = pneg %p87
        %p659 = pneg %p111
        %p660 = pneg %p108
        %p661 = pneg %p132
        %p662 = pneg %p129
        %p663 = pneg %p153
        %p664 = pneg %p150
        %p665 = pneg %p174
        %p666 = pneg %p171
        %p667 = pneg %p195
        %p668 = pneg %p192
        %p669 = pneg %p216
        %p670 = pneg %p213
        %p671 = pneg %p237
        %p672 = pneg %p234
        %p673 = pneg %p258
        %p674 = pneg %p255
        %p675 = pneg %p279
        %p676 = pneg %p276
        %p677 = pneg %p300
        %p678 = pneg %p297
        %p679 = pneg %p321
        %p680 = pneg %p318
        %p681 = pneg %p342
        %p682 = pneg %p339
        %p683 = pneg %p363
        %p684 = pneg %p360
        %p685 = pneg %p384
        %p686 = pneg %p381
        %p687 = scmp.lt.s32.totalorder %s41, 0
        %s688 = scalar_select %p687, %s41, 0
        %s689 = smul.addr %s688, 8
        %s690 = scalar_lea.vmem %s16, %s689
        %p691 = pneg %p410
        %p692 = pneg %p407
        %p693 = pneg %p436
        %p694 = pneg %p433
        %s695 = smul.u32 8, %s41
        %p696 = scmp.lt.s32.totalorder %s695, 7
        %s697 = scalar_select %p696, %s695, 7
        %s698 = smul.addr %s697, 8
        %s699 = scalar_lea.vmem %s18, %s698
        %p700 = pneg %p462
        %p701 = pneg %p459
        %p702 = pneg %p483
        %p703 = pneg %p480
        %p704 = pneg %p509
        %p705 = pneg %p506
        %s706 = sand.u32 %s496, 1
        %s707 = scalar_lea.sflag [#allocation8], %s706
        %s708 = sand.u32 %s496, 1
        %s709 = smul.addr %s708, 16
        %s710 = scalar_lea.vmem [#allocation12], %s709
        %p711 = scmp.lt.s32.totalorder %s40, 1
        %s712 = scalar_select %p711, %s40, 1
        %s713 = smul.addr %s712, 2
        %s714 = smul.addr %s713, 8
        %s715 = scalar_lea.vmem %s0, %s714
        %p716 = scmp.lt.s32.totalorder %s41, 0
        %s717 = scalar_select %p716, %s41, 0
        %s718 = smul.addr %s717, 8
        %s719 = scalar_lea.vmem %s16, %s718
        %s720 = smul.u32 8, %s41
        %p721 = scmp.lt.s32.totalorder %s720, 7
        %s722 = scalar_select %p721, %s720, 7
        %s723 = smul.addr %s722, 8
        %s724 = scalar_lea.vmem %s18, %s723
        %s725 = smul.u32 8, %s41
        %p726 = scmp.eq.s32.totalorder %s41, 0
        // Predicated region
        $region113: #{tpu_custom_call.1} parent=99 // pred_check
          %p727 = pneg %p726
        $region114: #{tpu_custom_call.1} parent=99 // pred_check_branch
          %729 = sbr.rel (%p727) target = $region116
        $region115: #{tpu_custom_call.1} parent=99 // pred_region
          %v730 = vld [vmem:[%s715] sm:$0xff]
          %v731 = vld [vmem:[%s715 + $0x8] sm:$0xff]
          %v732 = vld [vmem:[%s2] sm:$0x1]
          %v733 = vld [vmem:[%s3] sm:$0x1]
          %vm734 = vcmask 261120
          %v735 = vsel %vm734, %v730, 0.0
          %736 = vadd.xlane.f32.xlu0 %v735
          %v737 = vpop.xlane.xlu0 %736
          %v738 = vsel %vm734, %v731, 0.0
          %739 = vadd.xlane.f32.xlu0 %v738
          %v740 = vpop.xlane.xlu0 %739
          %v741 = vrcp.pop 32.0
          %v742 = vmul.f32 %v737, %v741
          %v743 = vmul.f32 %v740, %v741
          %v744 = vsub.f32 %v730, %v742
          %v745 = vsub.f32 %v731, %v743
          %v746 = vmul.f32 %v744, %v744
          %v747 = vmul.f32 %v745, %v745
          %v748 = vsel %vm734, %v746, 0.0
          %749 = vadd.xlane.f32.xlu0 %v748
          %v750 = vpop.xlane.xlu0 %749
          %v751 = vsel %vm734, %v747, 0.0
          %752 = vadd.xlane.f32.xlu0 %v751
          %v753 = vpop.xlane.xlu0 %752
          %v754 = vmul.f32 %v750, %v741
          %v755 = vmul.f32 %v753, %v741
          %v756 = vadd.f32 %v754, 1e-05
          %v757 = vadd.f32 %v755, 1e-05
          %v758 = vrsqrt.pop %v756
          %v759 = vrsqrt.pop %v757
          %v760 = vmul.f32 %v744, %v758
          %v761 = vmul.f32 %v745, %v759
          %v763 = vlaneseq
          %v764 = vshrl.u32 %v763, 7
          %v765 = vsub.s32 0, %v764
          %v766 = vrot.slane %v732, %v765
          %v768 = vmul.f32 %v760, %v766
          %v769 = vmul.f32 %v761, %v766
          %v771 = vlaneseq
          %v772 = vshrl.u32 %v771, 7
          %v773 = vsub.s32 0, %v772
          %v774 = vrot.slane %v733, %v773
          %v776 = vadd.f32 %v768, %v774
          %v777 = vadd.f32 %v769, %v774
          %v778 = vld [vmem:[%s4] sm:$0xff]
          %v779 = vld [vmem:[%s4 + $0x8] sm:$0xff]
          %v780 = vld [vmem:[%s4 + $0x10] sm:$0xff]
          %v781 = vld [vmem:[%s4 + $0x18] sm:$0xff]
          %v782 = vld [vmem:[#allocation6] sm:$0x1]
          %v784 = vlaneseq
          %v785 = vshrl.u32 %v784, 7
          %v786 = vsub.s32 0, %v785
          %v787 = vrot.slane %v782, %v786
          %v790 = vsel %vm734, %v776, 0
          %v793 = vsel %vm734, %v777, 0
          %795 = vmatprep.subr.mxu0 0.0
          %796 = vmatpush1.msra.mxu0 %v778
          %797 = vmatprep.subr.mxu0 0.0
          %798 = vmatpush1.msra.mxu0 %v779
          %799 = vmatprep.subr.mxu0 0.0
          %800 = vmatpush1.msra.mxu0 %v780
          %801 = vmatprep.subr.mxu0 0.0
          %802 = vmatpush1.msra.mxu0 %v781
          %803 = vmatprep.subr.mxu0 0.0
          %804 = vmatpush1.msra.mxu0 0.0
          %805 = vmatprep.subr.mxu0 0.0
          %806 = vmatpush1.msra.mxu0 0.0
          %807 = vmatprep.subr.mxu0 0.0
          %808 = vmatpush1.msra.mxu0 0.0
          %809 = vmatprep.subr.mxu0 0.0
          %810 = vmatpush1.msra.mxu0 0.0
          %811 = vmatprep.subr.mxu0 0.0
          %812 = vmatpush1.msra.mxu0 0.0
          %813 = vmatprep.subr.mxu0 0.0
          %814 = vmatpush1.msra.mxu0 0.0
          %815 = vmatprep.subr.mxu0 0.0
          %816 = vmatpush1.msra.mxu0 0.0
          %817 = vmatprep.subr.mxu0 0.0
          %818 = vmatpush1.msra.mxu0 0.0
          %819 = vmatprep.subr.mxu0 0.0
          %820 = vmatpush1.msra.mxu0 0.0
          %821 = vmatprep.subr.mxu0 0.0
          %822 = vmatpush1.msra.mxu0 0.0
          %823 = vmatprep.subr.mxu0 0.0
          %824 = vmatpush1.msra.mxu0 0.0
          %825 = vmatprep.subr.mxu0 0.0
          %826 = vmatpush1.msra.mxu0 0.0
          %827 = vmatprep.subr.mxu0 0.0
          %828 = vmatpush1.msra.mxu0 0.0
          %829 = vmatprep.subr.mxu0 0.0
          %830 = vmatpush1.msra.mxu0 0.0
          %831 = vmatprep.subr.mxu0 0.0
          %832 = vmatpush1.msra.mxu0 0.0
          %833 = vmatprep.subr.mxu0 0.0
          %834 = vmatpush1.msra.mxu0 0.0
          %835 = vmatprep.subr.mxu0 0.0
          %836 = vmatpush1.msra.mxu0 0.0
          %837 = vmatprep.subr.mxu0 0.0
          %838 = vmatpush1.msra.mxu0 0.0
          %839 = vmatprep.subr.mxu0 0.0
          %840 = vmatpush1.msra.mxu0 0.0
          %841 = vmatprep.subr.mxu0 0.0
          %842 = vmatpush1.msra.mxu0 0.0
          %843 = vmatprep.subr.mxu0 0.0
          %844 = vmatpush1.msra.mxu0 0.0
          %845 = vmatprep.subr.mxu0 0.0
          %846 = vmatpush1.msra.mxu0 0.0
          %847 = vmatprep.subr.mxu0 0.0
          %848 = vmatpush1.msra.mxu0 0.0
          %849 = vmatprep.subr.mxu0 0.0
          %850 = vmatpush1.msra.mxu0 0.0
          %851 = vmatprep.subr.mxu0 0.0
          %852 = vmatpush1.msra.mxu0 0.0
          %853 = vmatprep.subr.mxu0 0.0
          %854 = vmatpush1.msra.mxu0 0.0
          %855 = vmatprep.subr.mxu0 0.0
          %856 = vmatpush1.msra.mxu0 0.0
          %857 = vmatprep.subr.mxu0 0.0
          %858 = vmatpush1.msra.mxu0 0.0
          %859 = vmatprep.mubr.f32.mxu0 0.0
          %860 = vmatmul.mubr.f32.gmra.mrb[0].mxu0 %v790
          %v861 = vpop.f32.mrb[0].mxu0
          %v862 = vadd.f32 %v787, %v861
          %v863 = vpop.f32.mrb[0].mxu0
          %864 = vmatprep.mubr.f32.mxu0 0.0
          %865 = vmatmul.mubr.f32.gmra.mrb[0].mxu0 %v793
          %v866 = vpop.f32.mrb[0].mxu0
          %v867 = vadd.f32 %v787, %v866
          %v868 = vpop.f32.mrb[0].mxu0
          %869 = vdwg.mxu0
          %v870 = vld [vmem:[%s6] sm:$0xff]
          %v871 = vld [vmem:[%s7] sm:$0x1]
          %v873 = vlaneseq
          %v874 = vshrl.u32 %v873, 7
          %v875 = vsub.s32 0, %v874
          %v876 = vrot.slane %v871, %v875
          %vm878 = vcmask 64512
          %v880 = vsel %vm878, %v862, 0
          %v883 = vsel %vm878, %v867, 0
          %885 = vmatprep.subr.mxu0 0.0
          %886 = vmatpush1.msra.mxu0 %v870
          %887 = vmatprep.subr.mxu0 0.0
          %888 = vmatpush1.msra.mxu0 0.0
          %889 = vmatprep.subr.mxu0 0.0
          %890 = vmatpush1.msra.mxu0 0.0
          %891 = vmatprep.subr.mxu0 0.0
          %892 = vmatpush1.msra.mxu0 0.0
          %893 = vmatprep.subr.mxu0 0.0
          %894 = vmatpush1.msra.mxu0 0.0
          %895 = vmatprep.subr.mxu0 0.0
          %896 = vmatpush1.msra.mxu0 0.0
          %897 = vmatprep.subr.mxu0 0.0
          %898 = vmatpush1.msra.mxu0 0.0
          %899 = vmatprep.subr.mxu0 0.0
          %900 = vmatpush1.msra.mxu0 0.0
          %901 = vmatprep.subr.mxu0 0.0
          %902 = vmatpush1.msra.mxu0 0.0
          %903 = vmatprep.subr.mxu0 0.0
          %904 = vmatpush1.msra.mxu0 0.0
          %905 = vmatprep.subr.mxu0 0.0
          %906 = vmatpush1.msra.mxu0 0.0
          %907 = vmatprep.subr.mxu0 0.0
          %908 = vmatpush1.msra.mxu0 0.0
          %909 = vmatprep.subr.mxu0 0.0
          %910 = vmatpush1.msra.mxu0 0.0
          %911 = vmatprep.subr.mxu0 0.0
          %912 = vmatpush1.msra.mxu0 0.0
          %913 = vmatprep.subr.mxu0 0.0
          %914 = vmatpush1.msra.mxu0 0.0
          %915 = vmatprep.subr.mxu0 0.0
          %916 = vmatpush1.msra.mxu0 0.0
          %917 = vmatprep.subr.mxu0 0.0
          %918 = vmatpush1.msra.mxu0 0.0
          %919 = vmatprep.subr.mxu0 0.0
          %920 = vmatpush1.msra.mxu0 0.0
          %921 = vmatprep.subr.mxu0 0.0
          %922 = vmatpush1.msra.mxu0 0.0
          %923 = vmatprep.subr.mxu0 0.0
          %924 = vmatpush1.msra.mxu0 0.0
          %925 = vmatprep.subr.mxu0 0.0
          %926 = vmatpush1.msra.mxu0 0.0
          %927 = vmatprep.subr.mxu0 0.0
          %928 = vmatpush1.msra.mxu0 0.0
          %929 = vmatprep.subr.mxu0 0.0
          %930 = vmatpush1.msra.mxu0 0.0
          %931 = vmatprep.subr.mxu0 0.0
          %932 = vmatpush1.msra.mxu0 0.0
          %933 = vmatprep.subr.mxu0 0.0
          %934 = vmatpush1.msra.mxu0 0.0
          %935 = vmatprep.subr.mxu0 0.0
          %936 = vmatpush1.msra.mxu0 0.0
          %937 = vmatprep.subr.mxu0 0.0
          %938 = vmatpush1.msra.mxu0 0.0
          %939 = vmatprep.subr.mxu0 0.0
          %940 = vmatpush1.msra.mxu0 0.0
          %941 = vmatprep.subr.mxu0 0.0
          %942 = vmatpush1.msra.mxu0 0.0
          %943 = vmatprep.subr.mxu0 0.0
          %944 = vmatpush1.msra.mxu0 0.0
          %945 = vmatprep.subr.mxu0 0.0
          %946 = vmatpush1.msra.mxu0 0.0
          %947 = vmatprep.subr.mxu0 0.0
          %948 = vmatpush1.msra.mxu0 0.0
          %949 = vmatprep.mubr.f32.mxu0 0.0
          %950 = vmatmul.mubr.f32.gmra.mrb[0].mxu0 %v880
          %v951 = vpop.f32.mrb[0].mxu0
          %v952 = vadd.f32 %v876, %v951
          %v953 = vpop.f32.mrb[0].mxu0
          %954 = vmatprep.mubr.f32.mxu0 0.0
          %955 = vmatmul.mubr.f32.gmra.mrb[0].mxu0 %v883
          %v956 = vpop.f32.mrb[0].mxu0
          %v957 = vadd.f32 %v876, %v956
          %v958 = vpop.f32.mrb[0].mxu0
          %959 = vdwg.mxu0
          %v960 = vmul.f32 %v952, 0.35355338
          %v961 = vmul.f32 %v957, 0.35355338
          %v962 = vld [vmem:[%s8] sm:$0xff]
          %v963 = vld [vmem:[%s9] sm:$0x1]
          %v965 = vlaneseq
          %v966 = vshrl.u32 %v965, 7
          %v967 = vsub.s32 0, %v966
          %v968 = vrot.slane %v963, %v967
          %970 = vmatprep.subr.mxu0 0.0
          %971 = vmatpush1.msra.mxu0 %v962
          %972 = vmatprep.subr.mxu0 0.0
          %973 = vmatpush1.msra.mxu0 0.0
          %974 = vmatprep.subr.mxu0 0.0
          %975 = vmatpush1.msra.mxu0 0.0
          %976 = vmatprep.subr.mxu0 0.0
          %977 = vmatpush1.msra.mxu0 0.0
          %978 = vmatprep.subr.mxu0 0.0
          %979 = vmatpush1.msra.mxu0 0.0
          %980 = vmatprep.subr.mxu0 0.0
          %981 = vmatpush1.msra.mxu0 0.0
          %982 = vmatprep.subr.mxu0 0.0
          %983 = vmatpush1.msra.mxu0 0.0
          %984 = vmatprep.subr.mxu0 0.0
          %985 = vmatpush1.msra.mxu0 0.0
          %986 = vmatprep.subr.mxu0 0.0
          %987 = vmatpush1.msra.mxu0 0.0
          %988 = vmatprep.subr.mxu0 0.0
          %989 = vmatpush1.msra.mxu0 0.0
          %990 = vmatprep.subr.mxu0 0.0
          %991 = vmatpush1.msra.mxu0 0.0
          %992 = vmatprep.subr.mxu0 0.0
          %993 = vmatpush1.msra.mxu0 0.0
          %994 = vmatprep.subr.mxu0 0.0
          %995 = vmatpush1.msra.mxu0 0.0
          %996 = vmatprep.subr.mxu0 0.0
          %997 = vmatpush1.msra.mxu0 0.0
          %998 = vmatprep.subr.mxu0 0.0
          %999 = vmatpush1.msra.mxu0 0.0
          %1000 = vmatprep.subr.mxu0 0.0
          %1001 = vmatpush1.msra.mxu0 0.0
          %1002 = vmatprep.subr.mxu0 0.0
          %1003 = vmatpush1.msra.mxu0 0.0
          %1004 = vmatprep.subr.mxu0 0.0
          %1005 = vmatpush1.msra.mxu0 0.0
          %1006 = vmatprep.subr.mxu0 0.0
          %1007 = vmatpush1.msra.mxu0 0.0
          %1008 = vmatprep.subr.mxu0 0.0
          %1009 = vmatpush1.msra.mxu0 0.0
          %1010 = vmatprep.subr.mxu0 0.0
          %1011 = vmatpush1.msra.mxu0 0.0
          %1012 = vmatprep.subr.mxu0 0.0
          %1013 = vmatpush1.msra.mxu0 0.0
          %1014 = vmatprep.subr.mxu0 0.0
          %1015 = vmatpush1.msra.mxu0 0.0
          %1016 = vmatprep.subr.mxu0 0.0
          %1017 = vmatpush1.msra.mxu0 0.0
          %1018 = vmatprep.subr.mxu0 0.0
          %1019 = vmatpush1.msra.mxu0 0.0
          %1020 = vmatprep.subr.mxu0 0.0
          %1021 = vmatpush1.msra.mxu0 0.0
          %1022 = vmatprep.subr.mxu0 0.0
          %1023 = vmatpush1.msra.mxu0 0.0
          %1024 = vmatprep.subr.mxu0 0.0
          %1025 = vmatpush1.msra.mxu0 0.0
          %1026 = vmatprep.subr.mxu0 0.0
          %1027 = vmatpush1.msra.mxu0 0.0
          %1028 = vmatprep.subr.mxu0 0.0
          %1029 = vmatpush1.msra.mxu0 0.0
          %1030 = vmatprep.subr.mxu0 0.0
          %1031 = vmatpush1.msra.mxu0 0.0
          %1032 = vmatprep.subr.mxu0 0.0
          %1033 = vmatpush1.msra.mxu0 0.0
          %1034 = vmatprep.mubr.f32.mxu0 0.0
          %1035 = vmatmul.mubr.f32.gmra.mrb[0].mxu0 %v880
          %v1036 = vpop.f32.mrb[0].mxu0
          %v1037 = vadd.f32 %v968, %v1036
          %v1038 = vpop.f32.mrb[0].mxu0
          %1039 = vmatprep.mubr.f32.mxu0 0.0
          %1040 = vmatmul.mubr.f32.gmra.mrb[0].mxu0 %v883
          %v1041 = vpop.f32.mrb[0].mxu0
          %v1042 = vadd.f32 %v968, %v1041
          %v1043 = vpop.f32.mrb[0].mxu0
          %1044 = vdwg.mxu0
          %v1045 = vld [vmem:[%s10] sm:$0xff]
          %v1046 = vld [vmem:[%s11] sm:$0x1]
          %v1048 = vlaneseq
          %v1049 = vshrl.u32 %v1048, 7
          %v1050 = vsub.s32 0, %v1049
          %v1051 = vrot.slane %v1046, %v1050
          %1053 = vmatprep.subr.mxu0 0.0
          %1054 = vmatpush1.msra.mxu0 %v1045
          %1055 = vmatprep.subr.mxu0 0.0
          %1056 = vmatpush1.msra.mxu0 0.0
          %1057 = vmatprep.subr.mxu0 0.0
          %1058 = vmatpush1.msra.mxu0 0.0
          %1059 = vmatprep.subr.mxu0 0.0
          %1060 = vmatpush1.msra.mxu0 0.0
          %1061 = vmatprep.subr.mxu0 0.0
          %1062 = vmatpush1.msra.mxu0 0.0
          %1063 = vmatprep.subr.mxu0 0.0
          %1064 = vmatpush1.msra.mxu0 0.0
          %1065 = vmatprep.subr.mxu0 0.0
          %1066 = vmatpush1.msra.mxu0 0.0
          %1067 = vmatprep.subr.mxu0 0.0
          %1068 = vmatpush1.msra.mxu0 0.0
          %1069 = vmatprep.subr.mxu0 0.0
          %1070 = vmatpush1.msra.mxu0 0.0
          %1071 = vmatprep.subr.mxu0 0.0
          %1072 = vmatpush1.msra.mxu0 0.0
          %1073 = vmatprep.subr.mxu0 0.0
          %1074 = vmatpush1.msra.mxu0 0.0
          %1075 = vmatprep.subr.mxu0 0.0
          %1076 = vmatpush1.msra.mxu0 0.0
          %1077 = vmatprep.subr.mxu0 0.0
          %1078 = vmatpush1.msra.mxu0 0.0
          %1079 = vmatprep.subr.mxu0 0.0
          %1080 = vmatpush1.msra.mxu0 0.0
          %1081 = vmatprep.subr.mxu0 0.0
          %1082 = vmatpush1.msra.mxu0 0.0
          %1083 = vmatprep.subr.mxu0 0.0
          %1084 = vmatpush1.msra.mxu0 0.0
          %1085 = vmatprep.subr.mxu0 0.0
          %1086 = vmatpush1.msra.mxu0 0.0
          %1087 = vmatprep.subr.mxu0 0.0
          %1088 = vmatpush1.msra.mxu0 0.0
          %1089 = vmatprep.subr.mxu0 0.0
          %1090 = vmatpush1.msra.mxu0 0.0
          %1091 = vmatprep.subr.mxu0 0.0
          %1092 = vmatpush1.msra.mxu0 0.0
          %1093 = vmatprep.subr.mxu0 0.0
          %1094 = vmatpush1.msra.mxu0 0.0
          %1095 = vmatprep.subr.mxu0 0.0
          %1096 = vmatpush1.msra.mxu0 0.0
          %1097 = vmatprep.subr.mxu0 0.0
          %1098 = vmatpush1.msra.mxu0 0.0
          %1099 = vmatprep.subr.mxu0 0.0
          %1100 = vmatpush1.msra.mxu0 0.0
          %1101 = vmatprep.subr.mxu0 0.0
          %1102 = vmatpush1.msra.mxu0 0.0
          %1103 = vmatprep.subr.mxu0 0.0
          %1104 = vmatpush1.msra.mxu0 0.0
          %1105 = vmatprep.subr.mxu0 0.0
          %1106 = vmatpush1.msra.mxu0 0.0
          %1107 = vmatprep.subr.mxu0 0.0
          %1108 = vmatpush1.msra.mxu0 0.0
          %1109 = vmatprep.subr.mxu0 0.0
          %1110 = vmatpush1.msra.mxu0 0.0
          %1111 = vmatprep.subr.mxu0 0.0
          %1112 = vmatpush1.msra.mxu0 0.0
          %1113 = vmatprep.subr.mxu0 0.0
          %1114 = vmatpush1.msra.mxu0 0.0
          %1115 = vmatprep.subr.mxu0 0.0
          %1116 = vmatpush1.msra.mxu0 0.0
          %1117 = vmatprep.mubr.f32.mxu0 0.0
          %1118 = vmatmul.mubr.f32.gmra.mrb[0].mxu0 %v880
          %v1119 = vpop.f32.mrb[0].mxu0
          %v1120 = vadd.f32 %v1051, %v1119
          %v1121 = vpop.f32.mrb[0].mxu0
          %1122 = vmatprep.mubr.f32.mxu0 0.0
          %1123 = vmatmul.mubr.f32.gmra.mrb[0].mxu0 %v883
          %v1124 = vpop.f32.mrb[0].mxu0
          %v1125 = vadd.f32 %v1051, %v1124
          %v1126 = vpop.f32.mrb[0].mxu0
          %1127 = vdwg.mxu0
          %vm1128 = vcmask 31744
          %v1130 = vsel %vm1128, %v960, 0
          %v1133 = vsel %vm1128, %v961, 0
          %v1136 = vsel %vm1128, %v1037, 0
          %v1139 = vsel %vm1128, %v1042, 0
          %1141 = vmatprep.subr.mxu0 0.0
          %1142 = vmatpush1.xpose.msra.mxu0 %v1136
          %1143 = vmatprep.subr.mxu0 0.0
          %1144 = vmatpush1.xpose.msra.mxu0 %v1139
          %1145 = vmatprep.subr.mxu0 0.0
          %1146 = vmatpush1.xpose.msra.mxu0 0.0
          %1147 = vmatprep.subr.mxu0 0.0
          %1148 = vmatpush1.xpose.msra.mxu0 0.0
          %1149 = vmatprep.subr.mxu0 0.0
          %1150 = vmatpush1.xpose.msra.mxu0 0.0
          %1151 = vmatprep.subr.mxu0 0.0
          %1152 = vmatpush1.xpose.msra.mxu0 0.0
          %1153 = vmatprep.subr.mxu0 0.0
          %1154 = vmatpush1.xpose.msra.mxu0 0.0
          %1155 = vmatprep.subr.mxu0 0.0
          %1156 = vmatpush1.xpose.msra.mxu0 0.0
          %1157 = vmatprep.subr.mxu0 0.0
          %1158 = vmatpush1.xpose.msra.mxu0 0.0
          %1159 = vmatprep.subr.mxu0 0.0
          %1160 = vmatpush1.xpose.msra.mxu0 0.0
          %1161 = vmatprep.subr.mxu0 0.0
          %1162 = vmatpush1.xpose.msra.mxu0 0.0
          %1163 = vmatprep.subr.mxu0 0.0
          %1164 = vmatpush1.xpose.msra.mxu0 0.0
          %1165 = vmatprep.subr.mxu0 0.0
          %1166 = vmatpush1.xpose.msra.mxu0 0.0
          %1167 = vmatprep.subr.mxu0 0.0
          %1168 = vmatpush1.xpose.msra.mxu0 0.0
          %1169 = vmatprep.subr.mxu0 0.0
          %1170 = vmatpush1.xpose.msra.mxu0 0.0
          %1171 = vmatprep.subr.mxu0 0.0
          %1172 = vmatpush1.xpose.msra.mxu0 0.0
          %1173 = vmatprep.subr.mxu0 0.0
          %1174 = vmatpush1.xpose.msra.mxu0 0.0
          %1175 = vmatprep.subr.mxu0 0.0
          %1176 = vmatpush1.xpose.msra.mxu0 0.0
          %1177 = vmatprep.subr.mxu0 0.0
          %1178 = vmatpush1.xpose.msra.mxu0 0.0
          %1179 = vmatprep.subr.mxu0 0.0
          %1180 = vmatpush1.xpose.msra.mxu0 0.0
          %1181 = vmatprep.subr.mxu0 0.0
          %1182 = vmatpush1.xpose.msra.mxu0 0.0
          %1183 = vmatprep.subr.mxu0 0.0
          %1184 = vmatpush1.xpose.msra.mxu0 0.0
          %1185 = vmatprep.subr.mxu0 0.0
          %1186 = vmatpush1.xpose.msra.mxu0 0.0
          %1187 = vmatprep.subr.mxu0 0.0
          %1188 = vmatpush1.xpose.msra.mxu0 0.0
          %1189 = vmatprep.subr.mxu0 0.0
          %1190 = vmatpush1.xpose.msra.mxu0 0.0
          %1191 = vmatprep.subr.mxu0 0.0
          %1192 = vmatpush1.xpose.msra.mxu0 0.0
          %1193 = vmatprep.subr.mxu0 0.0
          %1194 = vmatpush1.xpose.msra.mxu0 0.0
          %1195 = vmatprep.subr.mxu0 0.0
          %1196 = vmatpush1.xpose.msra.mxu0 0.0
          %1197 = vmatprep.subr.mxu0 0.0
          %1198 = vmatpush1.xpose.msra.mxu0 0.0
          %1199 = vmatprep.subr.mxu0 0.0
          %1200 = vmatpush1.xpose.msra.mxu0 0.0
          %1201 = vmatprep.subr.mxu0 0.0
          %1202 = vmatpush1.xpose.msra.mxu0 0.0
          %1203 = vmatprep.subr.mxu0 0.0
          %1204 = vmatpush1.xpose.msra.mxu0 0.0
          %1205 = vmatprep.mubr.f32.mxu0 0.0
          %1206 = vmatmul.mubr.f32.gmra.mrb[0].mxu0 %v1130
          %v1207 = vpop.f32.mrb[0].mxu0
          %v1208 = vadd.f32 0.0, %v1207
          %v1209 = vpop.f32.mrb[0].mxu0
          %1210 = vmatprep.mubr.f32.mxu0 0.0
          %1211 = vmatmul.mubr.f32.gmra.mrb[0].mxu0 %v1133
          %v1212 = vpop.f32.mrb[0].mxu0
          %v1213 = vadd.f32 0.0, %v1212
          %v1214 = vpop.f32.mrb[0].mxu0
          %1215 = vdwg.mxu0
          %vm1216 = vcmask 130048
          %v1217 = vsel %vm1216, %v1208, -inf
          %1218 = vmax.xlane.f32.xlu0 %v1217
          %v1219 = vpop.xlane.xlu0 %1218
          %v1220 = vsel %vm1216, %v1213, -inf
          %1221 = vmax.xlane.f32.xlu0 %v1220
          %v1222 = vpop.xlane.xlu0 %1221
          %v1223 = vsub.f32 %v1208, %v1219
          %v1224 = vsub.f32 %v1213, %v1222
          %v1225 = vmul.f32 %v1223, 1.442695
          %v1226 = vpow.pop %v1225
          %v1227 = vmul.f32 %v1224, 1.442695
          %v1228 = vpow.pop %v1227
          %v1229 = vsel %vm1216, %v1226, 0.0
          %1230 = vadd.xlane.f32.xlu0 %v1229
          %v1231 = vpop.xlane.xlu0 %1230
          %v1232 = vsel %vm1216, %v1228, 0.0
          %1233 = vadd.xlane.f32.xlu0 %v1232
          %v1234 = vpop.xlane.xlu0 %1233
          %v1235 = vrcp.pop %v1231
          %v1236 = vmul.f32 1.0, %v1235
          %v1237 = vrcp.pop %v1234
          %v1238 = vmul.f32 1.0, %v1237
          %v1239 = vmul.f32 %v1226, %v1236
          %v1240 = vmul.f32 %v1228, %v1238
          %v1242 = vsel %vm1216, %v1239, 0
          %v1245 = vsel %vm1216, %v1240, 0
          %1247 = vmatprep.subr.mxu0 0.0
          %1248 = vmatpush1.msra.mxu0 %v1120
          %1249 = vmatprep.subr.mxu0 0.0
          %1250 = vmatpush1.msra.mxu0 %v1125
          %1251 = vmatprep.subr.mxu0 0.0
          %1252 = vmatpush1.msra.mxu0 0.0
          %1253 = vmatprep.subr.mxu0 0.0
          %1254 = vmatpush1.msra.mxu0 0.0
          %1255 = vmatprep.subr.mxu0 0.0
          %1256 = vmatpush1.msra.mxu0 0.0
          %1257 = vmatprep.subr.mxu0 0.0
          %1258 = vmatpush1.msra.mxu0 0.0
          %1259 = vmatprep.subr.mxu0 0.0
          %1260 = vmatpush1.msra.mxu0 0.0
          %1261 = vmatprep.subr.mxu0 0.0
          %1262 = vmatpush1.msra.mxu0 0.0
          %1263 = vmatprep.subr.mxu0 0.0
          %1264 = vmatpush1.msra.mxu0 0.0
          %1265 = vmatprep.subr.mxu0 0.0
          %1266 = vmatpush1.msra.mxu0 0.0
          %1267 = vmatprep.subr.mxu0 0.0
          %1268 = vmatpush1.msra.mxu0 0.0
          %1269 = vmatprep.subr.mxu0 0.0
          %1270 = vmatpush1.msra.mxu0 0.0
          %1271 = vmatprep.subr.mxu0 0.0
          %1272 = vmatpush1.msra.mxu0 0.0
          %1273 = vmatprep.subr.mxu0 0.0
          %1274 = vmatpush1.msra.mxu0 0.0
          %1275 = vmatprep.subr.mxu0 0.0
          %1276 = vmatpush1.msra.mxu0 0.0
          %1277 = vmatprep.subr.mxu0 0.0
          %1278 = vmatpush1.msra.mxu0 0.0
          %1279 = vmatprep.subr.mxu0 0.0
          %1280 = vmatpush1.msra.mxu0 0.0
          %1281 = vmatprep.subr.mxu0 0.0
          %1282 = vmatpush1.msra.mxu0 0.0
          %1283 = vmatprep.subr.mxu0 0.0
          %1284 = vmatpush1.msra.mxu0 0.0
          %1285 = vmatprep.subr.mxu0 0.0
          %1286 = vmatpush1.msra.mxu0 0.0
          %1287 = vmatprep.subr.mxu0 0.0
          %1288 = vmatpush1.msra.mxu0 0.0
          %1289 = vmatprep.subr.mxu0 0.0
          %1290 = vmatpush1.msra.mxu0 0.0
          %1291 = vmatprep.subr.mxu0 0.0
          %1292 = vmatpush1.msra.mxu0 0.0
          %1293 = vmatprep.subr.mxu0 0.0
          %1294 = vmatpush1.msra.mxu0 0.0
          %1295 = vmatprep.subr.mxu0 0.0
          %1296 = vmatpush1.msra.mxu0 0.0
          %1297 = vmatprep.subr.mxu0 0.0
          %1298 = vmatpush1.msra.mxu0 0.0
          %1299 = vmatprep.subr.mxu0 0.0
          %1300 = vmatpush1.msra.mxu0 0.0
          %1301 = vmatprep.subr.mxu0 0.0
          %1302 = vmatpush1.msra.mxu0 0.0
          %1303 = vmatprep.subr.mxu0 0.0
          %1304 = vmatpush1.msra.mxu0 0.0
          %1305 = vmatprep.subr.mxu0 0.0
          %1306 = vmatpush1.msra.mxu0 0.0
          %1307 = vmatprep.subr.mxu0 0.0
          %1308 = vmatpush1.msra.mxu0 0.0
          %1309 = vmatprep.subr.mxu0 0.0
          %1310 = vmatpush1.msra.mxu0 0.0
          %1311 = vmatprep.mubr.f32.mxu0 0.0
          %1312 = vmatmul.mubr.f32.gmra.mrb[0].mxu0 %v1242
          %v1313 = vpop.f32.mrb[0].mxu0
          %v1314 = vadd.f32 0.0, %v1313
          %v1315 = vpop.f32.mrb[0].mxu0
          %1316 = vmatprep.mubr.f32.mxu0 0.0
          %1317 = vmatmul.mubr.f32.gmra.mrb[0].mxu0 %v1245
          %v1318 = vpop.f32.mrb[0].mxu0
          %v1319 = vadd.f32 0.0, %v1318
          %v1320 = vpop.f32.mrb[0].mxu0
          %1321 = vdwg.mxu0
          %1322 = vst.msk [vmem:[#allocation2] sm:$0xff] %vm1128, %v1314
          %1323 = vst.msk [vmem:[#allocation2 + $0x8] sm:$0xff] %vm1128, %v1319
          %1324 = vrot.lane.b32.xlu0 %v960, 124
          %v1325 = vpop.permute.xlu0 %1324
          %1326 = vrot.lane.b32.xlu0 %v961, 124
          %v1327 = vpop.permute.xlu0 %1326
          %1328 = vrot.lane.b32.xlu0 %v1037, 124
          %v1329 = vpop.permute.xlu0 %1328
          %1330 = vrot.lane.b32.xlu0 %v1042, 124
          %v1331 = vpop.permute.xlu0 %1330
          %v1332 = vsel %vm1128, %v1325, 0
          %v1334 = vsel %vm1128, %v1327, 0
          %v1336 = vsel %vm1128, %v1329, 0
          %v1338 = vsel %vm1128, %v1331, 0
          %1340 = vmatprep.subr.mxu0 0.0
          %1341 = vmatpush1.xpose.msra.mxu0 %v1336
          %1342 = vmatprep.subr.mxu0 0.0
          %1343 = vmatpush1.xpose.msra.mxu0 %v1338
          %1344 = vmatprep.subr.mxu0 0.0
          %1345 = vmatpush1.xpose.msra.mxu0 0.0
          %1346 = vmatprep.subr.mxu0 0.0
          %1347 = vmatpush1.xpose.msra.mxu0 0.0
          %1348 = vmatprep.subr.mxu0 0.0
          %1349 = vmatpush1.xpose.msra.mxu0 0.0
          %1350 = vmatprep.subr.mxu0 0.0
          %1351 = vmatpush1.xpose.msra.mxu0 0.0
          %1352 = vmatprep.subr.mxu0 0.0
          %1353 = vmatpush1.xpose.msra.mxu0 0.0
          %1354 = vmatprep.subr.mxu0 0.0
          %1355 = vmatpush1.xpose.msra.mxu0 0.0
          %1356 = vmatprep.subr.mxu0 0.0
          %1357 = vmatpush1.xpose.msra.mxu0 0.0
          %1358 = vmatprep.subr.mxu0 0.0
          %1359 = vmatpush1.xpose.msra.mxu0 0.0
          %1360 = vmatprep.subr.mxu0 0.0
          %1361 = vmatpush1.xpose.msra.mxu0 0.0
          %1362 = vmatprep.subr.mxu0 0.0
          %1363 = vmatpush1.xpose.msra.mxu0 0.0
          %1364 = vmatprep.subr.mxu0 0.0
          %1365 = vmatpush1.xpose.msra.mxu0 0.0
          %1366 = vmatprep.subr.mxu0 0.0
          %1367 = vmatpush1.xpose.msra.mxu0 0.0
          %1368 = vmatprep.subr.mxu0 0.0
          %1369 = vmatpush1.xpose.msra.mxu0 0.0
          %1370 = vmatprep.subr.mxu0 0.0
          %1371 = vmatpush1.xpose.msra.mxu0 0.0
          %1372 = vmatprep.subr.mxu0 0.0
          %1373 = vmatpush1.xpose.msra.mxu0 0.0
          %1374 = vmatprep.subr.mxu0 0.0
          %1375 = vmatpush1.xpose.msra.mxu0 0.0
          %1376 = vmatprep.subr.mxu0 0.0
          %1377 = vmatpush1.xpose.msra.mxu0 0.0
          %1378 = vmatprep.subr.mxu0 0.0
          %1379 = vmatpush1.xpose.msra.mxu0 0.0
          %1380 = vmatprep.subr.mxu0 0.0
          %1381 = vmatpush1.xpose.msra.mxu0 0.0
          %1382 = vmatprep.subr.mxu0 0.0
          %1383 = vmatpush1.xpose.msra.mxu0 0.0
          %1384 = vmatprep.subr.mxu0 0.0
          %1385 = vmatpush1.xpose.msra.mxu0 0.0
          %1386 = vmatprep.subr.mxu0 0.0
          %1387 = vmatpush1.xpose.msra.mxu0 0.0
          %1388 = vmatprep.subr.mxu0 0.0
          %1389 = vmatpush1.xpose.msra.mxu0 0.0
          %1390 = vmatprep.subr.mxu0 0.0
          %1391 = vmatpush1.xpose.msra.mxu0 0.0
          %1392 = vmatprep.subr.mxu0 0.0
          %1393 = vmatpush1.xpose.msra.mxu0 0.0
          %1394 = vmatprep.subr.mxu0 0.0
          %1395 = vmatpush1.xpose.msra.mxu0 0.0
          %1396 = vmatprep.subr.mxu0 0.0
          %1397 = vmatpush1.xpose.msra.mxu0 0.0
          %1398 = vmatprep.subr.mxu0 0.0
          %1399 = vmatpush1.xpose.msra.mxu0 0.0
          %1400 = vmatprep.subr.mxu0 0.0
          %1401 = vmatpush1.xpose.msra.mxu0 0.0
          %1402 = vmatprep.subr.mxu0 0.0
          %1403 = vmatpush1.xpose.msra.mxu0 0.0
          %1404 = vmatprep.mubr.f32.mxu0 0.0
          %1405 = vmatmul.mubr.f32.gmra.mrb[0].mxu0 %v1332
          %v1406 = vpop.f32.mrb[0].mxu0
          %v1407 = vadd.f32 0.0, %v1406
          %v1408 = vpop.f32.mrb[0].mxu0
          %1409 = vmatprep.mubr.f32.mxu0 0.0
          %1410 = vmatmul.mubr.f32.gmra.mrb[0].mxu0 %v1334
          %v1411 = vpop.f32.mrb[0].mxu0
          %v1412 = vadd.f32 0.0, %v1411
          %v1413 = vpop.f32.mrb[0].mxu0
          %1414 = vdwg.mxu0
          %v1415 = vsel %vm1216, %v1407, -inf
          %1416 = vmax.xlane.f32.xlu0 %v1415
          %v1417 = vpop.xlane.xlu0 %1416
          %v1418 = vsel %vm1216, %v1412, -inf
          %1419 = vmax.xlane.f32.xlu0 %v1418
          %v1420 = vpop.xlane.xlu0 %1419
          %v1421 = vsub.f32 %v1407, %v1417
          %v1422 = vsub.f32 %v1412, %v1420
          %v1423 = vmul.f32 %v1421, 1.442695
          %v1424 = vpow.pop %v1423
          %v1425 = vmul.f32 %v1422, 1.442695
          %v1426 = vpow.pop %v1425
          %v1427 = vsel %vm1216, %v1424, 0.0
          %1428 = vadd.xlane.f32.xlu0 %v1427
          %v1429 = vpop.xlane.xlu0 %1428
          %v1430 = vsel %vm1216, %v1426, 0.0
          %1431 = vadd.xlane.f32.xlu0 %v1430
          %v1432 = vpop.xlane.xlu0 %1431
          %v1433 = vrcp.pop %v1429
          %v1434 = vmul.f32 1.0, %v1433
          %v1435 = vrcp.pop %v1432
          %v1436 = vmul.f32 1.0, %v1435
          %v1437 = vmul.f32 %v1424, %v1434
          %v1438 = vmul.f32 %v1426, %v1436
          %1441 = vrot.lane.b32.xlu0 %v1120, 124
          %v1442 = vpop.permute.xlu0 %1441
          %1443 = vrot.lane.b32.xlu0 %v1125, 124
          %v1444 = vpop.permute.xlu0 %1443
          %v1448 = vsel %vm1216, %v1437, 0
          %v1451 = vsel %vm1216, %v1438, 0
          %1453 = vmatprep.subr.mxu0 0.0
          %1454 = vmatpush1.msra.mxu0 %v1442
          %1455 = vmatprep.subr.mxu0 0.0
          %1456 = vmatpush1.msra.mxu0 %v1444
          %1457 = vmatprep.subr.mxu0 0.0
          %1458 = vmatpush1.msra.mxu0 0.0
          %1459 = vmatprep.subr.mxu0 0.0
          %1460 = vmatpush1.msra.mxu0 0.0
          %1461 = vmatprep.subr.mxu0 0.0
          %1462 = vmatpush1.msra.mxu0 0.0
          %1463 = vmatprep.subr.mxu0 0.0
          %1464 = vmatpush1.msra.mxu0 0.0
          %1465 = vmatprep.subr.mxu0 0.0
          %1466 = vmatpush1.msra.mxu0 0.0
          %1467 = vmatprep.subr.mxu0 0.0
          %1468 = vmatpush1.msra.mxu0 0.0
          %1469 = vmatprep.subr.mxu0 0.0
          %1470 = vmatpush1.msra.mxu0 0.0
          %1471 = vmatprep.subr.mxu0 0.0
          %1472 = vmatpush1.msra.mxu0 0.0
          %1473 = vmatprep.subr.mxu0 0.0
          %1474 = vmatpush1.msra.mxu0 0.0
          %1475 = vmatprep.subr.mxu0 0.0
          %1476 = vmatpush1.msra.mxu0 0.0
          %1477 = vmatprep.subr.mxu0 0.0
          %1478 = vmatpush1.msra.mxu0 0.0
          %1479 = vmatprep.subr.mxu0 0.0
          %1480 = vmatpush1.msra.mxu0 0.0
          %1481 = vmatprep.subr.mxu0 0.0
          %1482 = vmatpush1.msra.mxu0 0.0
          %1483 = vmatprep.subr.mxu0 0.0
          %1484 = vmatpush1.msra.mxu0 0.0
          %1485 = vmatprep.subr.mxu0 0.0
          %1486 = vmatpush1.msra.mxu0 0.0
          %1487 = vmatprep.subr.mxu0 0.0
          %1488 = vmatpush1.msra.mxu0 0.0
          %1489 = vmatprep.subr.mxu0 0.0
          %1490 = vmatpush1.msra.mxu0 0.0
          %1491 = vmatprep.subr.mxu0 0.0
          %1492 = vmatpush1.msra.mxu0 0.0
          %1493 = vmatprep.subr.mxu0 0.0
          %1494 = vmatpush1.msra.mxu0 0.0
          %1495 = vmatprep.subr.mxu0 0.0
          %1496 = vmatpush1.msra.mxu0 0.0
          %1497 = vmatprep.subr.mxu0 0.0
          %1498 = vmatpush1.msra.mxu0 0.0
          %1499 = vmatprep.subr.mxu0 0.0
          %1500 = vmatpush1.msra.mxu0 0.0
          %1501 = vmatprep.subr.mxu0 0.0
          %1502 = vmatpush1.msra.mxu0 0.0
          %1503 = vmatprep.subr.mxu0 0.0
          %1504 = vmatpush1.msra.mxu0 0.0
          %1505 = vmatprep.subr.mxu0 0.0
          %1506 = vmatpush1.msra.mxu0 0.0
          %1507 = vmatprep.subr.mxu0 0.0
          %1508 = vmatpush1.msra.mxu0 0.0
          %1509 = vmatprep.subr.mxu0 0.0
          %1510 = vmatpush1.msra.mxu0 0.0
          %1511 = vmatprep.subr.mxu0 0.0
          %1512 = vmatpush1.msra.mxu0 0.0
          %1513 = vmatprep.subr.mxu0 0.0
          %1514 = vmatpush1.msra.mxu0 0.0
          %1515 = vmatprep.subr.mxu0 0.0
          %1516 = vmatpush1.msra.mxu0 0.0
          %1517 = vmatprep.mubr.f32.mxu0 0.0
          %1518 = vmatmul.mubr.f32.gmra.mrb[0].mxu0 %v1448
          %v1519 = vpop.f32.mrb[0].mxu0
          %v1520 = vadd.f32 0.0, %v1519
          %v1521 = vpop.f32.mrb[0].mxu0
          %1522 = vmatprep.mubr.f32.mxu0 0.0
          %1523 = vmatmul.mubr.f32.gmra.mrb[0].mxu0 %v1451
          %v1524 = vpop.f32.mrb[0].mxu0
          %v1525 = vadd.f32 0.0, %v1524
          %v1526 = vpop.f32.mrb[0].mxu0
          %1527 = vdwg.mxu0
          %1530 = vrot.lane.b32.xlu0 %v1520, 4
          %v1531 = vpop.permute.xlu0 %1530
          %1532 = vrot.lane.b32.xlu0 %v1525, 4
          %v1533 = vpop.permute.xlu0 %1532
          %vm1536 = vcmask 64544
          %1537 = vst.msk [vmem:[#allocation2] sm:$0xff] %vm1536, %v1531
          %1538 = vst.msk [vmem:[#allocation2 + $0x8] sm:$0xff] %vm1536, %v1533
          %v1539 = vld [vmem:[#allocation2] sm:$0xff]
          %v1540 = vld [vmem:[#allocation2 + $0x8] sm:$0xff]
          %1541 = vst.msk [vmem:[#allocation3] sm:$0xff] %vm878, %v1539
          %1542 = vst.msk [vmem:[#allocation3 + $0x8] sm:$0xff] %vm878, %v1540
          %s1543 = scalar_lea.vmem %s4, 32
          %v1544 = vld [vmem:[%s1543] sm:$0xff]
          %v1545 = vld [vmem:[%s1543 + $0x8] sm:$0xff]
          %v1546 = vld [vmem:[%s1543 + $0x10] sm:$0xff]
          %v1547 = vld [vmem:[%s1543 + $0x18] sm:$0xff]
          %s1548 = scalar_lea.vmem [#allocation6], 1
          %v1549 = vld [vmem:[%s1548] sm:$0x1]
          %v1551 = vlaneseq
          %v1552 = vshrl.u32 %v1551, 7
          %v1553 = vsub.s32 0, %v1552
          %v1554 = vrot.slane %v1549, %v1553
          %1556 = vmatprep.subr.mxu0 0.0
          %1557 = vmatpush1.msra.mxu0 %v1544
          %1558 = vmatprep.subr.mxu0 0.0
          %1559 = vmatpush1.msra.mxu0 %v1545
          %1560 = vmatprep.subr.mxu0 0.0
          %1561 = vmatpush1.msra.mxu0 %v1546
          %1562 = vmatprep.subr.mxu0 0.0
          %1563 = vmatpush1.msra.mxu0 %v1547
          %1564 = vmatprep.subr.mxu0 0.0
          %1565 = vmatpush1.msra.mxu0 0.0
          %1566 = vmatprep.subr.mxu0 0.0
          %1567 = vmatpush1.msra.mxu0 0.0
          %1568 = vmatprep.subr.mxu0 0.0
          %1569 = vmatpush1.msra.mxu0 0.0
          %1570 = vmatprep.subr.mxu0 0.0
          %1571 = vmatpush1.msra.mxu0 0.0
          %1572 = vmatprep.subr.mxu0 0.0
          %1573 = vmatpush1.msra.mxu0 0.0
          %1574 = vmatprep.subr.mxu0 0.0
          %1575 = vmatpush1.msra.mxu0 0.0
          %1576 = vmatprep.subr.mxu0 0.0
          %1577 = vmatpush1.msra.mxu0 0.0
          %1578 = vmatprep.subr.mxu0 0.0
          %1579 = vmatpush1.msra.mxu0 0.0
          %1580 = vmatprep.subr.mxu0 0.0
          %1581 = vmatpush1.msra.mxu0 0.0
          %1582 = vmatprep.subr.mxu0 0.0
          %1583 = vmatpush1.msra.mxu0 0.0
          %1584 = vmatprep.subr.mxu0 0.0
          %1585 = vmatpush1.msra.mxu0 0.0
          %1586 = vmatprep.subr.mxu0 0.0
          %1587 = vmatpush1.msra.mxu0 0.0
          %1588 = vmatprep.subr.mxu0 0.0
          %1589 = vmatpush1.msra.mxu0 0.0
          %1590 = vmatprep.subr.mxu0 0.0
          %1591 = vmatpush1.msra.mxu0 0.0
          %1592 = vmatprep.subr.mxu0 0.0
          %1593 = vmatpush1.msra.mxu0 0.0
          %1594 = vmatprep.subr.mxu0 0.0
          %1595 = vmatpush1.msra.mxu0 0.0
          %1596 = vmatprep.subr.mxu0 0.0
          %1597 = vmatpush1.msra.mxu0 0.0
          %1598 = vmatprep.subr.mxu0 0.0
          %1599 = vmatpush1.msra.mxu0 0.0
          %1600 = vmatprep.subr.mxu0 0.0
          %1601 = vmatpush1.msra.mxu0 0.0
          %1602 = vmatprep.subr.mxu0 0.0
          %1603 = vmatpush1.msra.mxu0 0.0
          %1604 = vmatprep.subr.mxu0 0.0
          %1605 = vmatpush1.msra.mxu0 0.0
          %1606 = vmatprep.subr.mxu0 0.0
          %1607 = vmatpush1.msra.mxu0 0.0
          %1608 = vmatprep.subr.mxu0 0.0
          %1609 = vmatpush1.msra.mxu0 0.0
          %1610 = vmatprep.subr.mxu0 0.0
          %1611 = vmatpush1.msra.mxu0 0.0
          %1612 = vmatprep.subr.mxu0 0.0
          %1613 = vmatpush1.msra.mxu0 0.0
          %1614 = vmatprep.subr.mxu0 0.0
          %1615 = vmatpush1.msra.mxu0 0.0
          %1616 = vmatprep.subr.mxu0 0.0
          %1617 = vmatpush1.msra.mxu0 0.0
          %1618 = vmatprep.subr.mxu0 0.0
          %1619 = vmatpush1.msra.mxu0 0.0
          %1620 = vmatprep.mubr.f32.mxu0 0.0
          %1621 = vmatmul.mubr.f32.gmra.mrb[0].mxu0 %v790
          %v1622 = vpop.f32.mrb[0].mxu0
          %v1623 = vadd.f32 %v1554, %v1622
          %v1624 = vpop.f32.mrb[0].mxu0
          %1625 = vmatprep.mubr.f32.mxu0 0.0
          %1626 = vmatmul.mubr.f32.gmra.mrb[0].mxu0 %v793
          %v1627 = vpop.f32.mrb[0].mxu0
          %v1628 = vadd.f32 %v1554, %v1627
          %v1629 = vpop.f32.mrb[0].mxu0
          %1630 = vdwg.mxu0
          %s1631 = scalar_lea.vmem %s6, 8
          %v1632 = vld [vmem:[%s1631] sm:$0xff]
          %s1633 = scalar_lea.vmem %s7, 1
          %v1634 = vld [vmem:[%s1633] sm:$0x1]
          %v1636 = vlaneseq
          %v1637 = vshrl.u32 %v1636, 7
          %v1638 = vsub.s32 0, %v1637
          %v1639 = vrot.slane %v1634, %v1638
          %v1642 = vsel %vm878, %v1623, 0
          %v1645 = vsel %vm878, %v1628, 0
          %1647 = vmatprep.subr.mxu0 0.0
          %1648 = vmatpush1.msra.mxu0 %v1632
          %1649 = vmatprep.subr.mxu0 0.0
          %1650 = vmatpush1.msra.mxu0 0.0
          %1651 = vmatprep.subr.mxu0 0.0
          %1652 = vmatpush1.msra.mxu0 0.0
          %1653 = vmatprep.subr.mxu0 0.0
          %1654 = vmatpush1.msra.mxu0 0.0
          %1655 = vmatprep.subr.mxu0 0.0
          %1656 = vmatpush1.msra.mxu0 0.0
          %1657 = vmatprep.subr.mxu0 0.0
          %1658 = vmatpush1.msra.mxu0 0.0
          %1659 = vmatprep.subr.mxu0 0.0
          %1660 = vmatpush1.msra.mxu0 0.0
          %1661 = vmatprep.subr.mxu0 0.0
          %1662 = vmatpush1.msra.mxu0 0.0
          %1663 = vmatprep.subr.mxu0 0.0
          %1664 = vmatpush1.msra.mxu0 0.0
          %1665 = vmatprep.subr.mxu0 0.0
          %1666 = vmatpush1.msra.mxu0 0.0
          %1667 = vmatprep.subr.mxu0 0.0
          %1668 = vmatpush1.msra.mxu0 0.0
          %1669 = vmatprep.subr.mxu0 0.0
          %1670 = vmatpush1.msra.mxu0 0.0
          %1671 = vmatprep.subr.mxu0 0.0
          %1672 = vmatpush1.msra.mxu0 0.0
          %1673 = vmatprep.subr.mxu0 0.0
          %1674 = vmatpush1.msra.mxu0 0.0
          %1675 = vmatprep.subr.mxu0 0.0
          %1676 = vmatpush1.msra.mxu0 0.0
          %1677 = vmatprep.subr.mxu0 0.0
          %1678 = vmatpush1.msra.mxu0 0.0
          %1679 = vmatprep.subr.mxu0 0.0
          %1680 = vmatpush1.msra.mxu0 0.0
          %1681 = vmatprep.subr.mxu0 0.0
          %1682 = vmatpush1.msra.mxu0 0.0
          %1683 = vmatprep.subr.mxu0 0.0
          %1684 = vmatpush1.msra.mxu0 0.0
          %1685 = vmatprep.subr.mxu0 0.0
          %1686 = vmatpush1.msra.mxu0 0.0
          %1687 = vmatprep.subr.mxu0 0.0
          %1688 = vmatpush1.msra.mxu0 0.0
          %1689 = vmatprep.subr.mxu0 0.0
          %1690 = vmatpush1.msra.mxu0 0.0
          %1691 = vmatprep.subr.mxu0 0.0
          %1692 = vmatpush1.msra.mxu0 0.0
          %1693 = vmatprep.subr.mxu0 0.0
          %1694 = vmatpush1.msra.mxu0 0.0
          %1695 = vmatprep.subr.mxu0 0.0
          %1696 = vmatpush1.msra.mxu0 0.0
          %1697 = vmatprep.subr.mxu0 0.0
          %1698 = vmatpush1.msra.mxu0 0.0
          %1699 = vmatprep.subr.mxu0 0.0
          %1700 = vmatpush1.msra.mxu0 0.0
          %1701 = vmatprep.subr.mxu0 0.0
          %1702 = vmatpush1.msra.mxu0 0.0
          %1703 = vmatprep.subr.mxu0 0.0
          %1704 = vmatpush1.msra.mxu0 0.0
          %1705 = vmatprep.subr.mxu0 0.0
          %1706 = vmatpush1.msra.mxu0 0.0
          %1707 = vmatprep.subr.mxu0 0.0
          %1708 = vmatpush1.msra.mxu0 0.0
          %1709 = vmatprep.subr.mxu0 0.0
          %1710 = vmatpush1.msra.mxu0 0.0
          %1711 = vmatprep.mubr.f32.mxu0 0.0
          %1712 = vmatmul.mubr.f32.gmra.mrb[0].mxu0 %v1642
          %v1713 = vpop.f32.mrb[0].mxu0
          %v1714 = vadd.f32 %v1639, %v1713
          %v1715 = vpop.f32.mrb[0].mxu0
          %1716 = vmatprep.mubr.f32.mxu0 0.0
          %1717 = vmatmul.mubr.f32.gmra.mrb[0].mxu0 %v1645
          %v1718 = vpop.f32.mrb[0].mxu0
          %v1719 = vadd.f32 %v1639, %v1718
          %v1720 = vpop.f32.mrb[0].mxu0
          %1721 = vdwg.mxu0
          %v1722 = vmul.f32 %v1714, 0.35355338
          %v1723 = vmul.f32 %v1719, 0.35355338
          %s1724 = scalar_lea.vmem %s8, 8
          %v1725 = vld [vmem:[%s1724] sm:$0xff]
          %s1726 = scalar_lea.vmem %s9, 1
          %v1727 = vld [vmem:[%s1726] sm:$0x1]
          %v1729 = vlaneseq
          %v1730 = vshrl.u32 %v1729, 7
          %v1731 = vsub.s32 0, %v1730
          %v1732 = vrot.slane %v1727, %v1731
          %1734 = vmatprep.subr.mxu0 0.0
          %1735 = vmatpush1.msra.mxu0 %v1725
          %1736 = vmatprep.subr.mxu0 0.0
          %1737 = vmatpush1.msra.mxu0 0.0
          %1738 = vmatprep.subr.mxu0 0.0
          %1739 = vmatpush1.msra.mxu0 0.0
          %1740 = vmatprep.subr.mxu0 0.0
          %1741 = vmatpush1.msra.mxu0 0.0
          %1742 = vmatprep.subr.mxu0 0.0
          %1743 = vmatpush1.msra.mxu0 0.0
          %1744 = vmatprep.subr.mxu0 0.0
          %1745 = vmatpush1.msra.mxu0 0.0
          %1746 = vmatprep.subr.mxu0 0.0
          %1747 = vmatpush1.msra.mxu0 0.0
          %1748 = vmatprep.subr.mxu0 0.0
          %1749 = vmatpush1.msra.mxu0 0.0
          %1750 = vmatprep.subr.mxu0 0.0
          %1751 = vmatpush1.msra.mxu0 0.0
          %1752 = vmatprep.subr.mxu0 0.0
          %1753 = vmatpush1.msra.mxu0 0.0
          %1754 = vmatprep.subr.mxu0 0.0
          %1755 = vmatpush1.msra.mxu0 0.0
          %1756 = vmatprep.subr.mxu0 0.0
          %1757 = vmatpush1.msra.mxu0 0.0
          %1758 = vmatprep.subr.mxu0 0.0
          %1759 = vmatpush1.msra.mxu0 0.0
          %1760 = vmatprep.subr.mxu0 0.0
          %1761 = vmatpush1.msra.mxu0 0.0
          %1762 = vmatprep.subr.mxu0 0.0
          %1763 = vmatpush1.msra.mxu0 0.0
          %1764 = vmatprep.subr.mxu0 0.0
          %1765 = vmatpush1.msra.mxu0 0.0
          %1766 = vmatprep.subr.mxu0 0.0
          %1767 = vmatpush1.msra.mxu0 0.0
          %1768 = vmatprep.subr.mxu0 0.0
          %1769 = vmatpush1.msra.mxu0 0.0
          %1770 = vmatprep.subr.mxu0 0.0
          %1771 = vmatpush1.msra.mxu0 0.0
          %1772 = vmatprep.subr.mxu0 0.0
          %1773 = vmatpush1.msra.mxu0 0.0
          %1774 = vmatprep.subr.mxu0 0.0
          %1775 = vmatpush1.msra.mxu0 0.0
          %1776 = vmatprep.subr.mxu0 0.0
          %1777 = vmatpush1.msra.mxu0 0.0
          %1778 = vmatprep.subr.mxu0 0.0
          %1779 = vmatpush1.msra.mxu0 0.0
          %1780 = vmatprep.subr.mxu0 0.0
          %1781 = vmatpush1.msra.mxu0 0.0
          %1782 = vmatprep.subr.mxu0 0.0
          %1783 = vmatpush1.msra.mxu0 0.0
          %1784 = vmatprep.subr.mxu0 0.0
          %1785 = vmatpush1.msra.mxu0 0.0
          %1786 = vmatprep.subr.mxu0 0.0
          %1787 = vmatpush1.msra.mxu0 0.0
          %1788 = vmatprep.subr.mxu0 0.0
          %1789 = vmatpush1.msra.mxu0 0.0
          %1790 = vmatprep.subr.mxu0 0.0
          %1791 = vmatpush1.msra.mxu0 0.0
          %1792 = vmatprep.subr.mxu0 0.0
          %1793 = vmatpush1.msra.mxu0 0.0
          %1794 = vmatprep.subr.mxu0 0.0
          %1795 = vmatpush1.msra.mxu0 0.0
          %1796 = vmatprep.subr.mxu0 0.0
          %1797 = vmatpush1.msra.mxu0 0.0
          %1798 = vmatprep.mubr.f32.mxu0 0.0
          %1799 = vmatmul.mubr.f32.gmra.mrb[0].mxu0 %v1642
          %v1800 = vpop.f32.mrb[0].mxu0
          %v1801 = vadd.f32 %v1732, %v1800
          %v1802 = vpop.f32.mrb[0].mxu0
          %1803 = vmatprep.mubr.f32.mxu0 0.0
          %1804 = vmatmul.mubr.f32.gmra.mrb[0].mxu0 %v1645
          %v1805 = vpop.f32.mrb[0].mxu0
          %v1806 = vadd.f32 %v1732, %v1805
          %v1807 = vpop.f32.mrb[0].mxu0
          %1808 = vdwg.mxu0
          %s1809 = scalar_lea.vmem %s10, 8
          %v1810 = vld [vmem:[%s1809] sm:$0xff]
          %s1811 = scalar_lea.vmem %s11, 1
          %v1812 = vld [vmem:[%s1811] sm:$0x1]
          %v1814 = vlaneseq
          %v1815 = vshrl.u32 %v1814, 7
          %v1816 = vsub.s32 0, %v1815
          %v1817 = vrot.slane %v1812, %v1816
          %1819 = vmatprep.subr.mxu0 0.0
          %1820 = vmatpush1.msra.mxu0 %v1810
          %1821 = vmatprep.subr.mxu0 0.0
          %1822 = vmatpush1.msra.mxu0 0.0
          %1823 = vmatprep.subr.mxu0 0.0
          %1824 = vmatpush1.msra.mxu0 0.0
          %1825 = vmatprep.subr.mxu0 0.0
          %1826 = vmatpush1.msra.mxu0 0.0
          %1827 = vmatprep.subr.mxu0 0.0
          %1828 = vmatpush1.msra.mxu0 0.0
          %1829 = vmatprep.subr.mxu0 0.0
          %1830 = vmatpush1.msra.mxu0 0.0
          %1831 = vmatprep.subr.mxu0 0.0
          %1832 = vmatpush1.msra.mxu0 0.0
          %1833 = vmatprep.subr.mxu0 0.0
          %1834 = vmatpush1.msra.mxu0 0.0
          %1835 = vmatprep.subr.mxu0 0.0
          %1836 = vmatpush1.msra.mxu0 0.0
          %1837 = vmatprep.subr.mxu0 0.0
          %1838 = vmatpush1.msra.mxu0 0.0
          %1839 = vmatprep.subr.mxu0 0.0
          %1840 = vmatpush1.msra.mxu0 0.0
          %1841 = vmatprep.subr.mxu0 0.0
          %1842 = vmatpush1.msra.mxu0 0.0
          %1843 = vmatprep.subr.mxu0 0.0
          %1844 = vmatpush1.msra.mxu0 0.0
          %1845 = vmatprep.subr.mxu0 0.0
          %1846 = vmatpush1.msra.mxu0 0.0
          %1847 = vmatprep.subr.mxu0 0.0
          %1848 = vmatpush1.msra.mxu0 0.0
          %1849 = vmatprep.subr.mxu0 0.0
          %1850 = vmatpush1.msra.mxu0 0.0
          %1851 = vmatprep.subr.mxu0 0.0
          %1852 = vmatpush1.msra.mxu0 0.0
          %1853 = vmatprep.subr.mxu0 0.0
          %1854 = vmatpush1.msra.mxu0 0.0
          %1855 = vmatprep.subr.mxu0 0.0
          %1856 = vmatpush1.msra.mxu0 0.0
          %1857 = vmatprep.subr.mxu0 0.0
          %1858 = vmatpush1.msra.mxu0 0.0
          %1859 = vmatprep.subr.mxu0 0.0
          %1860 = vmatpush1.msra.mxu0 0.0
          %1861 = vmatprep.subr.mxu0 0.0
          %1862 = vmatpush1.msra.mxu0 0.0
          %1863 = vmatprep.subr.mxu0 0.0
          %1864 = vmatpush1.msra.mxu0 0.0
          %1865 = vmatprep.subr.mxu0 0.0
          %1866 = vmatpush1.msra.mxu0 0.0
          %1867 = vmatprep.subr.mxu0 0.0
          %1868 = vmatpush1.msra.mxu0 0.0
          %1869 = vmatprep.subr.mxu0 0.0
          %1870 = vmatpush1.msra.mxu0 0.0
          %1871 = vmatprep.subr.mxu0 0.0
          %1872 = vmatpush1.msra.mxu0 0.0
          %1873 = vmatprep.subr.mxu0 0.0
          %1874 = vmatpush1.msra.mxu0 0.0
          %1875 = vmatprep.subr.mxu0 0.0
          %1876 = vmatpush1.msra.mxu0 0.0
          %1877 = vmatprep.subr.mxu0 0.0
          %1878 = vmatpush1.msra.mxu0 0.0
          %1879 = vmatprep.subr.mxu0 0.0
          %1880 = vmatpush1.msra.mxu0 0.0
          %1881 = vmatprep.subr.mxu0 0.0
          %1882 = vmatpush1.msra.mxu0 0.0
          %1883 = vmatprep.mubr.f32.mxu0 0.0
          %1884 = vmatmul.mubr.f32.gmra.mrb[0].mxu0 %v1642
          %v1885 = vpop.f32.mrb[0].mxu0
          %v1886 = vadd.f32 %v1817, %v1885
          %v1887 = vpop.f32.mrb[0].mxu0
          %1888 = vmatprep.mubr.f32.mxu0 0.0
          %1889 = vmatmul.mubr.f32.gmra.mrb[0].mxu0 %v1645
          %v1890 = vpop.f32.mrb[0].mxu0
          %v1891 = vadd.f32 %v1817, %v1890
          %v1892 = vpop.f32.mrb[0].mxu0
          %1893 = vdwg.mxu0
          %v1895 = vsel %vm1128, %v1722, 0
          %v1898 = vsel %vm1128, %v1723, 0
          %v1901 = vsel %vm1128, %v1801, 0
          %v1904 = vsel %vm1128, %v1806, 0
          %1906 = vmatprep.subr.mxu0 0.0
          %1907 = vmatpush1.xpose.msra.mxu0 %v1901
          %1908 = vmatprep.subr.mxu0 0.0
          %1909 = vmatpush1.xpose.msra.mxu0 %v1904
          %1910 = vmatprep.subr.mxu0 0.0
          %1911 = vmatpush1.xpose.msra.mxu0 0.0
          %1912 = vmatprep.subr.mxu0 0.0
          %1913 = vmatpush1.xpose.msra.mxu0 0.0
          %1914 = vmatprep.subr.mxu0 0.0
          %1915 = vmatpush1.xpose.msra.mxu0 0.0
          %1916 = vmatprep.subr.mxu0 0.0
          %1917 = vmatpush1.xpose.msra.mxu0 0.0
          %1918 = vmatprep.subr.mxu0 0.0
          %1919 = vmatpush1.xpose.msra.mxu0 0.0
          %1920 = vmatprep.subr.mxu0 0.0
          %1921 = vmatpush1.xpose.msra.mxu0 0.0
          %1922 = vmatprep.subr.mxu0 0.0
          %1923 = vmatpush1.xpose.msra.mxu0 0.0
          %1924 = vmatprep.subr.mxu0 0.0
          %1925 = vmatpush1.xpose.msra.mxu0 0.0
          %1926 = vmatprep.subr.mxu0 0.0
          %1927 = vmatpush1.xpose.msra.mxu0 0.0
          %1928 = vmatprep.subr.mxu0 0.0
          %1929 = vmatpush1.xpose.msra.mxu0 0.0
          %1930 = vmatprep.subr.mxu0 0.0
          %1931 = vmatpush1.xpose.msra.mxu0 0.0
          %1932 = vmatprep.subr.mxu0 0.0
          %1933 = vmatpush1.xpose.msra.mxu0 0.0
          %1934 = vmatprep.subr.mxu0 0.0
          %1935 = vmatpush1.xpose.msra.mxu0 0.0
          %1936 = vmatprep.subr.mxu0 0.0
          %1937 = vmatpush1.xpose.msra.mxu0 0.0
          %1938 = vmatprep.subr.mxu0 0.0
          %1939 = vmatpush1.xpose.msra.mxu0 0.0
          %1940 = vmatprep.subr.mxu0 0.0
          %1941 = vmatpush1.xpose.msra.mxu0 0.0
          %1942 = vmatprep.subr.mxu0 0.0
          %1943 = vmatpush1.xpose.msra.mxu0 0.0
          %1944 = vmatprep.subr.mxu0 0.0
          %1945 = vmatpush1.xpose.msra.mxu0 0.0
          %1946 = vmatprep.subr.mxu0 0.0
          %1947 = vmatpush1.xpose.msra.mxu0 0.0
          %1948 = vmatprep.subr.mxu0 0.0
          %1949 = vmatpush1.xpose.msra.mxu0 0.0
          %1950 = vmatprep.subr.mxu0 0.0
          %1951 = vmatpush1.xpose.msra.mxu0 0.0
          %1952 = vmatprep.subr.mxu0 0.0
          %1953 = vmatpush1.xpose.msra.mxu0 0.0
          %1954 = vmatprep.subr.mxu0 0.0
          %1955 = vmatpush1.xpose.msra.mxu0 0.0
          %1956 = vmatprep.subr.mxu0 0.0
          %1957 = vmatpush1.xpose.msra.mxu0 0.0
          %1958 = vmatprep.subr.mxu0 0.0
          %1959 = vmatpush1.xpose.msra.mxu0 0.0
          %1960 = vmatprep.subr.mxu0 0.0
          %1961 = vmatpush1.xpose.msra.mxu0 0.0
          %1962 = vmatprep.subr.mxu0 0.0
          %1963 = vmatpush1.xpose.msra.mxu0 0.0
          %1964 = vmatprep.subr.mxu0 0.0
          %1965 = vmatpush1.xpose.msra.mxu0 0.0
          %1966 = vmatprep.subr.mxu0 0.0
          %1967 = vmatpush1.xpose.msra.mxu0 0.0
          %1968 = vmatprep.subr.mxu0 0.0
          %1969 = vmatpush1.xpose.msra.mxu0 0.0
          %1970 = vmatprep.mubr.f32.mxu0 0.0
          %1971 = vmatmul.mubr.f32.gmra.mrb[0].mxu0 %v1895
          %v1972 = vpop.f32.mrb[0].mxu0
          %v1973 = vadd.f32 0.0, %v1972
          %v1974 = vpop.f32.mrb[0].mxu0
          %1975 = vmatprep.mubr.f32.mxu0 0.0
          %1976 = vmatmul.mubr.f32.gmra.mrb[0].mxu0 %v1898
          %v1977 = vpop.f32.mrb[0].mxu0
          %v1978 = vadd.f32 0.0, %v1977
          %v1979 = vpop.f32.mrb[0].mxu0
          %1980 = vdwg.mxu0
          %v1981 = vsel %vm1216, %v1973, -inf
          %1982 = vmax.xlane.f32.xlu0 %v1981
          %v1983 = vpop.xlane.xlu0 %1982
          %v1984 = vsel %vm1216, %v1978, -inf
          %1985 = vmax.xlane.f32.xlu0 %v1984
          %v1986 = vpop.xlane.xlu0 %1985
          %v1987 = vsub.f32 %v1973, %v1983
          %v1988 = vsub.f32 %v1978, %v1986
          %v1989 = vmul.f32 %v1987, 1.442695
          %v1990 = vpow.pop %v1989
          %v1991 = vmul.f32 %v1988, 1.442695
          %v1992 = vpow.pop %v1991
          %v1993 = vsel %vm1216, %v1990, 0.0
          %1994 = vadd.xlane.f32.xlu0 %v1993
          %v1995 = vpop.xlane.xlu0 %1994
          %v1996 = vsel %vm1216, %v1992, 0.0
          %1997 = vadd.xlane.f32.xlu0 %v1996
          %v1998 = vpop.xlane.xlu0 %1997
          %v1999 = vrcp.pop %v1995
          %v2000 = vmul.f32 1.0, %v1999
          %v2001 = vrcp.pop %v1998
          %v2002 = vmul.f32 1.0, %v2001
          %v2003 = vmul.f32 %v1990, %v2000
          %v2004 = vmul.f32 %v1992, %v2002
          %v2006 = vsel %vm1216, %v2003, 0
          %v2009 = vsel %vm1216, %v2004, 0
          %2011 = vmatprep.subr.mxu0 0.0
          %2012 = vmatpush1.msra.mxu0 %v1886
          %2013 = vmatprep.subr.mxu0 0.0
          %2014 = vmatpush1.msra.mxu0 %v1891
          %2015 = vmatprep.subr.mxu0 0.0
          %2016 = vmatpush1.msra.mxu0 0.0
          %2017 = vmatprep.subr.mxu0 0.0
          %2018 = vmatpush1.msra.mxu0 0.0
          %2019 = vmatprep.subr.mxu0 0.0
          %2020 = vmatpush1.msra.mxu0 0.0
          %2021 = vmatprep.subr.mxu0 0.0
          %2022 = vmatpush1.msra.mxu0 0.0
          %2023 = vmatprep.subr.mxu0 0.0
          %2024 = vmatpush1.msra.mxu0 0.0
          %2025 = vmatprep.subr.mxu0 0.0
          %2026 = vmatpush1.msra.mxu0 0.0
          %2027 = vmatprep.subr.mxu0 0.0
          %2028 = vmatpush1.msra.mxu0 0.0
          %2029 = vmatprep.subr.mxu0 0.0
          %2030 = vmatpush1.msra.mxu0 0.0
          %2031 = vmatprep.subr.mxu0 0.0
          %2032 = vmatpush1.msra.mxu0 0.0
          %2033 = vmatprep.subr.mxu0 0.0
          %2034 = vmatpush1.msra.mxu0 0.0
          %2035 = vmatprep.subr.mxu0 0.0
          %2036 = vmatpush1.msra.mxu0 0.0
          %2037 = vmatprep.subr.mxu0 0.0
          %2038 = vmatpush1.msra.mxu0 0.0
          %2039 = vmatprep.subr.mxu0 0.0
          %2040 = vmatpush1.msra.mxu0 0.0
          %2041 = vmatprep.subr.mxu0 0.0
          %2042 = vmatpush1.msra.mxu0 0.0
          %2043 = vmatprep.subr.mxu0 0.0
          %2044 = vmatpush1.msra.mxu0 0.0
          %2045 = vmatprep.subr.mxu0 0.0
          %2046 = vmatpush1.msra.mxu0 0.0
          %2047 = vmatprep.subr.mxu0 0.0
          %2048 = vmatpush1.msra.mxu0 0.0
          %2049 = vmatprep.subr.mxu0 0.0
          %2050 = vmatpush1.msra.mxu0 0.0
          %2051 = vmatprep.subr.mxu0 0.0
          %2052 = vmatpush1.msra.mxu0 0.0
          %2053 = vmatprep.subr.mxu0 0.0
          %2054 = vmatpush1.msra.mxu0 0.0
          %2055 = vmatprep.subr.mxu0 0.0
          %2056 = vmatpush1.msra.mxu0 0.0
          %2057 = vmatprep.subr.mxu0 0.0
          %2058 = vmatpush1.msra.mxu0 0.0
          %2059 = vmatprep.subr.mxu0 0.0
          %2060 = vmatpush1.msra.mxu0 0.0
          %2061 = vmatprep.subr.mxu0 0.0
          %2062 = vmatpush1.msra.mxu0 0.0
          %2063 = vmatprep.subr.mxu0 0.0
          %2064 = vmatpush1.msra.mxu0 0.0
          %2065 = vmatprep.subr.mxu0 0.0
          %2066 = vmatpush1.msra.mxu0 0.0
          %2067 = vmatprep.subr.mxu0 0.0
          %2068 = vmatpush1.msra.mxu0 0.0
          %2069 = vmatprep.subr.mxu0 0.0
          %2070 = vmatpush1.msra.mxu0 0.0
          %2071 = vmatprep.subr.mxu0 0.0
          %2072 = vmatpush1.msra.mxu0 0.0
          %2073 = vmatprep.subr.mxu0 0.0
          %2074 = vmatpush1.msra.mxu0 0.0
          %2075 = vmatprep.mubr.f32.mxu0 0.0
          %2076 = vmatmul.mubr.f32.gmra.mrb[0].mxu0 %v2006
          %v2077 = vpop.f32.mrb[0].mxu0
          %v2078 = vadd.f32 0.0, %v2077
          %v2079 = vpop.f32.mrb[0].mxu0
          %2080 = vmatprep.mubr.f32.mxu0 0.0
          %2081 = vmatmul.mubr.f32.gmra.mrb[0].mxu0 %v2009
          %v2082 = vpop.f32.mrb[0].mxu0
          %v2083 = vadd.f32 0.0, %v2082
          %v2084 = vpop.f32.mrb[0].mxu0
          %2085 = vdwg.mxu0
          %2086 = vst.msk [vmem:[#allocation2] sm:$0xff] %vm1128, %v2078
          %2087 = vst.msk [vmem:[#allocation2 + $0x8] sm:$0xff] %vm1128, %v2083
          %2088 = vrot.lane.b32.xlu0 %v1722, 124
          %v2089 = vpop.permute.xlu0 %2088
          %2090 = vrot.lane.b32.xlu0 %v1723, 124
          %v2091 = vpop.permute.xlu0 %2090
          %2092 = vrot.lane.b32.xlu0 %v1801, 124
          %v2093 = vpop.permute.xlu0 %2092
          %2094 = vrot.lane.b32.xlu0 %v1806, 124
          %v2095 = vpop.permute.xlu0 %2094
          %v2096 = vsel %vm1128, %v2089, 0
          %v2098 = vsel %vm1128, %v2091, 0
          %v2100 = vsel %vm1128, %v2093, 0
          %v2102 = vsel %vm1128, %v2095, 0
          %2104 = vmatprep.subr.mxu0 0.0
          %2105 = vmatpush1.xpose.msra.mxu0 %v2100
          %2106 = vmatprep.subr.mxu0 0.0
          %2107 = vmatpush1.xpose.msra.mxu0 %v2102
          %2108 = vmatprep.subr.mxu0 0.0
          %2109 = vmatpush1.xpose.msra.mxu0 0.0
          %2110 = vmatprep.subr.mxu0 0.0
          %2111 = vmatpush1.xpose.msra.mxu0 0.0
          %2112 = vmatprep.subr.mxu0 0.0
          %2113 = vmatpush1.xpose.msra.mxu0 0.0
          %2114 = vmatprep.subr.mxu0 0.0
          %2115 = vmatpush1.xpose.msra.mxu0 0.0
          %2116 = vmatprep.subr.mxu0 0.0
          %2117 = vmatpush1.xpose.msra.mxu0 0.0
          %2118 = vmatprep.subr.mxu0 0.0
          %2119 = vmatpush1.xpose.msra.mxu0 0.0
          %2120 = vmatprep.subr.mxu0 0.0
          %2121 = vmatpush1.xpose.msra.mxu0 0.0
          %2122 = vmatprep.subr.mxu0 0.0
          %2123 = vmatpush1.xpose.msra.mxu0 0.0
          %2124 = vmatprep.subr.mxu0 0.0
          %2125 = vmatpush1.xpose.msra.mxu0 0.0
          %2126 = vmatprep.subr.mxu0 0.0
          %2127 = vmatpush1.xpose.msra.mxu0 0.0
          %2128 = vmatprep.subr.mxu0 0.0
          %2129 = vmatpush1.xpose.msra.mxu0 0.0
          %2130 = vmatprep.subr.mxu0 0.0
          %2131 = vmatpush1.xpose.msra.mxu0 0.0
          %2132 = vmatprep.subr.mxu0 0.0
          %2133 = vmatpush1.xpose.msra.mxu0 0.0
          %2134 = vmatprep.subr.mxu0 0.0
          %2135 = vmatpush1.xpose.msra.mxu0 0.0
          %2136 = vmatprep.subr.mxu0 0.0
          %2137 = vmatpush1.xpose.msra.mxu0 0.0
          %2138 = vmatprep.subr.mxu0 0.0
          %2139 = vmatpush1.xpose.msra.mxu0 0.0
          %2140 = vmatprep.subr.mxu0 0.0
          %2141 = vmatpush1.xpose.msra.mxu0 0.0
          %2142 = vmatprep.subr.mxu0 0.0
          %2143 = vmatpush1.xpose.msra.mxu0 0.0
          %2144 = vmatprep.subr.mxu0 0.0
          %2145 = vmatpush1.xpose.msra.mxu0 0.0
          %2146 = vmatprep.subr.mxu0 0.0
          %2147 = vmatpush1.xpose.msra.mxu0 0.0
          %2148 = vmatprep.subr.mxu0 0.0
          %2149 = vmatpush1.xpose.msra.mxu0 0.0
          %2150 = vmatprep.subr.mxu0 0.0
          %2151 = vmatpush1.xpose.msra.mxu0 0.0
          %2152 = vmatprep.subr.mxu0 0.0
          %2153 = vmatpush1.xpose.msra.mxu0 0.0
          %2154 = vmatprep.subr.mxu0 0.0
          %2155 = vmatpush1.xpose.msra.mxu0 0.0
          %2156 = vmatprep.subr.mxu0 0.0
          %2157 = vmatpush1.xpose.msra.mxu0 0.0
          %2158 = vmatprep.subr.mxu0 0.0
          %2159 = vmatpush1.xpose.msra.mxu0 0.0
          %2160 = vmatprep.subr.mxu0 0.0
          %2161 = vmatpush1.xpose.msra.mxu0 0.0
          %2162 = vmatprep.subr.mxu0 0.0
          %2163 = vmatpush1.xpose.msra.mxu0 0.0
          %2164 = vmatprep.subr.mxu0 0.0
          %2165 = vmatpush1.xpose.msra.mxu0 0.0
          %2166 = vmatprep.subr.mxu0 0.0
          %2167 = vmatpush1.xpose.msra.mxu0 0.0
          %2168 = vmatprep.mubr.f32.mxu0 0.0
          %2169 = vmatmul.mubr.f32.gmra.mrb[0].mxu0 %v2096
          %v2170 = vpop.f32.mrb[0].mxu0
          %v2171 = vadd.f32 0.0, %v2170
          %v2172 = vpop.f32.mrb[0].mxu0
          %2173 = vmatprep.mubr.f32.mxu0 0.0
          %2174 = vmatmul.mubr.f32.gmra.mrb[0].mxu0 %v2098
          %v2175 = vpop.f32.mrb[0].mxu0
          %v2176 = vadd.f32 0.0, %v2175
          %v2177 = vpop.f32.mrb[0].mxu0
          %2178 = vdwg.mxu0
          %v2179 = vsel %vm1216, %v2171, -inf
          %2180 = vmax.xlane.f32.xlu0 %v2179
          %v2181 = vpop.xlane.xlu0 %2180
          %v2182 = vsel %vm1216, %v2176, -inf
          %2183 = vmax.xlane.f32.xlu0 %v2182
          %v2184 = vpop.xlane.xlu0 %2183
          %v2185 = vsub.f32 %v2171, %v2181
          %v2186 = vsub.f32 %v2176, %v2184
          %v2187 = vmul.f32 %v2185, 1.442695
          %v2188 = vpow.pop %v2187
          %v2189 = vmul.f32 %v2186, 1.442695
          %v2190 = vpow.pop %v2189
          %v2191 = vsel %vm1216, %v2188, 0.0
          %2192 = vadd.xlane.f32.xlu0 %v2191
          %v2193 = vpop.xlane.xlu0 %2192
          %v2194 = vsel %vm1216, %v2190, 0.0
          %2195 = vadd.xlane.f32.xlu0 %v2194
          %v2196 = vpop.xlane.xlu0 %2195
          %v2197 = vrcp.pop %v2193
          %v2198 = vmul.f32 1.0, %v2197
          %v2199 = vrcp.pop %v2196
          %v2200 = vmul.f32 1.0, %v2199
          %v2201 = vmul.f32 %v2188, %v2198
          %v2202 = vmul.f32 %v2190, %v2200
          %2205 = vrot.lane.b32.xlu0 %v1886, 124
          %v2206 = vpop.permute.xlu0 %2205
          %2207 = vrot.lane.b32.xlu0 %v1891, 124
          %v2208 = vpop.permute.xlu0 %2207
          %v2212 = vsel %vm1216, %v2201, 0
          %v2215 = vsel %vm1216, %v2202, 0
          %2217 = vmatprep.subr.mxu0 0.0
          %2218 = vmatpush1.msra.mxu0 %v2206
          %2219 = vmatprep.subr.mxu0 0.0
          %2220 = vmatpush1.msra.mxu0 %v2208
          %2221 = vmatprep.subr.mxu0 0.0
          %2222 = vmatpush1.msra.mxu0 0.0
          %2223 = vmatprep.subr.mxu0 0.0
          %2224 = vmatpush1.msra.mxu0 0.0
          %2225 = vmatprep.subr.mxu0 0.0
          %2226 = vmatpush1.msra.mxu0 0.0
          %2227 = vmatprep.subr.mxu0 0.0
          %2228 = vmatpush1.msra.mxu0 0.0
          %2229 = vmatprep.subr.mxu0 0.0
          %2230 = vmatpush1.msra.mxu0 0.0
          %2231 = vmatprep.subr.mxu0 0.0
          %2232 = vmatpush1.msra.mxu0 0.0
          %2233 = vmatprep.subr.mxu0 0.0
          %2234 = vmatpush1.msra.mxu0 0.0
          %2235 = vmatprep.subr.mxu0 0.0
          %2236 = vmatpush1.msra.mxu0 0.0
          %2237 = vmatprep.subr.mxu0 0.0
          %2238 = vmatpush1.msra.mxu0 0.0
          %2239 = vmatprep.subr.mxu0 0.0
          %2240 = vmatpush1.msra.mxu0 0.0
          %2241 = vmatprep.subr.mxu0 0.0
          %2242 = vmatpush1.msra.mxu0 0.0
          %2243 = vmatprep.subr.mxu0 0.0
          %2244 = vmatpush1.msra.mxu0 0.0
          %2245 = vmatprep.subr.mxu0 0.0
          %2246 = vmatpush1.msra.mxu0 0.0
          %2247 = vmatprep.subr.mxu0 0.0
          %2248 = vmatpush1.msra.mxu0 0.0
          %2249 = vmatprep.subr.mxu0 0.0
          %2250 = vmatpush1.msra.mxu0 0.0
          %2251 = vmatprep.subr.mxu0 0.0
          %2252 = vmatpush1.msra.mxu0 0.0
          %2253 = vmatprep.subr.mxu0 0.0
          %2254 = vmatpush1.msra.mxu0 0.0
          %2255 = vmatprep.subr.mxu0 0.0
          %2256 = vmatpush1.msra.mxu0 0.0
          %2257 = vmatprep.subr.mxu0 0.0
          %2258 = vmatpush1.msra.mxu0 0.0
          %2259 = vmatprep.subr.mxu0 0.0
          %2260 = vmatpush1.msra.mxu0 0.0
          %2261 = vmatprep.subr.mxu0 0.0
          %2262 = vmatpush1.msra.mxu0 0.0
          %2263 = vmatprep.subr.mxu0 0.0
          %2264 = vmatpush1.msra.mxu0 0.0
          %2265 = vmatprep.subr.mxu0 0.0
          %2266 = vmatpush1.msra.mxu0 0.0
          %2267 = vmatprep.subr.mxu0 0.0
          %2268 = vmatpush1.msra.mxu0 0.0
          %2269 = vmatprep.subr.mxu0 0.0
          %2270 = vmatpush1.msra.mxu0 0.0
          %2271 = vmatprep.subr.mxu0 0.0
          %2272 = vmatpush1.msra.mxu0 0.0
          %2273 = vmatprep.subr.mxu0 0.0
          %2274 = vmatpush1.msra.mxu0 0.0
          %2275 = vmatprep.subr.mxu0 0.0
          %2276 = vmatpush1.msra.mxu0 0.0
          %2277 = vmatprep.subr.mxu0 0.0
          %2278 = vmatpush1.msra.mxu0 0.0
          %2279 = vmatprep.subr.mxu0 0.0
          %2280 = vmatpush1.msra.mxu0 0.0
          %2281 = vmatprep.mubr.f32.mxu0 0.0
          %2282 = vmatmul.mubr.f32.gmra.mrb[0].mxu0 %v2212
          %v2283 = vpop.f32.mrb[0].mxu0
          %v2284 = vadd.f32 0.0, %v2283
          %v2285 = vpop.f32.mrb[0].mxu0
          %2286 = vmatprep.mubr.f32.mxu0 0.0
          %2287 = vmatmul.mubr.f32.gmra.mrb[0].mxu0 %v2215
          %v2288 = vpop.f32.mrb[0].mxu0
          %v2289 = vadd.f32 0.0, %v2288
          %v2290 = vpop.f32.mrb[0].mxu0
          %2291 = vdwg.mxu0
          %2294 = vrot.lane.b32.xlu0 %v2284, 4
          %v2295 = vpop.permute.xlu0 %2294
          %2296 = vrot.lane.b32.xlu0 %v2289, 4
          %v2297 = vpop.permute.xlu0 %2296
          %2300 = vst.msk [vmem:[#allocation2] sm:$0xff] %vm1536, %v2295
          %2301 = vst.msk [vmem:[#allocation2 + $0x8] sm:$0xff] %vm1536, %v2297
          %v2302 = vld [vmem:[#allocation2] sm:$0xff]
          %v2303 = vld [vmem:[#allocation2 + $0x8] sm:$0xff]
          %v2304 = vld [vmem:[%s1] sm:$0xff]
          %v2305 = vld [vmem:[%s1 + $0x8] sm:$0xff]
          %v2307 = vsel %vm1216, %v2304, 0
          %v2310 = vsel %vm1216, %v2305, 0
          %2312 = vmatprep.subr.mxu0 0.0
          %2313 = vmatpush1.msra.mxu0 %v2302
          %2314 = vmatprep.subr.mxu0 0.0
          %2315 = vmatpush1.msra.mxu0 %v2303
          %2316 = vmatprep.subr.mxu0 0.0
          %2317 = vmatpush1.msra.mxu0 0.0
          %2318 = vmatprep.subr.mxu0 0.0
          %2319 = vmatpush1.msra.mxu0 0.0
          %2320 = vmatprep.subr.mxu0 0.0
          %2321 = vmatpush1.msra.mxu0 0.0
          %2322 = vmatprep.subr.mxu0 0.0
          %2323 = vmatpush1.msra.mxu0 0.0
          %2324 = vmatprep.subr.mxu0 0.0
          %2325 = vmatpush1.msra.mxu0 0.0
          %2326 = vmatprep.subr.mxu0 0.0
          %2327 = vmatpush1.msra.mxu0 0.0
          %2328 = vmatprep.subr.mxu0 0.0
          %2329 = vmatpush1.msra.mxu0 0.0
          %2330 = vmatprep.subr.mxu0 0.0
          %2331 = vmatpush1.msra.mxu0 0.0
          %2332 = vmatprep.subr.mxu0 0.0
          %2333 = vmatpush1.msra.mxu0 0.0
          %2334 = vmatprep.subr.mxu0 0.0
          %2335 = vmatpush1.msra.mxu0 0.0
          %2336 = vmatprep.subr.mxu0 0.0
          %2337 = vmatpush1.msra.mxu0 0.0
          %2338 = vmatprep.subr.mxu0 0.0
          %2339 = vmatpush1.msra.mxu0 0.0
          %2340 = vmatprep.subr.mxu0 0.0
          %2341 = vmatpush1.msra.mxu0 0.0
          %2342 = vmatprep.subr.mxu0 0.0
          %2343 = vmatpush1.msra.mxu0 0.0
          %2344 = vmatprep.subr.mxu0 0.0
          %2345 = vmatpush1.msra.mxu0 0.0
          %2346 = vmatprep.subr.mxu0 0.0
          %2347 = vmatpush1.msra.mxu0 0.0
          %2348 = vmatprep.subr.mxu0 0.0
          %2349 = vmatpush1.msra.mxu0 0.0
          %2350 = vmatprep.subr.mxu0 0.0
          %2351 = vmatpush1.msra.mxu0 0.0
          %2352 = vmatprep.subr.mxu0 0.0
          %2353 = vmatpush1.msra.mxu0 0.0
          %2354 = vmatprep.subr.mxu0 0.0
          %2355 = vmatpush1.msra.mxu0 0.0
          %2356 = vmatprep.subr.mxu0 0.0
          %2357 = vmatpush1.msra.mxu0 0.0
          %2358 = vmatprep.subr.mxu0 0.0
          %2359 = vmatpush1.msra.mxu0 0.0
          %2360 = vmatprep.subr.mxu0 0.0
          %2361 = vmatpush1.msra.mxu0 0.0
          %2362 = vmatprep.subr.mxu0 0.0
          %2363 = vmatpush1.msra.mxu0 0.0
          %2364 = vmatprep.subr.mxu0 0.0
          %2365 = vmatpush1.msra.mxu0 0.0
          %2366 = vmatprep.subr.mxu0 0.0
          %2367 = vmatpush1.msra.mxu0 0.0
          %2368 = vmatprep.subr.mxu0 0.0
          %2369 = vmatpush1.msra.mxu0 0.0
          %2370 = vmatprep.subr.mxu0 0.0
          %2371 = vmatpush1.msra.mxu0 0.0
          %2372 = vmatprep.subr.mxu0 0.0
          %2373 = vmatpush1.msra.mxu0 0.0
          %2374 = vmatprep.subr.mxu0 0.0
          %2375 = vmatpush1.msra.mxu0 0.0
          %2376 = vmatprep.mubr.f32.mxu0 0.0
          %2377 = vmatmul.mubr.f32.gmra.mrb[0].mxu0 %v2307
          %v2378 = vpop.f32.mrb[0].mxu0
          %v2379 = vadd.f32 0.0, %v2378
          %v2380 = vpop.f32.mrb[0].mxu0
          %2381 = vmatprep.mubr.f32.mxu0 0.0
          %2382 = vmatmul.mubr.f32.gmra.mrb[0].mxu0 %v2310
          %v2383 = vpop.f32.mrb[0].mxu0
          %v2384 = vadd.f32 0.0, %v2383
          %v2385 = vpop.f32.mrb[0].mxu0
          %2386 = vdwg.mxu0
          %2389 = vrot.lane.b32.xlu0 %v2379, 8
          %v2390 = vpop.permute.xlu0 %2389
          %2391 = vrot.lane.b32.xlu0 %v2384, 8
          %v2392 = vpop.permute.xlu0 %2391
          %vm2395 = vcmask 130112
          %2396 = vst.msk [vmem:[#allocation3] sm:$0xff] %vm2395, %v2390
          %2397 = vst.msk [vmem:[#allocation3 + $0x8] sm:$0xff] %vm2395, %v2392
          %s2398 = scalar_lea.vmem %s4, 64
          %v2399 = vld [vmem:[%s2398] sm:$0xff]
          %v2400 = vld [vmem:[%s2398 + $0x8] sm:$0xff]
          %v2401 = vld [vmem:[%s2398 + $0x10] sm:$0xff]
          %v2402 = vld [vmem:[%s2398 + $0x18] sm:$0xff]
          %s2403 = scalar_lea.vmem [#allocation6], 2
          %v2404 = vld [vmem:[%s2403] sm:$0x1]
          %v2406 = vlaneseq
          %v2407 = vshrl.u32 %v2406, 7
          %v2408 = vsub.s32 0, %v2407
          %v2409 = vrot.slane %v2404, %v2408
          %2411 = vmatprep.subr.mxu0 0.0
          %2412 = vmatpush1.msra.mxu0 %v2399
          %2413 = vmatprep.subr.mxu0 0.0
          %2414 = vmatpush1.msra.mxu0 %v2400
          %2415 = vmatprep.subr.mxu0 0.0
          %2416 = vmatpush1.msra.mxu0 %v2401
          %2417 = vmatprep.subr.mxu0 0.0
          %2418 = vmatpush1.msra.mxu0 %v2402
          %2419 = vmatprep.subr.mxu0 0.0
          %2420 = vmatpush1.msra.mxu0 0.0
          %2421 = vmatprep.subr.mxu0 0.0
          %2422 = vmatpush1.msra.mxu0 0.0
          %2423 = vmatprep.subr.mxu0 0.0
          %2424 = vmatpush1.msra.mxu0 0.0
          %2425 = vmatprep.subr.mxu0 0.0
          %2426 = vmatpush1.msra.mxu0 0.0
          %2427 = vmatprep.subr.mxu0 0.0
          %2428 = vmatpush1.msra.mxu0 0.0
          %2429 = vmatprep.subr.mxu0 0.0
          %2430 = vmatpush1.msra.mxu0 0.0
          %2431 = vmatprep.subr.mxu0 0.0
          %2432 = vmatpush1.msra.mxu0 0.0
          %2433 = vmatprep.subr.mxu0 0.0
          %2434 = vmatpush1.msra.mxu0 0.0
          %2435 = vmatprep.subr.mxu0 0.0
          %2436 = vmatpush1.msra.mxu0 0.0
          %2437 = vmatprep.subr.mxu0 0.0
          %2438 = vmatpush1.msra.mxu0 0.0
          %2439 = vmatprep.subr.mxu0 0.0
          %2440 = vmatpush1.msra.mxu0 0.0
          %2441 = vmatprep.subr.mxu0 0.0
          %2442 = vmatpush1.msra.mxu0 0.0
          %2443 = vmatprep.subr.mxu0 0.0
          %2444 = vmatpush1.msra.mxu0 0.0
          %2445 = vmatprep.subr.mxu0 0.0
          %2446 = vmatpush1.msra.mxu0 0.0
          %2447 = vmatprep.subr.mxu0 0.0
          %2448 = vmatpush1.msra.mxu0 0.0
          %2449 = vmatprep.subr.mxu0 0.0
          %2450 = vmatpush1.msra.mxu0 0.0
          %2451 = vmatprep.subr.mxu0 0.0
          %2452 = vmatpush1.msra.mxu0 0.0
          %2453 = vmatprep.subr.mxu0 0.0
          %2454 = vmatpush1.msra.mxu0 0.0
          %2455 = vmatprep.subr.mxu0 0.0
          %2456 = vmatpush1.msra.mxu0 0.0
          %2457 = vmatprep.subr.mxu0 0.0
          %2458 = vmatpush1.msra.mxu0 0.0
          %2459 = vmatprep.subr.mxu0 0.0
          %2460 = vmatpush1.msra.mxu0 0.0
          %2461 = vmatprep.subr.mxu0 0.0
          %2462 = vmatpush1.msra.mxu0 0.0
          %2463 = vmatprep.subr.mxu0 0.0
          %2464 = vmatpush1.msra.mxu0 0.0
          %2465 = vmatprep.subr.mxu0 0.0
          %2466 = vmatpush1.msra.mxu0 0.0
          %2467 = vmatprep.subr.mxu0 0.0
          %2468 = vmatpush1.msra.mxu0 0.0
          %2469 = vmatprep.subr.mxu0 0.0
          %2470 = vmatpush1.msra.mxu0 0.0
          %2471 = vmatprep.subr.mxu0 0.0
          %2472 = vmatpush1.msra.mxu0 0.0
          %2473 = vmatprep.subr.mxu0 0.0
          %2474 = vmatpush1.msra.mxu0 0.0
          %2475 = vmatprep.mubr.f32.mxu0 0.0
          %2476 = vmatmul.mubr.f32.gmra.mrb[0].mxu0 %v790
          %v2477 = vpop.f32.mrb[0].mxu0
          %v2478 = vadd.f32 %v2409, %v2477
          %v2479 = vpop.f32.mrb[0].mxu0
          %2480 = vmatprep.mubr.f32.mxu0 0.0
          %2481 = vmatmul.mubr.f32.gmra.mrb[0].mxu0 %v793
          %v2482 = vpop.f32.mrb[0].mxu0
          %v2483 = vadd.f32 %v2409, %v2482
          %v2484 = vpop.f32.mrb[0].mxu0
          %2485 = vdwg.mxu0
          %s2486 = scalar_lea.vmem %s6, 16
          %v2487 = vld [vmem:[%s2486] sm:$0xff]
          %s2488 = scalar_lea.vmem %s7, 2
          %v2489 = vld [vmem:[%s2488] sm:$0x1]
          %v2491 = vlaneseq
          %v2492 = vshrl.u32 %v2491, 7
          %v2493 = vsub.s32 0, %v2492
          %v2494 = vrot.slane %v2489, %v2493
          %v2497 = vsel %vm878, %v2478, 0
          %v2500 = vsel %vm878, %v2483, 0
          %2502 = vmatprep.subr.mxu0 0.0
          %2503 = vmatpush1.msra.mxu0 %v2487
          %2504 = vmatprep.subr.mxu0 0.0
          %2505 = vmatpush1.msra.mxu0 0.0
          %2506 = vmatprep.subr.mxu0 0.0
          %2507 = vmatpush1.msra.mxu0 0.0
          %2508 = vmatprep.subr.mxu0 0.0
          %2509 = vmatpush1.msra.mxu0 0.0
          %2510 = vmatprep.subr.mxu0 0.0
          %2511 = vmatpush1.msra.mxu0 0.0
          %2512 = vmatprep.subr.mxu0 0.0
          %2513 = vmatpush1.msra.mxu0 0.0
          %2514 = vmatprep.subr.mxu0 0.0
          %2515 = vmatpush1.msra.mxu0 0.0
          %2516 = vmatprep.subr.mxu0 0.0
          %2517 = vmatpush1.msra.mxu0 0.0
          %2518 = vmatprep.subr.mxu0 0.0
          %2519 = vmatpush1.msra.mxu0 0.0
          %2520 = vmatprep.subr.mxu0 0.0
          %2521 = vmatpush1.msra.mxu0 0.0
          %2522 = vmatprep.subr.mxu0 0.0
          %2523 = vmatpush1.msra.mxu0 0.0
          %2524 = vmatprep.subr.mxu0 0.0
          %2525 = vmatpush1.msra.mxu0 0.0
          %2526 = vmatprep.subr.mxu0 0.0
          %2527 = vmatpush1.msra.mxu0 0.0
          %2528 = vmatprep.subr.mxu0 0.0
          %2529 = vmatpush1.msra.mxu0 0.0
          %2530 = vmatprep.subr.mxu0 0.0
          %2531 = vmatpush1.msra.mxu0 0.0
          %2532 = vmatprep.subr.mxu0 0.0
          %2533 = vmatpush1.msra.mxu0 0.0
          %2534 = vmatprep.subr.mxu0 0.0
          %2535 = vmatpush1.msra.mxu0 0.0
          %2536 = vmatprep.subr.mxu0 0.0
          %2537 = vmatpush1.msra.mxu0 0.0
          %2538 = vmatprep.subr.mxu0 0.0
          %2539 = vmatpush1.msra.mxu0 0.0
          %2540 = vmatprep.subr.mxu0 0.0
          %2541 = vmatpush1.msra.mxu0 0.0
          %2542 = vmatprep.subr.mxu0 0.0
          %2543 = vmatpush1.msra.mxu0 0.0
          %2544 = vmatprep.subr.mxu0 0.0
          %2545 = vmatpush1.msra.mxu0 0.0
          %2546 = vmatprep.subr.mxu0 0.0
          %2547 = vmatpush1.msra.mxu0 0.0
          %2548 = vmatprep.subr.mxu0 0.0
          %2549 = vmatpush1.msra.mxu0 0.0
          %2550 = vmatprep.subr.mxu0 0.0
          %2551 = vmatpush1.msra.mxu0 0.0
          %2552 = vmatprep.subr.mxu0 0.0
          %2553 = vmatpush1.msra.mxu0 0.0
          %2554 = vmatprep.subr.mxu0 0.0
          %2555 = vmatpush1.msra.mxu0 0.0
          %2556 = vmatprep.subr.mxu0 0.0
          %2557 = vmatpush1.msra.mxu0 0.0
          %2558 = vmatprep.subr.mxu0 0.0
          %2559 = vmatpush1.msra.mxu0 0.0
          %2560 = vmatprep.subr.mxu0 0.0
          %2561 = vmatpush1.msra.mxu0 0.0
          %2562 = vmatprep.subr.mxu0 0.0
          %2563 = vmatpush1.msra.mxu0 0.0
          %2564 = vmatprep.subr.mxu0 0.0
          %2565 = vmatpush1.msra.mxu0 0.0
          %2566 = vmatprep.mubr.f32.mxu0 0.0
          %2567 = vmatmul.mubr.f32.gmra.mrb[0].mxu0 %v2497
          %v2568 = vpop.f32.mrb[0].mxu0
          %v2569 = vadd.f32 %v2494, %v2568
          %v2570 = vpop.f32.mrb[0].mxu0
          %2571 = vmatprep.mubr.f32.mxu0 0.0
          %2572 = vmatmul.mubr.f32.gmra.mrb[0].mxu0 %v2500
          %v2573 = vpop.f32.mrb[0].mxu0
          %v2574 = vadd.f32 %v2494, %v2573
          %v2575 = vpop.f32.mrb[0].mxu0
          %2576 = vdwg.mxu0
          %v2577 = vmul.f32 %v2569, 0.35355338
          %v2578 = vmul.f32 %v2574, 0.35355338
          %s2579 = scalar_lea.vmem %s8, 16
          %v2580 = vld [vmem:[%s2579] sm:$0xff]
          %s2581 = scalar_lea.vmem %s9, 2
          %v2582 = vld [vmem:[%s2581] sm:$0x1]
          %v2584 = vlaneseq
          %v2585 = vshrl.u32 %v2584, 7
          %v2586 = vsub.s32 0, %v2585
          %v2587 = vrot.slane %v2582, %v2586
          %2589 = vmatprep.subr.mxu0 0.0
          %2590 = vmatpush1.msra.mxu0 %v2580
          %2591 = vmatprep.subr.mxu0 0.0
          %2592 = vmatpush1.msra.mxu0 0.0
          %2593 = vmatprep.subr.mxu0 0.0
          %2594 = vmatpush1.msra.mxu0 0.0
          %2595 = vmatprep.subr.mxu0 0.0
          %2596 = vmatpush1.msra.mxu0 0.0
          %2597 = vmatprep.subr.mxu0 0.0
          %2598 = vmatpush1.msra.mxu0 0.0
          %2599 = vmatprep.subr.mxu0 0.0
          %2600 = vmatpush1.msra.mxu0 0.0
          %2601 = vmatprep.subr.mxu0 0.0
          %2602 = vmatpush1.msra.mxu0 0.0
          %2603 = vmatprep.subr.mxu0 0.0
          %2604 = vmatpush1.msra.mxu0 0.0
          %2605 = vmatprep.subr.mxu0 0.0
          %2606 = vmatpush1.msra.mxu0 0.0
          %2607 = vmatprep.subr.mxu0 0.0
          %2608 = vmatpush1.msra.mxu0 0.0
          %2609 = vmatprep.subr.mxu0 0.0
          %2610 = vmatpush1.msra.mxu0 0.0
          %2611 = vmatprep.subr.mxu0 0.0
          %2612 = vmatpush1.msra.mxu0 0.0
          %2613 = vmatprep.subr.mxu0 0.0
          %2614 = vmatpush1.msra.mxu0 0.0
          %2615 = vmatprep.subr.mxu0 0.0
          %2616 = vmatpush1.msra.mxu0 0.0
          %2617 = vmatprep.subr.mxu0 0.0
          %2618 = vmatpush1.msra.mxu0 0.0
          %2619 = vmatprep.subr.mxu0 0.0
          %2620 = vmatpush1.msra.mxu0 0.0
          %2621 = vmatprep.subr.mxu0 0.0
          %2622 = vmatpush1.msra.mxu0 0.0
          %2623 = vmatprep.subr.mxu0 0.0
          %2624 = vmatpush1.msra.mxu0 0.0
          %2625 = vmatprep.subr.mxu0 0.0
          %2626 = vmatpush1.msra.mxu0 0.0
          %2627 = vmatprep.subr.mxu0 0.0
          %2628 = vmatpush1.msra.mxu0 0.0
          %2629 = vmatprep.subr.mxu0 0.0
          %2630 = vmatpush1.msra.mxu0 0.0
          %2631 = vmatprep.subr.mxu0 0.0
          %2632 = vmatpush1.msra.mxu0 0.0
          %2633 = vmatprep.subr.mxu0 0.0
          %2634 = vmatpush1.msra.mxu0 0.0
          %2635 = vmatprep.subr.mxu0 0.0
          %2636 = vmatpush1.msra.mxu0 0.0
          %2637 = vmatprep.subr.mxu0 0.0
          %2638 = vmatpush1.msra.mxu0 0.0
          %2639 = vmatprep.subr.mxu0 0.0
          %2640 = vmatpush1.msra.mxu0 0.0
          %2641 = vmatprep.subr.mxu0 0.0
          %2642 = vmatpush1.msra.mxu0 0.0
          %2643 = vmatprep.subr.mxu0 0.0
          %2644 = vmatpush1.msra.mxu0 0.0
          %2645 = vmatprep.subr.mxu0 0.0
          %2646 = vmatpush1.msra.mxu0 0.0
          %2647 = vmatprep.subr.mxu0 0.0
          %2648 = vmatpush1.msra.mxu0 0.0
          %2649 = vmatprep.subr.mxu0 0.0
          %2650 = vmatpush1.msra.mxu0 0.0
          %2651 = vmatprep.subr.mxu0 0.0
          %2652 = vmatpush1.msra.mxu0 0.0
          %2653 = vmatprep.mubr.f32.mxu0 0.0
          %2654 = vmatmul.mubr.f32.gmra.mrb[0].mxu0 %v2497
          %v2655 = vpop.f32.mrb[0].mxu0
          %v2656 = vadd.f32 %v2587, %v2655
          %v2657 = vpop.f32.mrb[0].mxu0
          %2658 = vmatprep.mubr.f32.mxu0 0.0
          %2659 = vmatmul.mubr.f32.gmra.mrb[0].mxu0 %v2500
          %v2660 = vpop.f32.mrb[0].mxu0
          %v2661 = vadd.f32 %v2587, %v2660
          %v2662 = vpop.f32.mrb[0].mxu0
          %2663 = vdwg.mxu0
          %s2664 = scalar_lea.vmem %s10, 16
          %v2665 = vld [vmem:[%s2664] sm:$0xff]
          %s2666 = scalar_lea.vmem %s11, 2
          %v2667 = vld [vmem:[%s2666] sm:$0x1]
          %v2669 = vlaneseq
          %v2670 = vshrl.u32 %v2669, 7
          %v2671 = vsub.s32 0, %v2670
          %v2672 = vrot.slane %v2667, %v2671
          %2674 = vmatprep.subr.mxu0 0.0
          %2675 = vmatpush1.msra.mxu0 %v2665
          %2676 = vmatprep.subr.mxu0 0.0
          %2677 = vmatpush1.msra.mxu0 0.0
          %2678 = vmatprep.subr.mxu0 0.0
          %2679 = vmatpush1.msra.mxu0 0.0
          %2680 = vmatprep.subr.mxu0 0.0
          %2681 = vmatpush1.msra.mxu0 0.0
          %2682 = vmatprep.subr.mxu0 0.0
          %2683 = vmatpush1.msra.mxu0 0.0
          %2684 = vmatprep.subr.mxu0 0.0
          %2685 = vmatpush1.msra.mxu0 0.0
          %2686 = vmatprep.subr.mxu0 0.0
          %2687 = vmatpush1.msra.mxu0 0.0
          %2688 = vmatprep.subr.mxu0 0.0
          %2689 = vmatpush1.msra.mxu0 0.0
          %2690 = vmatprep.subr.mxu0 0.0
          %2691 = vmatpush1.msra.mxu0 0.0
          %2692 = vmatprep.subr.mxu0 0.0
          %2693 = vmatpush1.msra.mxu0 0.0
          %2694 = vmatprep.subr.mxu0 0.0
          %2695 = vmatpush1.msra.mxu0 0.0
          %2696 = vmatprep.subr.mxu0 0.0
          %2697 = vmatpush1.msra.mxu0 0.0
          %2698 = vmatprep.subr.mxu0 0.0
          %2699 = vmatpush1.msra.mxu0 0.0
          %2700 = vmatprep.subr.mxu0 0.0
          %2701 = vmatpush1.msra.mxu0 0.0
          %2702 = vmatprep.subr.mxu0 0.0
          %2703 = vmatpush1.msra.mxu0 0.0
          %2704 = vmatprep.subr.mxu0 0.0
          %2705 = vmatpush1.msra.mxu0 0.0
          %2706 = vmatprep.subr.mxu0 0.0
          %2707 = vmatpush1.msra.mxu0 0.0
          %2708 = vmatprep.subr.mxu0 0.0
          %2709 = vmatpush1.msra.mxu0 0.0
          %2710 = vmatprep.subr.mxu0 0.0
          %2711 = vmatpush1.msra.mxu0 0.0
          %2712 = vmatprep.subr.mxu0 0.0
          %2713 = vmatpush1.msra.mxu0 0.0
          %2714 = vmatprep.subr.mxu0 0.0
          %2715 = vmatpush1.msra.mxu0 0.0
          %2716 = vmatprep.subr.mxu0 0.0
          %2717 = vmatpush1.msra.mxu0 0.0
          %2718 = vmatprep.subr.mxu0 0.0
          %2719 = vmatpush1.msra.mxu0 0.0
          %2720 = vmatprep.subr.mxu0 0.0
          %2721 = vmatpush1.msra.mxu0 0.0
          %2722 = vmatprep.subr.mxu0 0.0
          %2723 = vmatpush1.msra.mxu0 0.0
          %2724 = vmatprep.subr.mxu0 0.0
          %2725 = vmatpush1.msra.mxu0 0.0
          %2726 = vmatprep.subr.mxu0 0.0
          %2727 = vmatpush1.msra.mxu0 0.0
          %2728 = vmatprep.subr.mxu0 0.0
          %2729 = vmatpush1.msra.mxu0 0.0
          %2730 = vmatprep.subr.mxu0 0.0
          %2731 = vmatpush1.msra.mxu0 0.0
          %2732 = vmatprep.subr.mxu0 0.0
          %2733 = vmatpush1.msra.mxu0 0.0
          %2734 = vmatprep.subr.mxu0 0.0
          %2735 = vmatpush1.msra.mxu0 0.0
          %2736 = vmatprep.subr.mxu0 0.0
          %2737 = vmatpush1.msra.mxu0 0.0
          %2738 = vmatprep.mubr.f32.mxu0 0.0
          %2739 = vmatmul.mubr.f32.gmra.mrb[0].mxu0 %v2497
          %v2740 = vpop.f32.mrb[0].mxu0
          %v2741 = vadd.f32 %v2672, %v2740
          %v2742 = vpop.f32.mrb[0].mxu0
          %2743 = vmatprep.mubr.f32.mxu0 0.0
          %2744 = vmatmul.mubr.f32.gmra.mrb[0].mxu0 %v2500
          %v2745 = vpop.f32.mrb[0].mxu0
          %v2746 = vadd.f32 %v2672, %v2745
          %v2747 = vpop.f32.mrb[0].mxu0
          %2748 = vdwg.mxu0
          %v2750 = vsel %vm1128, %v2577, 0
          %v2753 = vsel %vm1128, %v2578, 0
          %v2756 = vsel %vm1128, %v2656, 0
          %v2759 = vsel %vm1128, %v2661, 0
          %2761 = vmatprep.subr.mxu0 0.0
          %2762 = vmatpush1.xpose.msra.mxu0 %v2756
          %2763 = vmatprep.subr.mxu0 0.0
          %2764 = vmatpush1.xpose.msra.mxu0 %v2759
          %2765 = vmatprep.subr.mxu0 0.0
          %2766 = vmatpush1.xpose.msra.mxu0 0.0
          %2767 = vmatprep.subr.mxu0 0.0
          %2768 = vmatpush1.xpose.msra.mxu0 0.0
          %2769 = vmatprep.subr.mxu0 0.0
          %2770 = vmatpush1.xpose.msra.mxu0 0.0
          %2771 = vmatprep.subr.mxu0 0.0
          %2772 = vmatpush1.xpose.msra.mxu0 0.0
          %2773 = vmatprep.subr.mxu0 0.0
          %2774 = vmatpush1.xpose.msra.mxu0 0.0
          %2775 = vmatprep.subr.mxu0 0.0
          %2776 = vmatpush1.xpose.msra.mxu0 0.0
          %2777 = vmatprep.subr.mxu0 0.0
          %2778 = vmatpush1.xpose.msra.mxu0 0.0
          %2779 = vmatprep.subr.mxu0 0.0
          %2780 = vmatpush1.xpose.msra.mxu0 0.0
          %2781 = vmatprep.subr.mxu0 0.0
          %2782 = vmatpush1.xpose.msra.mxu0 0.0
          %2783 = vmatprep.subr.mxu0 0.0
          %2784 = vmatpush1.xpose.msra.mxu0 0.0
          %2785 = vmatprep.subr.mxu0 0.0
          %2786 = vmatpush1.xpose.msra.mxu0 0.0
          %2787 = vmatprep.subr.mxu0 0.0
          %2788 = vmatpush1.xpose.msra.mxu0 0.0
          %2789 = vmatprep.subr.mxu0 0.0
          %2790 = vmatpush1.xpose.msra.mxu0 0.0
          %2791 = vmatprep.subr.mxu0 0.0
          %2792 = vmatpush1.xpose.msra.mxu0 0.0
          %2793 = vmatprep.subr.mxu0 0.0
          %2794 = vmatpush1.xpose.msra.mxu0 0.0
          %2795 = vmatprep.subr.mxu0 0.0
          %2796 = vmatpush1.xpose.msra.mxu0 0.0
          %2797 = vmatprep.subr.mxu0 0.0
          %2798 = vmatpush1.xpose.msra.mxu0 0.0
          %2799 = vmatprep.subr.mxu0 0.0
          %2800 = vmatpush1.xpose.msra.mxu0 0.0
          %2801 = vmatprep.subr.mxu0 0.0
          %2802 = vmatpush1.xpose.msra.mxu0 0.0
          %2803 = vmatprep.subr.mxu0 0.0
          %2804 = vmatpush1.xpose.msra.mxu0 0.0
          %2805 = vmatprep.subr.mxu0 0.0
          %2806 = vmatpush1.xpose.msra.mxu0 0.0
          %2807 = vmatprep.subr.mxu0 0.0
          %2808 = vmatpush1.xpose.msra.mxu0 0.0
          %2809 = vmatprep.subr.mxu0 0.0
          %2810 = vmatpush1.xpose.msra.mxu0 0.0
          %2811 = vmatprep.subr.mxu0 0.0
          %2812 = vmatpush1.xpose.msra.mxu0 0.0
          %2813 = vmatprep.subr.mxu0 0.0
          %2814 = vmatpush1.xpose.msra.mxu0 0.0
          %2815 = vmatprep.subr.mxu0 0.0
          %2816 = vmatpush1.xpose.msra.mxu0 0.0
          %2817 = vmatprep.subr.mxu0 0.0
          %2818 = vmatpush1.xpose.msra.mxu0 0.0
          %2819 = vmatprep.subr.mxu0 0.0
          %2820 = vmatpush1.xpose.msra.mxu0 0.0
          %2821 = vmatprep.subr.mxu0 0.0
          %2822 = vmatpush1.xpose.msra.mxu0 0.0
          %2823 = vmatprep.subr.mxu0 0.0
          %2824 = vmatpush1.xpose.msra.mxu0 0.0
          %2825 = vmatprep.mubr.f32.mxu0 0.0
          %2826 = vmatmul.mubr.f32.gmra.mrb[0].mxu0 %v2750
          %v2827 = vpop.f32.mrb[0].mxu0
          %v2828 = vadd.f32 0.0, %v2827
          %v2829 = vpop.f32.mrb[0].mxu0
          %2830 = vmatprep.mubr.f32.mxu0 0.0
          %2831 = vmatmul.mubr.f32.gmra.mrb[0].mxu0 %v2753
          %v2832 = vpop.f32.mrb[0].mxu0
          %v2833 = vadd.f32 0.0, %v2832
          %v2834 = vpop.f32.mrb[0].mxu0
          %2835 = vdwg.mxu0
          %v2836 = vsel %vm1216, %v2828, -inf
          %2837 = vmax.xlane.f32.xlu0 %v2836
          %v2838 = vpop.xlane.xlu0 %2837
          %v2839 = vsel %vm1216, %v2833, -inf
          %2840 = vmax.xlane.f32.xlu0 %v2839
          %v2841 = vpop.xlane.xlu0 %2840
          %v2842 = vsub.f32 %v2828, %v2838
          %v2843 = vsub.f32 %v2833, %v2841
          %v2844 = vmul.f32 %v2842, 1.442695
          %v2845 = vpow.pop %v2844
          %v2846 = vmul.f32 %v2843, 1.442695
          %v2847 = vpow.pop %v2846
          %v2848 = vsel %vm1216, %v2845, 0.0
          %2849 = vadd.xlane.f32.xlu0 %v2848
          %v2850 = vpop.xlane.xlu0 %2849
          %v2851 = vsel %vm1216, %v2847, 0.0
          %2852 = vadd.xlane.f32.xlu0 %v2851
          %v2853 = vpop.xlane.xlu0 %2852
          %v2854 = vrcp.pop %v2850
          %v2855 = vmul.f32 1.0, %v2854
          %v2856 = vrcp.pop %v2853
          %v2857 = vmul.f32 1.0, %v2856
          %v2858 = vmul.f32 %v2845, %v2855
          %v2859 = vmul.f32 %v2847, %v2857
          %v2861 = vsel %vm1216, %v2858, 0
          %v2864 = vsel %vm1216, %v2859, 0
          %2866 = vmatprep.subr.mxu0 0.0
          %2867 = vmatpush1.msra.mxu0 %v2741
          %2868 = vmatprep.subr.mxu0 0.0
          %2869 = vmatpush1.msra.mxu0 %v2746
          %2870 = vmatprep.subr.mxu0 0.0
          %2871 = vmatpush1.msra.mxu0 0.0
          %2872 = vmatprep.subr.mxu0 0.0
          %2873 = vmatpush1.msra.mxu0 0.0
          %2874 = vmatprep.subr.mxu0 0.0
          %2875 = vmatpush1.msra.mxu0 0.0
          %2876 = vmatprep.subr.mxu0 0.0
          %2877 = vmatpush1.msra.mxu0 0.0
          %2878 = vmatprep.subr.mxu0 0.0
          %2879 = vmatpush1.msra.mxu0 0.0
          %2880 = vmatprep.subr.mxu0 0.0
          %2881 = vmatpush1.msra.mxu0 0.0
          %2882 = vmatprep.subr.mxu0 0.0
          %2883 = vmatpush1.msra.mxu0 0.0
          %2884 = vmatprep.subr.mxu0 0.0
          %2885 = vmatpush1.msra.mxu0 0.0
          %2886 = vmatprep.subr.mxu0 0.0
          %2887 = vmatpush1.msra.mxu0 0.0
          %2888 = vmatprep.subr.mxu0 0.0
          %2889 = vmatpush1.msra.mxu0 0.0
          %2890 = vmatprep.subr.mxu0 0.0
          %2891 = vmatpush1.msra.mxu0 0.0
          %2892 = vmatprep.subr.mxu0 0.0
          %2893 = vmatpush1.msra.mxu0 0.0
          %2894 = vmatprep.subr.mxu0 0.0
          %2895 = vmatpush1.msra.mxu0 0.0
          %2896 = vmatprep.subr.mxu0 0.0
          %2897 = vmatpush1.msra.mxu0 0.0
          %2898 = vmatprep.subr.mxu0 0.0
          %2899 = vmatpush1.msra.mxu0 0.0
          %2900 = vmatprep.subr.mxu0 0.0
          %2901 = vmatpush1.msra.mxu0 0.0
          %2902 = vmatprep.subr.mxu0 0.0
          %2903 = vmatpush1.msra.mxu0 0.0
          %2904 = vmatprep.subr.mxu0 0.0
          %2905 = vmatpush1.msra.mxu0 0.0
          %2906 = vmatprep.subr.mxu0 0.0
          %2907 = vmatpush1.msra.mxu0 0.0
          %2908 = vmatprep.subr.mxu0 0.0
          %2909 = vmatpush1.msra.mxu0 0.0
          %2910 = vmatprep.subr.mxu0 0.0
          %2911 = vmatpush1.msra.mxu0 0.0
          %2912 = vmatprep.subr.mxu0 0.0
          %2913 = vmatpush1.msra.mxu0 0.0
          %2914 = vmatprep.subr.mxu0 0.0
          %2915 = vmatpush1.msra.mxu0 0.0
          %2916 = vmatprep.subr.mxu0 0.0
          %2917 = vmatpush1.msra.mxu0 0.0
          %2918 = vmatprep.subr.mxu0 0.0
          %2919 = vmatpush1.msra.mxu0 0.0
          %2920 = vmatprep.subr.mxu0 0.0
          %2921 = vmatpush1.msra.mxu0 0.0
          %2922 = vmatprep.subr.mxu0 0.0
          %2923 = vmatpush1.msra.mxu0 0.0
          %2924 = vmatprep.subr.mxu0 0.0
          %2925 = vmatpush1.msra.mxu0 0.0
          %2926 = vmatprep.subr.mxu0 0.0
          %2927 = vmatpush1.msra.mxu0 0.0
          %2928 = vmatprep.subr.mxu0 0.0
          %2929 = vmatpush1.msra.mxu0 0.0
          %2930 = vmatprep.mubr.f32.mxu0 0.0
          %2931 = vmatmul.mubr.f32.gmra.mrb[0].mxu0 %v2861
          %v2932 = vpop.f32.mrb[0].mxu0
          %v2933 = vadd.f32 0.0, %v2932
          %v2934 = vpop.f32.mrb[0].mxu0
          %2935 = vmatprep.mubr.f32.mxu0 0.0
          %2936 = vmatmul.mubr.f32.gmra.mrb[0].mxu0 %v2864
          %v2937 = vpop.f32.mrb[0].mxu0
          %v2938 = vadd.f32 0.0, %v2937
          %v2939 = vpop.f32.mrb[0].mxu0
          %2940 = vdwg.mxu0
          %2941 = vst.msk [vmem:[#allocation2] sm:$0xff] %vm1128, %v2933
          %2942 = vst.msk [vmem:[#allocation2 + $0x8] sm:$0xff] %vm1128, %v2938
          %2943 = vrot.lane.b32.xlu0 %v2577, 124
          %v2944 = vpop.permute.xlu0 %2943
          %2945 = vrot.lane.b32.xlu0 %v2578, 124
          %v2946 = vpop.permute.xlu0 %2945
          %2947 = vrot.lane.b32.xlu0 %v2656, 124
          %v2948 = vpop.permute.xlu0 %2947
          %2949 = vrot.lane.b32.xlu0 %v2661, 124
          %v2950 = vpop.permute.xlu0 %2949
          %v2951 = vsel %vm1128, %v2944, 0
          %v2953 = vsel %vm1128, %v2946, 0
          %v2955 = vsel %vm1128, %v2948, 0
          %v2957 = vsel %vm1128, %v2950, 0
          %2959 = vmatprep.subr.mxu0 0.0
          %2960 = vmatpush1.xpose.msra.mxu0 %v2955
          %2961 = vmatprep.subr.mxu0 0.0
          %2962 = vmatpush1.xpose.msra.mxu0 %v2957
          %2963 = vmatprep.subr.mxu0 0.0
          %2964 = vmatpush1.xpose.msra.mxu0 0.0
          %2965 = vmatprep.subr.mxu0 0.0
          %2966 = vmatpush1.xpose.msra.mxu0 0.0
          %2967 = vmatprep.subr.mxu0 0.0
          %2968 = vmatpush1.xpose.msra.mxu0 0.0
          %2969 = vmatprep.subr.mxu0 0.0
          %2970 = vmatpush1.xpose.msra.mxu0 0.0
          %2971 = vmatprep.subr.mxu0 0.0
          %2972 = vmatpush1.xpose.msra.mxu0 0.0
          %2973 = vmatprep.subr.mxu0 0.0
          %2974 = vmatpush1.xpose.msra.mxu0 0.0
          %2975 = vmatprep.subr.mxu0 0.0
          %2976 = vmatpush1.xpose.msra.mxu0 0.0
          %2977 = vmatprep.subr.mxu0 0.0
          %2978 = vmatpush1.xpose.msra.mxu0 0.0
          %2979 = vmatprep.subr.mxu0 0.0
          %2980 = vmatpush1.xpose.msra.mxu0 0.0
          %2981 = vmatprep.subr.mxu0 0.0
          %2982 = vmatpush1.xpose.msra.mxu0 0.0
          %2983 = vmatprep.subr.mxu0 0.0
          %2984 = vmatpush1.xpose.msra.mxu0 0.0
          %2985 = vmatprep.subr.mxu0 0.0
          %2986 = vmatpush1.xpose.msra.mxu0 0.0
          %2987 = vmatprep.subr.mxu0 0.0
          %2988 = vmatpush1.xpose.msra.mxu0 0.0
          %2989 = vmatprep.subr.mxu0 0.0
          %2990 = vmatpush1.xpose.msra.mxu0 0.0
          %2991 = vmatprep.subr.mxu0 0.0
          %2992 = vmatpush1.xpose.msra.mxu0 0.0
          %2993 = vmatprep.subr.mxu0 0.0
          %2994 = vmatpush1.xpose.msra.mxu0 0.0
          %2995 = vmatprep.subr.mxu0 0.0
          %2996 = vmatpush1.xpose.msra.mxu0 0.0
          %2997 = vmatprep.subr.mxu0 0.0
          %2998 = vmatpush1.xpose.msra.mxu0 0.0
          %2999 = vmatprep.subr.mxu0 0.0
          %3000 = vmatpush1.xpose.msra.mxu0 0.0
          %3001 = vmatprep.subr.mxu0 0.0
          %3002 = vmatpush1.xpose.msra.mxu0 0.0
          %3003 = vmatprep.subr.mxu0 0.0
          %3004 = vmatpush1.xpose.msra.mxu0 0.0
          %3005 = vmatprep.subr.mxu0 0.0
          %3006 = vmatpush1.xpose.msra.mxu0 0.0
          %3007 = vmatprep.subr.mxu0 0.0
          %3008 = vmatpush1.xpose.msra.mxu0 0.0
          %3009 = vmatprep.subr.mxu0 0.0
          %3010 = vmatpush1.xpose.msra.mxu0 0.0
          %3011 = vmatprep.subr.mxu0 0.0
          %3012 = vmatpush1.xpose.msra.mxu0 0.0
          %3013 = vmatprep.subr.mxu0 0.0
          %3014 = vmatpush1.xpose.msra.mxu0 0.0
          %3015 = vmatprep.subr.mxu0 0.0
          %3016 = vmatpush1.xpose.msra.mxu0 0.0
          %3017 = vmatprep.subr.mxu0 0.0
          %3018 = vmatpush1.xpose.msra.mxu0 0.0
          %3019 = vmatprep.subr.mxu0 0.0
          %3020 = vmatpush1.xpose.msra.mxu0 0.0
          %3021 = vmatprep.subr.mxu0 0.0
          %3022 = vmatpush1.xpose.msra.mxu0 0.0
          %3023 = vmatprep.mubr.f32.mxu0 0.0
          %3024 = vmatmul.mubr.f32.gmra.mrb[0].mxu0 %v2951
          %v3025 = vpop.f32.mrb[0].mxu0
          %v3026 = vadd.f32 0.0, %v3025
          %v3027 = vpop.f32.mrb[0].mxu0
          %3028 = vmatprep.mubr.f32.mxu0 0.0
          %3029 = vmatmul.mubr.f32.gmra.mrb[0].mxu0 %v2953
          %v3030 = vpop.f32.mrb[0].mxu0
          %v3031 = vadd.f32 0.0, %v3030
          %v3032 = vpop.f32.mrb[0].mxu0
          %3033 = vdwg.mxu0
          %v3034 = vsel %vm1216, %v3026, -inf
          %3035 = vmax.xlane.f32.xlu0 %v3034
          %v3036 = vpop.xlane.xlu0 %3035
          %v3037 = vsel %vm1216, %v3031, -inf
          %3038 = vmax.xlane.f32.xlu0 %v3037
          %v3039 = vpop.xlane.xlu0 %3038
          %v3040 = vsub.f32 %v3026, %v3036
          %v3041 = vsub.f32 %v3031, %v3039
          %v3042 = vmul.f32 %v3040, 1.442695
          %v3043 = vpow.pop %v3042
          %v3044 = vmul.f32 %v3041, 1.442695
          %v3045 = vpow.pop %v3044
          %v3046 = vsel %vm1216, %v3043, 0.0
          %3047 = vadd.xlane.f32.xlu0 %v3046
          %v3048 = vpop.xlane.xlu0 %3047
          %v3049 = vsel %vm1216, %v3045, 0.0
          %3050 = vadd.xlane.f32.xlu0 %v3049
          %v3051 = vpop.xlane.xlu0 %3050
          %v3052 = vrcp.pop %v3048
          %v3053 = vmul.f32 1.0, %v3052
          %v3054 = vrcp.pop %v3051
          %v3055 = vmul.f32 1.0, %v3054
          %v3056 = vmul.f32 %v3043, %v3053
          %v3057 = vmul.f32 %v3045, %v3055
          %3060 = vrot.lane.b32.xlu0 %v2741, 124
          %v3061 = vpop.permute.xlu0 %3060
          %3062 = vrot.lane.b32.xlu0 %v2746, 124
          %v3063 = vpop.permute.xlu0 %3062
          %v3067 = vsel %vm1216, %v3056, 0
          %v3070 = vsel %vm1216, %v3057, 0
          %3072 = vmatprep.subr.mxu0 0.0
          %3073 = vmatpush1.msra.mxu0 %v3061
          %3074 = vmatprep.subr.mxu0 0.0
          %3075 = vmatpush1.msra.mxu0 %v3063
          %3076 = vmatprep.subr.mxu0 0.0
          %3077 = vmatpush1.msra.mxu0 0.0
          %3078 = vmatprep.subr.mxu0 0.0
          %3079 = vmatpush1.msra.mxu0 0.0
          %3080 = vmatprep.subr.mxu0 0.0
          %3081 = vmatpush1.msra.mxu0 0.0
          %3082 = vmatprep.subr.mxu0 0.0
          %3083 = vmatpush1.msra.mxu0 0.0
          %3084 = vmatprep.subr.mxu0 0.0
          %3085 = vmatpush1.msra.mxu0 0.0
          %3086 = vmatprep.subr.mxu0 0.0
          %3087 = vmatpush1.msra.mxu0 0.0
          %3088 = vmatprep.subr.mxu0 0.0
          %3089 = vmatpush1.msra.mxu0 0.0
          %3090 = vmatprep.subr.mxu0 0.0
          %3091 = vmatpush1.msra.mxu0 0.0
          %3092 = vmatprep.subr.mxu0 0.0
          %3093 = vmatpush1.msra.mxu0 0.0
          %3094 = vmatprep.subr.mxu0 0.0
          %3095 = vmatpush1.msra.mxu0 0.0
          %3096 = vmatprep.subr.mxu0 0.0
          %3097 = vmatpush1.msra.mxu0 0.0
          %3098 = vmatprep.subr.mxu0 0.0
          %3099 = vmatpush1.msra.mxu0 0.0
          %3100 = vmatprep.subr.mxu0 0.0
          %3101 = vmatpush1.msra.mxu0 0.0
          %3102 = vmatprep.subr.mxu0 0.0
          %3103 = vmatpush1.msra.mxu0 0.0
          %3104 = vmatprep.subr.mxu0 0.0
          %3105 = vmatpush1.msra.mxu0 0.0
          %3106 = vmatprep.subr.mxu0 0.0
          %3107 = vmatpush1.msra.mxu0 0.0
          %3108 = vmatprep.subr.mxu0 0.0
          %3109 = vmatpush1.msra.mxu0 0.0
          %3110 = vmatprep.subr.mxu0 0.0
          %3111 = vmatpush1.msra.mxu0 0.0
          %3112 = vmatprep.subr.mxu0 0.0
          %3113 = vmatpush1.msra.mxu0 0.0
          %3114 = vmatprep.subr.mxu0 0.0
          %3115 = vmatpush1.msra.mxu0 0.0
          %3116 = vmatprep.subr.mxu0 0.0
          %3117 = vmatpush1.msra.mxu0 0.0
          %3118 = vmatprep.subr.mxu0 0.0
          %3119 = vmatpush1.msra.mxu0 0.0
          %3120 = vmatprep.subr.mxu0 0.0
          %3121 = vmatpush1.msra.mxu0 0.0
          %3122 = vmatprep.subr.mxu0 0.0
          %3123 = vmatpush1.msra.mxu0 0.0
          %3124 = vmatprep.subr.mxu0 0.0
          %3125 = vmatpush1.msra.mxu0 0.0
          %3126 = vmatprep.subr.mxu0 0.0
          %3127 = vmatpush1.msra.mxu0 0.0
          %3128 = vmatprep.subr.mxu0 0.0
          %3129 = vmatpush1.msra.mxu0 0.0
          %3130 = vmatprep.subr.mxu0 0.0
          %3131 = vmatpush1.msra.mxu0 0.0
          %3132 = vmatprep.subr.mxu0 0.0
          %3133 = vmatpush1.msra.mxu0 0.0
          %3134 = vmatprep.subr.mxu0 0.0
          %3135 = vmatpush1.msra.mxu0 0.0
          %3136 = vmatprep.mubr.f32.mxu0 0.0
          %3137 = vmatmul.mubr.f32.gmra.mrb[0].mxu0 %v3067
          %v3138 = vpop.f32.mrb[0].mxu0
          %v3139 = vadd.f32 0.0, %v3138
          %v3140 = vpop.f32.mrb[0].mxu0
          %3141 = vmatprep.mubr.f32.mxu0 0.0
          %3142 = vmatmul.mubr.f32.gmra.mrb[0].mxu0 %v3070
          %v3143 = vpop.f32.mrb[0].mxu0
          %v3144 = vadd.f32 0.0, %v3143
          %v3145 = vpop.f32.mrb[0].mxu0
          %3146 = vdwg.mxu0
          %3149 = vrot.lane.b32.xlu0 %v3139, 4
          %v3150 = vpop.permute.xlu0 %3149
          %3151 = vrot.lane.b32.xlu0 %v3144, 4
          %v3152 = vpop.permute.xlu0 %3151
          %3155 = vst.msk [vmem:[#allocation2] sm:$0xff] %vm1536, %v3150
          %3156 = vst.msk [vmem:[#allocation2 + $0x8] sm:$0xff] %vm1536, %v3152
          %v3157 = vld [vmem:[#allocation2] sm:$0xff]
          %v3158 = vld [vmem:[#allocation2 + $0x8] sm:$0xff]
          %s3159 = scalar_lea.vmem %s1, 16
          %v3160 = vld [vmem:[%s3159] sm:$0xff]
          %v3161 = vld [vmem:[%s3159 + $0x8] sm:$0xff]
          %v3163 = vsel %vm1216, %v3160, 0
          %v3166 = vsel %vm1216, %v3161, 0
          %3168 = vmatprep.subr.mxu0 0.0
          %3169 = vmatpush1.msra.mxu0 %v3157
          %3170 = vmatprep.subr.mxu0 0.0
          %3171 = vmatpush1.msra.mxu0 %v3158
          %3172 = vmatprep.subr.mxu0 0.0
          %3173 = vmatpush1.msra.mxu0 0.0
          %3174 = vmatprep.subr.mxu0 0.0
          %3175 = vmatpush1.msra.mxu0 0.0
          %3176 = vmatprep.subr.mxu0 0.0
          %3177 = vmatpush1.msra.mxu0 0.0
          %3178 = vmatprep.subr.mxu0 0.0
          %3179 = vmatpush1.msra.mxu0 0.0
          %3180 = vmatprep.subr.mxu0 0.0
          %3181 = vmatpush1.msra.mxu0 0.0
          %3182 = vmatprep.subr.mxu0 0.0
          %3183 = vmatpush1.msra.mxu0 0.0
          %3184 = vmatprep.subr.mxu0 0.0
          %3185 = vmatpush1.msra.mxu0 0.0
          %3186 = vmatprep.subr.mxu0 0.0
          %3187 = vmatpush1.msra.mxu0 0.0
          %3188 = vmatprep.subr.mxu0 0.0
          %3189 = vmatpush1.msra.mxu0 0.0
          %3190 = vmatprep.subr.mxu0 0.0
          %3191 = vmatpush1.msra.mxu0 0.0
          %3192 = vmatprep.subr.mxu0 0.0
          %3193 = vmatpush1.msra.mxu0 0.0
          %3194 = vmatprep.subr.mxu0 0.0
          %3195 = vmatpush1.msra.mxu0 0.0
          %3196 = vmatprep.subr.mxu0 0.0
          %3197 = vmatpush1.msra.mxu0 0.0
          %3198 = vmatprep.subr.mxu0 0.0
          %3199 = vmatpush1.msra.mxu0 0.0
          %3200 = vmatprep.subr.mxu0 0.0
          %3201 = vmatpush1.msra.mxu0 0.0
          %3202 = vmatprep.subr.mxu0 0.0
          %3203 = vmatpush1.msra.mxu0 0.0
          %3204 = vmatprep.subr.mxu0 0.0
          %3205 = vmatpush1.msra.mxu0 0.0
          %3206 = vmatprep.subr.mxu0 0.0
          %3207 = vmatpush1.msra.mxu0 0.0
          %3208 = vmatprep.subr.mxu0 0.0
          %3209 = vmatpush1.msra.mxu0 0.0
          %3210 = vmatprep.subr.mxu0 0.0
          %3211 = vmatpush1.msra.mxu0 0.0
          %3212 = vmatprep.subr.mxu0 0.0
          %3213 = vmatpush1.msra.mxu0 0.0
          %3214 = vmatprep.subr.mxu0 0.0
          %3215 = vmatpush1.msra.mxu0 0.0
          %3216 = vmatprep.subr.mxu0 0.0
          %3217 = vmatpush1.msra.mxu0 0.0
          %3218 = vmatprep.subr.mxu0 0.0
          %3219 = vmatpush1.msra.mxu0 0.0
          %3220 = vmatprep.subr.mxu0 0.0
          %3221 = vmatpush1.msra.mxu0 0.0
          %3222 = vmatprep.subr.mxu0 0.0
          %3223 = vmatpush1.msra.mxu0 0.0
          %3224 = vmatprep.subr.mxu0 0.0
          %3225 = vmatpush1.msra.mxu0 0.0
          %3226 = vmatprep.subr.mxu0 0.0
          %3227 = vmatpush1.msra.mxu0 0.0
          %3228 = vmatprep.subr.mxu0 0.0
          %3229 = vmatpush1.msra.mxu0 0.0
          %3230 = vmatprep.subr.mxu0 0.0
          %3231 = vmatpush1.msra.mxu0 0.0
          %3232 = vmatprep.mubr.f32.mxu0 0.0
          %3233 = vmatmul.mubr.f32.gmra.mrb[0].mxu0 %v3163
          %v3234 = vpop.f32.mrb[0].mxu0
          %v3235 = vadd.f32 0.0, %v3234
          %v3236 = vpop.f32.mrb[0].mxu0
          %3237 = vmatprep.mubr.f32.mxu0 0.0
          %3238 = vmatmul.mubr.f32.gmra.mrb[0].mxu0 %v3166
          %v3239 = vpop.f32.mrb[0].mxu0
          %v3240 = vadd.f32 0.0, %v3239
          %v3241 = vpop.f32.mrb[0].mxu0
          %3242 = vdwg.mxu0
          %3245 = vrot.lane.b32.xlu0 %v3235, 16
          %v3246 = vpop.permute.xlu0 %3245
          %3247 = vrot.lane.b32.xlu0 %v3240, 16
          %v3248 = vpop.permute.xlu0 %3247
          %vm3251 = vcmask 195712
          %3252 = vst.msk [vmem:[#allocation3] sm:$0xff] %vm3251, %v3246
          %3253 = vst.msk [vmem:[#allocation3 + $0x8] sm:$0xff] %vm3251, %v3248
          %s3254 = scalar_lea.vmem %s4, 96
          %v3255 = vld [vmem:[%s3254] sm:$0xff]
          %v3256 = vld [vmem:[%s3254 + $0x8] sm:$0xff]
          %v3257 = vld [vmem:[%s3254 + $0x10] sm:$0xff]
          %v3258 = vld [vmem:[%s3254 + $0x18] sm:$0xff]
          %s3259 = scalar_lea.vmem [#allocation6], 3
          %v3260 = vld [vmem:[%s3259] sm:$0x1]
          %v3262 = vlaneseq
          %v3263 = vshrl.u32 %v3262, 7
          %v3264 = vsub.s32 0, %v3263
          %v3265 = vrot.slane %v3260, %v3264
          %3267 = vmatprep.subr.mxu0 0.0
          %3268 = vmatpush1.msra.mxu0 %v3255
          %3269 = vmatprep.subr.mxu0 0.0
          %3270 = vmatpush1.msra.mxu0 %v3256
          %3271 = vmatprep.subr.mxu0 0.0
          %3272 = vmatpush1.msra.mxu0 %v3257
          %3273 = vmatprep.subr.mxu0 0.0
          %3274 = vmatpush1.msra.mxu0 %v3258
          %3275 = vmatprep.subr.mxu0 0.0
          %3276 = vmatpush1.msra.mxu0 0.0
          %3277 = vmatprep.subr.mxu0 0.0
          %3278 = vmatpush1.msra.mxu0 0.0
          %3279 = vmatprep.subr.mxu0 0.0
          %3280 = vmatpush1.msra.mxu0 0.0
          %3281 = vmatprep.subr.mxu0 0.0
          %3282 = vmatpush1.msra.mxu0 0.0
          %3283 = vmatprep.subr.mxu0 0.0
          %3284 = vmatpush1.msra.mxu0 0.0
          %3285 = vmatprep.subr.mxu0 0.0
          %3286 = vmatpush1.msra.mxu0 0.0
          %3287 = vmatprep.subr.mxu0 0.0
          %3288 = vmatpush1.msra.mxu0 0.0
          %3289 = vmatprep.subr.mxu0 0.0
          %3290 = vmatpush1.msra.mxu0 0.0
          %3291 = vmatprep.subr.mxu0 0.0
          %3292 = vmatpush1.msra.mxu0 0.0
          %3293 = vmatprep.subr.mxu0 0.0
          %3294 = vmatpush1.msra.mxu0 0.0
          %3295 = vmatprep.subr.mxu0 0.0
          %3296 = vmatpush1.msra.mxu0 0.0
          %3297 = vmatprep.subr.mxu0 0.0
          %3298 = vmatpush1.msra.mxu0 0.0
          %3299 = vmatprep.subr.mxu0 0.0
          %3300 = vmatpush1.msra.mxu0 0.0
          %3301 = vmatprep.subr.mxu0 0.0
          %3302 = vmatpush1.msra.mxu0 0.0
          %3303 = vmatprep.subr.mxu0 0.0
          %3304 = vmatpush1.msra.mxu0 0.0
          %3305 = vmatprep.subr.mxu0 0.0
          %3306 = vmatpush1.msra.mxu0 0.0
          %3307 = vmatprep.subr.mxu0 0.0
          %3308 = vmatpush1.msra.mxu0 0.0
          %3309 = vmatprep.subr.mxu0 0.0
          %3310 = vmatpush1.msra.mxu0 0.0
          %3311 = vmatprep.subr.mxu0 0.0
          %3312 = vmatpush1.msra.mxu0 0.0
          %3313 = vmatprep.subr.mxu0 0.0
          %3314 = vmatpush1.msra.mxu0 0.0
          %3315 = vmatprep.subr.mxu0 0.0
          %3316 = vmatpush1.msra.mxu0 0.0
          %3317 = vmatprep.subr.mxu0 0.0
          %3318 = vmatpush1.msra.mxu0 0.0
          %3319 = vmatprep.subr.mxu0 0.0
          %3320 = vmatpush1.msra.mxu0 0.0
          %3321 = vmatprep.subr.mxu0 0.0
          %3322 = vmatpush1.msra.mxu0 0.0
          %3323 = vmatprep.subr.mxu0 0.0
          %3324 = vmatpush1.msra.mxu0 0.0
          %3325 = vmatprep.subr.mxu0 0.0
          %3326 = vmatpush1.msra.mxu0 0.0
          %3327 = vmatprep.subr.mxu0 0.0
          %3328 = vmatpush1.msra.mxu0 0.0
          %3329 = vmatprep.subr.mxu0 0.0
          %3330 = vmatpush1.msra.mxu0 0.0
          %3331 = vmatprep.mubr.f32.mxu0 0.0
          %3332 = vmatmul.mubr.f32.gmra.mrb[0].mxu0 %v790
          %v3333 = vpop.f32.mrb[0].mxu0
          %v3334 = vadd.f32 %v3265, %v3333
          %v3335 = vpop.f32.mrb[0].mxu0
          %3336 = vmatprep.mubr.f32.mxu0 0.0
          %3337 = vmatmul.mubr.f32.gmra.mrb[0].mxu0 %v793
          %v3338 = vpop.f32.mrb[0].mxu0
          %v3339 = vadd.f32 %v3265, %v3338
          %v3340 = vpop.f32.mrb[0].mxu0
          %3341 = vdwg.mxu0
          %s3342 = scalar_lea.vmem %s6, 24
          %v3343 = vld [vmem:[%s3342] sm:$0xff]
          %s3344 = scalar_lea.vmem %s7, 3
          %v3345 = vld [vmem:[%s3344] sm:$0x1]
          %v3347 = vlaneseq
          %v3348 = vshrl.u32 %v3347, 7
          %v3349 = vsub.s32 0, %v3348
          %v3350 = vrot.slane %v3345, %v3349
          %v3353 = vsel %vm878, %v3334, 0
          %v3356 = vsel %vm878, %v3339, 0
          %3358 = vmatprep.subr.mxu0 0.0
          %3359 = vmatpush1.msra.mxu0 %v3343
          %3360 = vmatprep.subr.mxu0 0.0
          %3361 = vmatpush1.msra.mxu0 0.0
          %3362 = vmatprep.subr.mxu0 0.0
          %3363 = vmatpush1.msra.mxu0 0.0
          %3364 = vmatprep.subr.mxu0 0.0
          %3365 = vmatpush1.msra.mxu0 0.0
          %3366 = vmatprep.subr.mxu0 0.0
          %3367 = vmatpush1.msra.mxu0 0.0
          %3368 = vmatprep.subr.mxu0 0.0
          %3369 = vmatpush1.msra.mxu0 0.0
          %3370 = vmatprep.subr.mxu0 0.0
          %3371 = vmatpush1.msra.mxu0 0.0
          %3372 = vmatprep.subr.mxu0 0.0
          %3373 = vmatpush1.msra.mxu0 0.0
          %3374 = vmatprep.subr.mxu0 0.0
          %3375 = vmatpush1.msra.mxu0 0.0
          %3376 = vmatprep.subr.mxu0 0.0
          %3377 = vmatpush1.msra.mxu0 0.0
          %3378 = vmatprep.subr.mxu0 0.0
          %3379 = vmatpush1.msra.mxu0 0.0
          %3380 = vmatprep.subr.mxu0 0.0
          %3381 = vmatpush1.msra.mxu0 0.0
          %3382 = vmatprep.subr.mxu0 0.0
          %3383 = vmatpush1.msra.mxu0 0.0
          %3384 = vmatprep.subr.mxu0 0.0
          %3385 = vmatpush1.msra.mxu0 0.0
          %3386 = vmatprep.subr.mxu0 0.0
          %3387 = vmatpush1.msra.mxu0 0.0
          %3388 = vmatprep.subr.mxu0 0.0
          %3389 = vmatpush1.msra.mxu0 0.0
          %3390 = vmatprep.subr.mxu0 0.0
          %3391 = vmatpush1.msra.mxu0 0.0
          %3392 = vmatprep.subr.mxu0 0.0
          %3393 = vmatpush1.msra.mxu0 0.0
          %3394 = vmatprep.subr.mxu0 0.0
          %3395 = vmatpush1.msra.mxu0 0.0
          %3396 = vmatprep.subr.mxu0 0.0
          %3397 = vmatpush1.msra.mxu0 0.0
          %3398 = vmatprep.subr.mxu0 0.0
          %3399 = vmatpush1.msra.mxu0 0.0
          %3400 = vmatprep.subr.mxu0 0.0
          %3401 = vmatpush1.msra.mxu0 0.0
          %3402 = vmatprep.subr.mxu0 0.0
          %3403 = vmatpush1.msra.mxu0 0.0
          %3404 = vmatprep.subr.mxu0 0.0
          %3405 = vmatpush1.msra.mxu0 0.0
          %3406 = vmatprep.subr.mxu0 0.0
          %3407 = vmatpush1.msra.mxu0 0.0
          %3408 = vmatprep.subr.mxu0 0.0
          %3409 = vmatpush1.msra.mxu0 0.0
          %3410 = vmatprep.subr.mxu0 0.0
          %3411 = vmatpush1.msra.mxu0 0.0
          %3412 = vmatprep.subr.mxu0 0.0
          %3413 = vmatpush1.msra.mxu0 0.0
          %3414 = vmatprep.subr.mxu0 0.0
          %3415 = vmatpush1.msra.mxu0 0.0
          %3416 = vmatprep.subr.mxu0 0.0
          %3417 = vmatpush1.msra.mxu0 0.0
          %3418 = vmatprep.subr.mxu0 0.0
          %3419 = vmatpush1.msra.mxu0 0.0
          %3420 = vmatprep.subr.mxu0 0.0
          %3421 = vmatpush1.msra.mxu0 0.0
          %3422 = vmatprep.mubr.f32.mxu0 0.0
          %3423 = vmatmul.mubr.f32.gmra.mrb[0].mxu0 %v3353
          %v3424 = vpop.f32.mrb[0].mxu0
          %v3425 = vadd.f32 %v3350, %v3424
          %v3426 = vpop.f32.mrb[0].mxu0
          %3427 = vmatprep.mubr.f32.mxu0 0.0
          %3428 = vmatmul.mubr.f32.gmra.mrb[0].mxu0 %v3356
          %v3429 = vpop.f32.mrb[0].mxu0
          %v3430 = vadd.f32 %v3350, %v3429
          %v3431 = vpop.f32.mrb[0].mxu0
          %3432 = vdwg.mxu0
          %v3433 = vmul.f32 %v3425, 0.35355338
          %v3434 = vmul.f32 %v3430, 0.35355338
          %s3435 = scalar_lea.vmem %s8, 24
          %v3436 = vld [vmem:[%s3435] sm:$0xff]
          %s3437 = scalar_lea.vmem %s9, 3
          %v3438 = vld [vmem:[%s3437] sm:$0x1]
          %v3440 = vlaneseq
          %v3441 = vshrl.u32 %v3440, 7
          %v3442 = vsub.s32 0, %v3441
          %v3443 = vrot.slane %v3438, %v3442
          %3445 = vmatprep.subr.mxu0 0.0
          %3446 = vmatpush1.msra.mxu0 %v3436
          %3447 = vmatprep.subr.mxu0 0.0
          %3448 = vmatpush1.msra.mxu0 0.0
          %3449 = vmatprep.subr.mxu0 0.0
          %3450 = vmatpush1.msra.mxu0 0.0
          %3451 = vmatprep.subr.mxu0 0.0
          %3452 = vmatpush1.msra.mxu0 0.0
          %3453 = vmatprep.subr.mxu0 0.0
          %3454 = vmatpush1.msra.mxu0 0.0
          %3455 = vmatprep.subr.mxu0 0.0
          %3456 = vmatpush1.msra.mxu0 0.0
          %3457 = vmatprep.subr.mxu0 0.0
          %3458 = vmatpush1.msra.mxu0 0.0
          %3459 = vmatprep.subr.mxu0 0.0
          %3460 = vmatpush1.msra.mxu0 0.0
          %3461 = vmatprep.subr.mxu0 0.0
          %3462 = vmatpush1.msra.mxu0 0.0
          %3463 = vmatprep.subr.mxu0 0.0
          %3464 = vmatpush1.msra.mxu0 0.0
          %3465 = vmatprep.subr.mxu0 0.0
          %3466 = vmatpush1.msra.mxu0 0.0
          %3467 = vmatprep.subr.mxu0 0.0
          %3468 = vmatpush1.msra.mxu0 0.0
          %3469 = vmatprep.subr.mxu0 0.0
          %3470 = vmatpush1.msra.mxu0 0.0
          %3471 = vmatprep.subr.mxu0 0.0
          %3472 = vmatpush1.msra.mxu0 0.0
          %3473 = vmatprep.subr.mxu0 0.0
          %3474 = vmatpush1.msra.mxu0 0.0
          %3475 = vmatprep.subr.mxu0 0.0
          %3476 = vmatpush1.msra.mxu0 0.0
          %3477 = vmatprep.subr.mxu0 0.0
          %3478 = vmatpush1.msra.mxu0 0.0
          %3479 = vmatprep.subr.mxu0 0.0
          %3480 = vmatpush1.msra.mxu0 0.0
          %3481 = vmatprep.subr.mxu0 0.0
          %3482 = vmatpush1.msra.mxu0 0.0
          %3483 = vmatprep.subr.mxu0 0.0
          %3484 = vmatpush1.msra.mxu0 0.0
          %3485 = vmatprep.subr.mxu0 0.0
          %3486 = vmatpush1.msra.mxu0 0.0
          %3487 = vmatprep.subr.mxu0 0.0
          %3488 = vmatpush1.msra.mxu0 0.0
          %3489 = vmatprep.subr.mxu0 0.0
          %3490 = vmatpush1.msra.mxu0 0.0
          %3491 = vmatprep.subr.mxu0 0.0
          %3492 = vmatpush1.msra.mxu0 0.0
          %3493 = vmatprep.subr.mxu0 0.0
          %3494 = vmatpush1.msra.mxu0 0.0
          %3495 = vmatprep.subr.mxu0 0.0
          %3496 = vmatpush1.msra.mxu0 0.0
          %3497 = vmatprep.subr.mxu0 0.0
          %3498 = vmatpush1.msra.mxu0 0.0
          %3499 = vmatprep.subr.mxu0 0.0
          %3500 = vmatpush1.msra.mxu0 0.0
          %3501 = vmatprep.subr.mxu0 0.0
          %3502 = vmatpush1.msra.mxu0 0.0
          %3503 = vmatprep.subr.mxu0 0.0
          %3504 = vmatpush1.msra.mxu0 0.0
          %3505 = vmatprep.subr.mxu0 0.0
          %3506 = vmatpush1.msra.mxu0 0.0
          %3507 = vmatprep.subr.mxu0 0.0
          %3508 = vmatpush1.msra.mxu0 0.0
          %3509 = vmatprep.mubr.f32.mxu0 0.0
          %3510 = vmatmul.mubr.f32.gmra.mrb[0].mxu0 %v3353
          %v3511 = vpop.f32.mrb[0].mxu0
          %v3512 = vadd.f32 %v3443, %v3511
          %v3513 = vpop.f32.mrb[0].mxu0
          %3514 = vmatprep.mubr.f32.mxu0 0.0
          %3515 = vmatmul.mubr.f32.gmra.mrb[0].mxu0 %v3356
          %v3516 = vpop.f32.mrb[0].mxu0
          %v3517 = vadd.f32 %v3443, %v3516
          %v3518 = vpop.f32.mrb[0].mxu0
          %3519 = vdwg.mxu0
          %s3520 = scalar_lea.vmem %s10, 24
          %v3521 = vld [vmem:[%s3520] sm:$0xff]
          %s3522 = scalar_lea.vmem %s11, 3
          %v3523 = vld [vmem:[%s3522] sm:$0x1]
          %v3525 = vlaneseq
          %v3526 = vshrl.u32 %v3525, 7
          %v3527 = vsub.s32 0, %v3526
          %v3528 = vrot.slane %v3523, %v3527
          %3530 = vmatprep.subr.mxu0 0.0
          %3531 = vmatpush1.msra.mxu0 %v3521
          %3532 = vmatprep.subr.mxu0 0.0
          %3533 = vmatpush1.msra.mxu0 0.0
          %3534 = vmatprep.subr.mxu0 0.0
          %3535 = vmatpush1.msra.mxu0 0.0
          %3536 = vmatprep.subr.mxu0 0.0
          %3537 = vmatpush1.msra.mxu0 0.0
          %3538 = vmatprep.subr.mxu0 0.0
          %3539 = vmatpush1.msra.mxu0 0.0
          %3540 = vmatprep.subr.mxu0 0.0
          %3541 = vmatpush1.msra.mxu0 0.0
          %3542 = vmatprep.subr.mxu0 0.0
          %3543 = vmatpush1.msra.mxu0 0.0
          %3544 = vmatprep.subr.mxu0 0.0
          %3545 = vmatpush1.msra.mxu0 0.0
          %3546 = vmatprep.subr.mxu0 0.0
          %3547 = vmatpush1.msra.mxu0 0.0
          %3548 = vmatprep.subr.mxu0 0.0
          %3549 = vmatpush1.msra.mxu0 0.0
          %3550 = vmatprep.subr.mxu0 0.0
          %3551 = vmatpush1.msra.mxu0 0.0
          %3552 = vmatprep.subr.mxu0 0.0
          %3553 = vmatpush1.msra.mxu0 0.0
          %3554 = vmatprep.subr.mxu0 0.0
          %3555 = vmatpush1.msra.mxu0 0.0
          %3556 = vmatprep.subr.mxu0 0.0
          %3557 = vmatpush1.msra.mxu0 0.0
          %3558 = vmatprep.subr.mxu0 0.0
          %3559 = vmatpush1.msra.mxu0 0.0
          %3560 = vmatprep.subr.mxu0 0.0
          %3561 = vmatpush1.msra.mxu0 0.0
          %3562 = vmatprep.subr.mxu0 0.0
          %3563 = vmatpush1.msra.mxu0 0.0
          %3564 = vmatprep.subr.mxu0 0.0
          %3565 = vmatpush1.msra.mxu0 0.0
          %3566 = vmatprep.subr.mxu0 0.0
          %3567 = vmatpush1.msra.mxu0 0.0
          %3568 = vmatprep.subr.mxu0 0.0
          %3569 = vmatpush1.msra.mxu0 0.0
          %3570 = vmatprep.subr.mxu0 0.0
          %3571 = vmatpush1.msra.mxu0 0.0
          %3572 = vmatprep.subr.mxu0 0.0
          %3573 = vmatpush1.msra.mxu0 0.0
          %3574 = vmatprep.subr.mxu0 0.0
          %3575 = vmatpush1.msra.mxu0 0.0
          %3576 = vmatprep.subr.mxu0 0.0
          %3577 = vmatpush1.msra.mxu0 0.0
          %3578 = vmatprep.subr.mxu0 0.0
          %3579 = vmatpush1.msra.mxu0 0.0
          %3580 = vmatprep.subr.mxu0 0.0
          %3581 = vmatpush1.msra.mxu0 0.0
          %3582 = vmatprep.subr.mxu0 0.0
          %3583 = vmatpush1.msra.mxu0 0.0
          %3584 = vmatprep.subr.mxu0 0.0
          %3585 = vmatpush1.msra.mxu0 0.0
          %3586 = vmatprep.subr.mxu0 0.0
          %3587 = vmatpush1.msra.mxu0 0.0
          %3588 = vmatprep.subr.mxu0 0.0
          %3589 = vmatpush1.msra.mxu0 0.0
          %3590 = vmatprep.subr.mxu0 0.0
          %3591 = vmatpush1.msra.mxu0 0.0
          %3592 = vmatprep.subr.mxu0 0.0
          %3593 = vmatpush1.msra.mxu0 0.0
          %3594 = vmatprep.mubr.f32.mxu0 0.0
          %3595 = vmatmul.mubr.f32.gmra.mrb[0].mxu0 %v3353
          %v3596 = vpop.f32.mrb[0].mxu0
          %v3597 = vadd.f32 %v3528, %v3596
          %v3598 = vpop.f32.mrb[0].mxu0
          %3599 = vmatprep.mubr.f32.mxu0 0.0
          %3600 = vmatmul.mubr.f32.gmra.mrb[0].mxu0 %v3356
          %v3601 = vpop.f32.mrb[0].mxu0
          %v3602 = vadd.f32 %v3528, %v3601
          %v3603 = vpop.f32.mrb[0].mxu0
          %3604 = vdwg.mxu0
          %v3606 = vsel %vm1128, %v3433, 0
          %v3609 = vsel %vm1128, %v3434, 0
          %v3612 = vsel %vm1128, %v3512, 0
          %v3615 = vsel %vm1128, %v3517, 0
          %3617 = vmatprep.subr.mxu0 0.0
          %3618 = vmatpush1.xpose.msra.mxu0 %v3612
          %3619 = vmatprep.subr.mxu0 0.0
          %3620 = vmatpush1.xpose.msra.mxu0 %v3615
          %3621 = vmatprep.subr.mxu0 0.0
          %3622 = vmatpush1.xpose.msra.mxu0 0.0
          %3623 = vmatprep.subr.mxu0 0.0
          %3624 = vmatpush1.xpose.msra.mxu0 0.0
          %3625 = vmatprep.subr.mxu0 0.0
          %3626 = vmatpush1.xpose.msra.mxu0 0.0
          %3627 = vmatprep.subr.mxu0 0.0
          %3628 = vmatpush1.xpose.msra.mxu0 0.0
          %3629 = vmatprep.subr.mxu0 0.0
          %3630 = vmatpush1.xpose.msra.mxu0 0.0
          %3631 = vmatprep.subr.mxu0 0.0
          %3632 = vmatpush1.xpose.msra.mxu0 0.0
          %3633 = vmatprep.subr.mxu0 0.0
          %3634 = vmatpush1.xpose.msra.mxu0 0.0
          %3635 = vmatprep.subr.mxu0 0.0
          %3636 = vmatpush1.xpose.msra.mxu0 0.0
          %3637 = vmatprep.subr.mxu0 0.0
          %3638 = vmatpush1.xpose.msra.mxu0 0.0
          %3639 = vmatprep.subr.mxu0 0.0
          %3640 = vmatpush1.xpose.msra.mxu0 0.0
          %3641 = vmatprep.subr.mxu0 0.0
          %3642 = vmatpush1.xpose.msra.mxu0 0.0
          %3643 = vmatprep.subr.mxu0 0.0
          %3644 = vmatpush1.xpose.msra.mxu0 0.0
          %3645 = vmatprep.subr.mxu0 0.0
          %3646 = vmatpush1.xpose.msra.mxu0 0.0
          %3647 = vmatprep.subr.mxu0 0.0
          %3648 = vmatpush1.xpose.msra.mxu0 0.0
          %3649 = vmatprep.subr.mxu0 0.0
          %3650 = vmatpush1.xpose.msra.mxu0 0.0
          %3651 = vmatprep.subr.mxu0 0.0
          %3652 = vmatpush1.xpose.msra.mxu0 0.0
          %3653 = vmatprep.subr.mxu0 0.0
          %3654 = vmatpush1.xpose.msra.mxu0 0.0
          %3655 = vmatprep.subr.mxu0 0.0
          %3656 = vmatpush1.xpose.msra.mxu0 0.0
          %3657 = vmatprep.subr.mxu0 0.0
          %3658 = vmatpush1.xpose.msra.mxu0 0.0
          %3659 = vmatprep.subr.mxu0 0.0
          %3660 = vmatpush1.xpose.msra.mxu0 0.0
          %3661 = vmatprep.subr.mxu0 0.0
          %3662 = vmatpush1.xpose.msra.mxu0 0.0
          %3663 = vmatprep.subr.mxu0 0.0
          %3664 = vmatpush1.xpose.msra.mxu0 0.0
          %3665 = vmatprep.subr.mxu0 0.0
          %3666 = vmatpush1.xpose.msra.mxu0 0.0
          %3667 = vmatprep.subr.mxu0 0.0
          %3668 = vmatpush1.xpose.msra.mxu0 0.0
          %3669 = vmatprep.subr.mxu0 0.0
          %3670 = vmatpush1.xpose.msra.mxu0 0.0
          %3671 = vmatprep.subr.mxu0 0.0
          %3672 = vmatpush1.xpose.msra.mxu0 0.0
          %3673 = vmatprep.subr.mxu0 0.0
          %3674 = vmatpush1.xpose.msra.mxu0 0.0
          %3675 = vmatprep.subr.mxu0 0.0
          %3676 = vmatpush1.xpose.msra.mxu0 0.0
          %3677 = vmatprep.subr.mxu0 0.0
          %3678 = vmatpush1.xpose.msra.mxu0 0.0
          %3679 = vmatprep.subr.mxu0 0.0
          %3680 = vmatpush1.xpose.msra.mxu0 0.0
          %3681 = vmatprep.mubr.f32.mxu0 0.0
          %3682 = vmatmul.mubr.f32.gmra.mrb[0].mxu0 %v3606
          %v3683 = vpop.f32.mrb[0].mxu0
          %v3684 = vadd.f32 0.0, %v3683
          %v3685 = vpop.f32.mrb[0].mxu0
          %3686 = vmatprep.mubr.f32.mxu0 0.0
          %3687 = vmatmul.mubr.f32.gmra.mrb[0].mxu0 %v3609
          %v3688 = vpop.f32.mrb[0].mxu0
          %v3689 = vadd.f32 0.0, %v3688
          %v3690 = vpop.f32.mrb[0].mxu0
          %3691 = vdwg.mxu0
          %v3692 = vsel %vm1216, %v3684, -inf
          %3693 = vmax.xlane.f32.xlu0 %v3692
          %v3694 = vpop.xlane.xlu0 %3693
          %v3695 = vsel %vm1216, %v3689, -inf
          %3696 = vmax.xlane.f32.xlu0 %v3695
          %v3697 = vpop.xlane.xlu0 %3696
          %v3698 = vsub.f32 %v3684, %v3694
          %v3699 = vsub.f32 %v3689, %v3697
          %v3700 = vmul.f32 %v3698, 1.442695
          %v3701 = vpow.pop %v3700
          %v3702 = vmul.f32 %v3699, 1.442695
          %v3703 = vpow.pop %v3702
          %v3704 = vsel %vm1216, %v3701, 0.0
          %3705 = vadd.xlane.f32.xlu0 %v3704
          %v3706 = vpop.xlane.xlu0 %3705
          %v3707 = vsel %vm1216, %v3703, 0.0
          %3708 = vadd.xlane.f32.xlu0 %v3707
          %v3709 = vpop.xlane.xlu0 %3708
          %v3710 = vrcp.pop %v3706
          %v3711 = vmul.f32 1.0, %v3710
          %v3712 = vrcp.pop %v3709
          %v3713 = vmul.f32 1.0, %v3712
          %v3714 = vmul.f32 %v3701, %v3711
          %v3715 = vmul.f32 %v3703, %v3713
          %v3717 = vsel %vm1216, %v3714, 0
          %v3720 = vsel %vm1216, %v3715, 0
          %3722 = vmatprep.subr.mxu0 0.0
          %3723 = vmatpush1.msra.mxu0 %v3597
          %3724 = vmatprep.subr.mxu0 0.0
          %3725 = vmatpush1.msra.mxu0 %v3602
          %3726 = vmatprep.subr.mxu0 0.0
          %3727 = vmatpush1.msra.mxu0 0.0
          %3728 = vmatprep.subr.mxu0 0.0
          %3729 = vmatpush1.msra.mxu0 0.0
          %3730 = vmatprep.subr.mxu0 0.0
          %3731 = vmatpush1.msra.mxu0 0.0
          %3732 = vmatprep.subr.mxu0 0.0
          %3733 = vmatpush1.msra.mxu0 0.0
          %3734 = vmatprep.subr.mxu0 0.0
          %3735 = vmatpush1.msra.mxu0 0.0
          %3736 = vmatprep.subr.mxu0 0.0
          %3737 = vmatpush1.msra.mxu0 0.0
          %3738 = vmatprep.subr.mxu0 0.0
          %3739 = vmatpush1.msra.mxu0 0.0
          %3740 = vmatprep.subr.mxu0 0.0
          %3741 = vmatpush1.msra.mxu0 0.0
          %3742 = vmatprep.subr.mxu0 0.0
          %3743 = vmatpush1.msra.mxu0 0.0
          %3744 = vmatprep.subr.mxu0 0.0
          %3745 = vmatpush1.msra.mxu0 0.0
          %3746 = vmatprep.subr.mxu0 0.0
          %3747 = vmatpush1.msra.mxu0 0.0
          %3748 = vmatprep.subr.mxu0 0.0
          %3749 = vmatpush1.msra.mxu0 0.0
          %3750 = vmatprep.subr.mxu0 0.0
          %3751 = vmatpush1.msra.mxu0 0.0
          %3752 = vmatprep.subr.mxu0 0.0
          %3753 = vmatpush1.msra.mxu0 0.0
          %3754 = vmatprep.subr.mxu0 0.0
          %3755 = vmatpush1.msra.mxu0 0.0
          %3756 = vmatprep.subr.mxu0 0.0
          %3757 = vmatpush1.msra.mxu0 0.0
          %3758 = vmatprep.subr.mxu0 0.0
          %3759 = vmatpush1.msra.mxu0 0.0
          %3760 = vmatprep.subr.mxu0 0.0
          %3761 = vmatpush1.msra.mxu0 0.0
          %3762 = vmatprep.subr.mxu0 0.0
          %3763 = vmatpush1.msra.mxu0 0.0
          %3764 = vmatprep.subr.mxu0 0.0
          %3765 = vmatpush1.msra.mxu0 0.0
          %3766 = vmatprep.subr.mxu0 0.0
          %3767 = vmatpush1.msra.mxu0 0.0
          %3768 = vmatprep.subr.mxu0 0.0
          %3769 = vmatpush1.msra.mxu0 0.0
          %3770 = vmatprep.subr.mxu0 0.0
          %3771 = vmatpush1.msra.mxu0 0.0
          %3772 = vmatprep.subr.mxu0 0.0
          %3773 = vmatpush1.msra.mxu0 0.0
          %3774 = vmatprep.subr.mxu0 0.0
          %3775 = vmatpush1.msra.mxu0 0.0
          %3776 = vmatprep.subr.mxu0 0.0
          %3777 = vmatpush1.msra.mxu0 0.0
          %3778 = vmatprep.subr.mxu0 0.0
          %3779 = vmatpush1.msra.mxu0 0.0
          %3780 = vmatprep.subr.mxu0 0.0
          %3781 = vmatpush1.msra.mxu0 0.0
          %3782 = vmatprep.subr.mxu0 0.0
          %3783 = vmatpush1.msra.mxu0 0.0
          %3784 = vmatprep.subr.mxu0 0.0
          %3785 = vmatpush1.msra.mxu0 0.0
          %3786 = vmatprep.mubr.f32.mxu0 0.0
          %3787 = vmatmul.mubr.f32.gmra.mrb[0].mxu0 %v3717
          %v3788 = vpop.f32.mrb[0].mxu0
          %v3789 = vadd.f32 0.0, %v3788
          %v3790 = vpop.f32.mrb[0].mxu0
          %3791 = vmatprep.mubr.f32.mxu0 0.0
          %3792 = vmatmul.mubr.f32.gmra.mrb[0].mxu0 %v3720
          %v3793 = vpop.f32.mrb[0].mxu0
          %v3794 = vadd.f32 0.0, %v3793
          %v3795 = vpop.f32.mrb[0].mxu0
          %3796 = vdwg.mxu0
          %3797 = vst.msk [vmem:[#allocation2] sm:$0xff] %vm1128, %v3789
          %3798 = vst.msk [vmem:[#allocation2 + $0x8] sm:$0xff] %vm1128, %v3794
          %3799 = vrot.lane.b32.xlu0 %v3433, 124
          %v3800 = vpop.permute.xlu0 %3799
          %3801 = vrot.lane.b32.xlu0 %v3434, 124
          %v3802 = vpop.permute.xlu0 %3801
          %3803 = vrot.lane.b32.xlu0 %v3512, 124
          %v3804 = vpop.permute.xlu0 %3803
          %3805 = vrot.lane.b32.xlu0 %v3517, 124
          %v3806 = vpop.permute.xlu0 %3805
          %v3807 = vsel %vm1128, %v3800, 0
          %v3809 = vsel %vm1128, %v3802, 0
          %v3811 = vsel %vm1128, %v3804, 0
          %v3813 = vsel %vm1128, %v3806, 0
          %3815 = vmatprep.subr.mxu0 0.0
          %3816 = vmatpush1.xpose.msra.mxu0 %v3811
          %3817 = vmatprep.subr.mxu0 0.0
          %3818 = vmatpush1.xpose.msra.mxu0 %v3813
          %3819 = vmatprep.subr.mxu0 0.0
          %3820 = vmatpush1.xpose.msra.mxu0 0.0
          %3821 = vmatprep.subr.mxu0 0.0
          %3822 = vmatpush1.xpose.msra.mxu0 0.0
          %3823 = vmatprep.subr.mxu0 0.0
          %3824 = vmatpush1.xpose.msra.mxu0 0.0
          %3825 = vmatprep.subr.mxu0 0.0
          %3826 = vmatpush1.xpose.msra.mxu0 0.0
          %3827 = vmatprep.subr.mxu0 0.0
          %3828 = vmatpush1.xpose.msra.mxu0 0.0
          %3829 = vmatprep.subr.mxu0 0.0
          %3830 = vmatpush1.xpose.msra.mxu0 0.0
          %3831 = vmatprep.subr.mxu0 0.0
          %3832 = vmatpush1.xpose.msra.mxu0 0.0
          %3833 = vmatprep.subr.mxu0 0.0
          %3834 = vmatpush1.xpose.msra.mxu0 0.0
          %3835 = vmatprep.subr.mxu0 0.0
          %3836 = vmatpush1.xpose.msra.mxu0 0.0
          %3837 = vmatprep.subr.mxu0 0.0
          %3838 = vmatpush1.xpose.msra.mxu0 0.0
          %3839 = vmatprep.subr.mxu0 0.0
          %3840 = vmatpush1.xpose.msra.mxu0 0.0
          %3841 = vmatprep.subr.mxu0 0.0
          %3842 = vmatpush1.xpose.msra.mxu0 0.0
          %3843 = vmatprep.subr.mxu0 0.0
          %3844 = vmatpush1.xpose.msra.mxu0 0.0
          %3845 = vmatprep.subr.mxu0 0.0
          %3846 = vmatpush1.xpose.msra.mxu0 0.0
          %3847 = vmatprep.subr.mxu0 0.0
          %3848 = vmatpush1.xpose.msra.mxu0 0.0
          %3849 = vmatprep.subr.mxu0 0.0
          %3850 = vmatpush1.xpose.msra.mxu0 0.0
          %3851 = vmatprep.subr.mxu0 0.0
          %3852 = vmatpush1.xpose.msra.mxu0 0.0
          %3853 = vmatprep.subr.mxu0 0.0
          %3854 = vmatpush1.xpose.msra.mxu0 0.0
          %3855 = vmatprep.subr.mxu0 0.0
          %3856 = vmatpush1.xpose.msra.mxu0 0.0
          %3857 = vmatprep.subr.mxu0 0.0
          %3858 = vmatpush1.xpose.msra.mxu0 0.0
          %3859 = vmatprep.subr.mxu0 0.0
          %3860 = vmatpush1.xpose.msra.mxu0 0.0
          %3861 = vmatprep.subr.mxu0 0.0
          %3862 = vmatpush1.xpose.msra.mxu0 0.0
          %3863 = vmatprep.subr.mxu0 0.0
          %3864 = vmatpush1.xpose.msra.mxu0 0.0
          %3865 = vmatprep.subr.mxu0 0.0
          %3866 = vmatpush1.xpose.msra.mxu0 0.0
          %3867 = vmatprep.subr.mxu0 0.0
          %3868 = vmatpush1.xpose.msra.mxu0 0.0
          %3869 = vmatprep.subr.mxu0 0.0
          %3870 = vmatpush1.xpose.msra.mxu0 0.0
          %3871 = vmatprep.subr.mxu0 0.0
          %3872 = vmatpush1.xpose.msra.mxu0 0.0
          %3873 = vmatprep.subr.mxu0 0.0
          %3874 = vmatpush1.xpose.msra.mxu0 0.0
          %3875 = vmatprep.subr.mxu0 0.0
          %3876 = vmatpush1.xpose.msra.mxu0 0.0
          %3877 = vmatprep.subr.mxu0 0.0
          %3878 = vmatpush1.xpose.msra.mxu0 0.0
          %3879 = vmatprep.mubr.f32.mxu0 0.0
          %3880 = vmatmul.mubr.f32.gmra.mrb[0].mxu0 %v3807
          %v3881 = vpop.f32.mrb[0].mxu0
          %v3882 = vadd.f32 0.0, %v3881
          %v3883 = vpop.f32.mrb[0].mxu0
          %3884 = vmatprep.mubr.f32.mxu0 0.0
          %3885 = vmatmul.mubr.f32.gmra.mrb[0].mxu0 %v3809
          %v3886 = vpop.f32.mrb[0].mxu0
          %v3887 = vadd.f32 0.0, %v3886
          %v3888 = vpop.f32.mrb[0].mxu0
          %3889 = vdwg.mxu0
          %v3890 = vsel %vm1216, %v3882, -inf
          %3891 = vmax.xlane.f32.xlu0 %v3890
          %v3892 = vpop.xlane.xlu0 %3891
          %v3893 = vsel %vm1216, %v3887, -inf
          %3894 = vmax.xlane.f32.xlu0 %v3893
          %v3895 = vpop.xlane.xlu0 %3894
          %v3896 = vsub.f32 %v3882, %v3892
          %v3897 = vsub.f32 %v3887, %v3895
          %v3898 = vmul.f32 %v3896, 1.442695
          %v3899 = vpow.pop %v3898
          %v3900 = vmul.f32 %v3897, 1.442695
          %v3901 = vpow.pop %v3900
          %v3902 = vsel %vm1216, %v3899, 0.0
          %3903 = vadd.xlane.f32.xlu0 %v3902
          %v3904 = vpop.xlane.xlu0 %3903
          %v3905 = vsel %vm1216, %v3901, 0.0
          %3906 = vadd.xlane.f32.xlu0 %v3905
          %v3907 = vpop.xlane.xlu0 %3906
          %v3908 = vrcp.pop %v3904
          %v3909 = vmul.f32 1.0, %v3908
          %v3910 = vrcp.pop %v3907
          %v3911 = vmul.f32 1.0, %v3910
          %v3912 = vmul.f32 %v3899, %v3909
          %v3913 = vmul.f32 %v3901, %v3911
          %3916 = vrot.lane.b32.xlu0 %v3597, 124
          %v3917 = vpop.permute.xlu0 %3916
          %3918 = vrot.lane.b32.xlu0 %v3602, 124
          %v3919 = vpop.permute.xlu0 %3918
          %v3923 = vsel %vm1216, %v3912, 0
          %v3926 = vsel %vm1216, %v3913, 0
          %3928 = vmatprep.subr.mxu0 0.0
          %3929 = vmatpush1.msra.mxu0 %v3917
          %3930 = vmatprep.subr.mxu0 0.0
          %3931 = vmatpush1.msra.mxu0 %v3919
          %3932 = vmatprep.subr.mxu0 0.0
          %3933 = vmatpush1.msra.mxu0 0.0
          %3934 = vmatprep.subr.mxu0 0.0
          %3935 = vmatpush1.msra.mxu0 0.0
          %3936 = vmatprep.subr.mxu0 0.0
          %3937 = vmatpush1.msra.mxu0 0.0
          %3938 = vmatprep.subr.mxu0 0.0
          %3939 = vmatpush1.msra.mxu0 0.0
          %3940 = vmatprep.subr.mxu0 0.0
          %3941 = vmatpush1.msra.mxu0 0.0
          %3942 = vmatprep.subr.mxu0 0.0
          %3943 = vmatpush1.msra.mxu0 0.0
          %3944 = vmatprep.subr.mxu0 0.0
          %3945 = vmatpush1.msra.mxu0 0.0
          %3946 = vmatprep.subr.mxu0 0.0
          %3947 = vmatpush1.msra.mxu0 0.0
          %3948 = vmatprep.subr.mxu0 0.0
          %3949 = vmatpush1.msra.mxu0 0.0
          %3950 = vmatprep.subr.mxu0 0.0
          %3951 = vmatpush1.msra.mxu0 0.0
          %3952 = vmatprep.subr.mxu0 0.0
          %3953 = vmatpush1.msra.mxu0 0.0
          %3954 = vmatprep.subr.mxu0 0.0
          %3955 = vmatpush1.msra.mxu0 0.0
          %3956 = vmatprep.subr.mxu0 0.0
          %3957 = vmatpush1.msra.mxu0 0.0
          %3958 = vmatprep.subr.mxu0 0.0
          %3959 = vmatpush1.msra.mxu0 0.0
          %3960 = vmatprep.subr.mxu0 0.0
          %3961 = vmatpush1.msra.mxu0 0.0
          %3962 = vmatprep.subr.mxu0 0.0
          %3963 = vmatpush1.msra.mxu0 0.0
          %3964 = vmatprep.subr.mxu0 0.0
          %3965 = vmatpush1.msra.mxu0 0.0
          %3966 = vmatprep.subr.mxu0 0.0
          %3967 = vmatpush1.msra.mxu0 0.0
          %3968 = vmatprep.subr.mxu0 0.0
          %3969 = vmatpush1.msra.mxu0 0.0
          %3970 = vmatprep.subr.mxu0 0.0
          %3971 = vmatpush1.msra.mxu0 0.0
          %3972 = vmatprep.subr.mxu0 0.0
          %3973 = vmatpush1.msra.mxu0 0.0
          %3974 = vmatprep.subr.mxu0 0.0
          %3975 = vmatpush1.msra.mxu0 0.0
          %3976 = vmatprep.subr.mxu0 0.0
          %3977 = vmatpush1.msra.mxu0 0.0
          %3978 = vmatprep.subr.mxu0 0.0
          %3979 = vmatpush1.msra.mxu0 0.0
          %3980 = vmatprep.subr.mxu0 0.0
          %3981 = vmatpush1.msra.mxu0 0.0
          %3982 = vmatprep.subr.mxu0 0.0
          %3983 = vmatpush1.msra.mxu0 0.0
          %3984 = vmatprep.subr.mxu0 0.0
          %3985 = vmatpush1.msra.mxu0 0.0
          %3986 = vmatprep.subr.mxu0 0.0
          %3987 = vmatpush1.msra.mxu0 0.0
          %3988 = vmatprep.subr.mxu0 0.0
          %3989 = vmatpush1.msra.mxu0 0.0
          %3990 = vmatprep.subr.mxu0 0.0
          %3991 = vmatpush1.msra.mxu0 0.0
          %3992 = vmatprep.mubr.f32.mxu0 0.0
          %3993 = vmatmul.mubr.f32.gmra.mrb[0].mxu0 %v3923
          %v3994 = vpop.f32.mrb[0].mxu0
          %v3995 = vadd.f32 0.0, %v3994
          %v3996 = vpop.f32.mrb[0].mxu0
          %3997 = vmatprep.mubr.f32.mxu0 0.0
          %3998 = vmatmul.mubr.f32.gmra.mrb[0].mxu0 %v3926
          %v3999 = vpop.f32.mrb[0].mxu0
          %v4000 = vadd.f32 0.0, %v3999
          %v4001 = vpop.f32.mrb[0].mxu0
          %4002 = vdwg.mxu0
          %4005 = vrot.lane.b32.xlu0 %v3995, 4
          %v4006 = vpop.permute.xlu0 %4005
          %4007 = vrot.lane.b32.xlu0 %v4000, 4
          %v4008 = vpop.permute.xlu0 %4007
          %4011 = vst.msk [vmem:[#allocation2] sm:$0xff] %vm1536, %v4006
          %4012 = vst.msk [vmem:[#allocation2 + $0x8] sm:$0xff] %vm1536, %v4008
          %v4013 = vld [vmem:[#allocation2] sm:$0xff]
          %v4014 = vld [vmem:[#allocation2 + $0x8] sm:$0xff]
          %s4015 = scalar_lea.vmem %s1, 32
          %v4016 = vld [vmem:[%s4015] sm:$0xff]
          %v4017 = vld [vmem:[%s4015 + $0x8] sm:$0xff]
          %v4019 = vsel %vm1216, %v4016, 0
          %v4022 = vsel %vm1216, %v4017, 0
          %4024 = vmatprep.subr.mxu0 0.0
          %4025 = vmatpush1.msra.mxu0 %v4013
          %4026 = vmatprep.subr.mxu0 0.0
          %4027 = vmatpush1.msra.mxu0 %v4014
          %4028 = vmatprep.subr.mxu0 0.0
          %4029 = vmatpush1.msra.mxu0 0.0
          %4030 = vmatprep.subr.mxu0 0.0
          %4031 = vmatpush1.msra.mxu0 0.0
          %4032 = vmatprep.subr.mxu0 0.0
          %4033 = vmatpush1.msra.mxu0 0.0
          %4034 = vmatprep.subr.mxu0 0.0
          %4035 = vmatpush1.msra.mxu0 0.0
          %4036 = vmatprep.subr.mxu0 0.0
          %4037 = vmatpush1.msra.mxu0 0.0
          %4038 = vmatprep.subr.mxu0 0.0
          %4039 = vmatpush1.msra.mxu0 0.0
          %4040 = vmatprep.subr.mxu0 0.0
          %4041 = vmatpush1.msra.mxu0 0.0
          %4042 = vmatprep.subr.mxu0 0.0
          %4043 = vmatpush1.msra.mxu0 0.0
          %4044 = vmatprep.subr.mxu0 0.0
          %4045 = vmatpush1.msra.mxu0 0.0
          %4046 = vmatprep.subr.mxu0 0.0
          %4047 = vmatpush1.msra.mxu0 0.0
          %4048 = vmatprep.subr.mxu0 0.0
          %4049 = vmatpush1.msra.mxu0 0.0
          %4050 = vmatprep.subr.mxu0 0.0
          %4051 = vmatpush1.msra.mxu0 0.0
          %4052 = vmatprep.subr.mxu0 0.0
          %4053 = vmatpush1.msra.mxu0 0.0
          %4054 = vmatprep.subr.mxu0 0.0
          %4055 = vmatpush1.msra.mxu0 0.0
          %4056 = vmatprep.subr.mxu0 0.0
          %4057 = vmatpush1.msra.mxu0 0.0
          %4058 = vmatprep.subr.mxu0 0.0
          %4059 = vmatpush1.msra.mxu0 0.0
          %4060 = vmatprep.subr.mxu0 0.0
          %4061 = vmatpush1.msra.mxu0 0.0
          %4062 = vmatprep.subr.mxu0 0.0
          %4063 = vmatpush1.msra.mxu0 0.0
          %4064 = vmatprep.subr.mxu0 0.0
          %4065 = vmatpush1.msra.mxu0 0.0
          %4066 = vmatprep.subr.mxu0 0.0
          %4067 = vmatpush1.msra.mxu0 0.0
          %4068 = vmatprep.subr.mxu0 0.0
          %4069 = vmatpush1.msra.mxu0 0.0
          %4070 = vmatprep.subr.mxu0 0.0
          %4071 = vmatpush1.msra.mxu0 0.0
          %4072 = vmatprep.subr.mxu0 0.0
          %4073 = vmatpush1.msra.mxu0 0.0
          %4074 = vmatprep.subr.mxu0 0.0
          %4075 = vmatpush1.msra.mxu0 0.0
          %4076 = vmatprep.subr.mxu0 0.0
          %4077 = vmatpush1.msra.mxu0 0.0
          %4078 = vmatprep.subr.mxu0 0.0
          %4079 = vmatpush1.msra.mxu0 0.0
          %4080 = vmatprep.subr.mxu0 0.0
          %4081 = vmatpush1.msra.mxu0 0.0
          %4082 = vmatprep.subr.mxu0 0.0
          %4083 = vmatpush1.msra.mxu0 0.0
          %4084 = vmatprep.subr.mxu0 0.0
          %4085 = vmatpush1.msra.mxu0 0.0
          %4086 = vmatprep.subr.mxu0 0.0
          %4087 = vmatpush1.msra.mxu0 0.0
          %4088 = vmatprep.mubr.f32.mxu0 0.0
          %4089 = vmatmul.mubr.f32.gmra.mrb[0].mxu0 %v4019
          %v4090 = vpop.f32.mrb[0].mxu0
          %v4091 = vadd.f32 0.0, %v4090
          %v4092 = vpop.f32.mrb[0].mxu0
          %4093 = vmatprep.mubr.f32.mxu0 0.0
          %4094 = vmatmul.mubr.f32.gmra.mrb[0].mxu0 %v4022
          %v4095 = vpop.f32.mrb[0].mxu0
          %v4096 = vadd.f32 0.0, %v4095
          %v4097 = vpop.f32.mrb[0].mxu0
          %4098 = vdwg.mxu0
          %4101 = vrot.lane.b32.xlu0 %v4091, 24
          %v4102 = vpop.permute.xlu0 %4101
          %4103 = vrot.lane.b32.xlu0 %v4096, 24
          %v4104 = vpop.permute.xlu0 %4103
          %vm4107 = vcmask 261312
          %4108 = vst.msk [vmem:[#allocation3] sm:$0xff] %vm4107, %v4102
          %4109 = vst.msk [vmem:[#allocation3 + $0x8] sm:$0xff] %vm4107, %v4104
          %v4110 = vld [vmem:[#allocation3] sm:$0xff]
          %v4111 = vld [vmem:[#allocation3 + $0x8] sm:$0xff]
          %v4112 = vld [vmem:[%s12] sm:$0xff]
          %v4113 = vld [vmem:[%s12 + $0x8] sm:$0xff]
          %v4114 = vld [vmem:[%s12 + $0x10] sm:$0xff]
          %v4115 = vld [vmem:[%s12 + $0x18] sm:$0xff]
          %v4116 = vld [vmem:[%s13] sm:$0x1]
          %v4118 = vlaneseq
          %v4119 = vshrl.u32 %v4118, 7
          %v4120 = vsub.s32 0, %v4119
          %v4121 = vrot.slane %v4116, %v4120
          %v4124 = vsel %vm734, %v4110, 0
          %v4127 = vsel %vm734, %v4111, 0
          %4129 = vmatprep.subr.mxu0 0.0
          %4130 = vmatpush1.msra.mxu0 %v4112
          %4131 = vmatprep.subr.mxu0 0.0
          %4132 = vmatpush1.msra.mxu0 %v4113
          %4133 = vmatprep.subr.mxu0 0.0
          %4134 = vmatpush1.msra.mxu0 %v4114
          %4135 = vmatprep.subr.mxu0 0.0
          %4136 = vmatpush1.msra.mxu0 %v4115
          %4137 = vmatprep.subr.mxu0 0.0
          %4138 = vmatpush1.msra.mxu0 0.0
          %4139 = vmatprep.subr.mxu0 0.0
          %4140 = vmatpush1.msra.mxu0 0.0
          %4141 = vmatprep.subr.mxu0 0.0
          %4142 = vmatpush1.msra.mxu0 0.0
          %4143 = vmatprep.subr.mxu0 0.0
          %4144 = vmatpush1.msra.mxu0 0.0
          %4145 = vmatprep.subr.mxu0 0.0
          %4146 = vmatpush1.msra.mxu0 0.0
          %4147 = vmatprep.subr.mxu0 0.0
          %4148 = vmatpush1.msra.mxu0 0.0
          %4149 = vmatprep.subr.mxu0 0.0
          %4150 = vmatpush1.msra.mxu0 0.0
          %4151 = vmatprep.subr.mxu0 0.0
          %4152 = vmatpush1.msra.mxu0 0.0
          %4153 = vmatprep.subr.mxu0 0.0
          %4154 = vmatpush1.msra.mxu0 0.0
          %4155 = vmatprep.subr.mxu0 0.0
          %4156 = vmatpush1.msra.mxu0 0.0
          %4157 = vmatprep.subr.mxu0 0.0
          %4158 = vmatpush1.msra.mxu0 0.0
          %4159 = vmatprep.subr.mxu0 0.0
          %4160 = vmatpush1.msra.mxu0 0.0
          %4161 = vmatprep.subr.mxu0 0.0
          %4162 = vmatpush1.msra.mxu0 0.0
          %4163 = vmatprep.subr.mxu0 0.0
          %4164 = vmatpush1.msra.mxu0 0.0
          %4165 = vmatprep.subr.mxu0 0.0
          %4166 = vmatpush1.msra.mxu0 0.0
          %4167 = vmatprep.subr.mxu0 0.0
          %4168 = vmatpush1.msra.mxu0 0.0
          %4169 = vmatprep.subr.mxu0 0.0
          %4170 = vmatpush1.msra.mxu0 0.0
          %4171 = vmatprep.subr.mxu0 0.0
          %4172 = vmatpush1.msra.mxu0 0.0
          %4173 = vmatprep.subr.mxu0 0.0
          %4174 = vmatpush1.msra.mxu0 0.0
          %4175 = vmatprep.subr.mxu0 0.0
          %4176 = vmatpush1.msra.mxu0 0.0
          %4177 = vmatprep.subr.mxu0 0.0
          %4178 = vmatpush1.msra.mxu0 0.0
          %4179 = vmatprep.subr.mxu0 0.0
          %4180 = vmatpush1.msra.mxu0 0.0
          %4181 = vmatprep.subr.mxu0 0.0
          %4182 = vmatpush1.msra.mxu0 0.0
          %4183 = vmatprep.subr.mxu0 0.0
          %4184 = vmatpush1.msra.mxu0 0.0
          %4185 = vmatprep.subr.mxu0 0.0
          %4186 = vmatpush1.msra.mxu0 0.0
          %4187 = vmatprep.subr.mxu0 0.0
          %4188 = vmatpush1.msra.mxu0 0.0
          %4189 = vmatprep.subr.mxu0 0.0
          %4190 = vmatpush1.msra.mxu0 0.0
          %4191 = vmatprep.subr.mxu0 0.0
          %4192 = vmatpush1.msra.mxu0 0.0
          %4193 = vmatprep.mubr.f32.mxu0 0.0
          %4194 = vmatmul.mubr.f32.gmra.mrb[0].mxu0 %v4124
          %v4195 = vpop.f32.mrb[0].mxu0
          %v4196 = vadd.f32 %v4121, %v4195
          %v4197 = vpop.f32.mrb[0].mxu0
          %4198 = vmatprep.mubr.f32.mxu0 0.0
          %4199 = vmatmul.mubr.f32.gmra.mrb[0].mxu0 %v4127
          %v4200 = vpop.f32.mrb[0].mxu0
          %v4201 = vadd.f32 %v4121, %v4200
          %v4202 = vpop.f32.mrb[0].mxu0
          %4203 = vdwg.mxu0
          %v4204 = vadd.f32 %v4196, %v730
          %v4205 = vadd.f32 %v4201, %v731
          %v4206 = vld [vmem:[%s14] sm:$0x1]
          %v4207 = vld [vmem:[#allocation9] sm:$0x1]
          %v4208 = vsel %vm734, %v4204, 0.0
          %4209 = vadd.xlane.f32.xlu0 %v4208
          %v4210 = vpop.xlane.xlu0 %4209
          %v4211 = vsel %vm734, %v4205, 0.0
          %4212 = vadd.xlane.f32.xlu0 %v4211
          %v4213 = vpop.xlane.xlu0 %4212
          %v4214 = vmul.f32 %v4210, %v741
          %v4215 = vmul.f32 %v4213, %v741
          %v4216 = vsub.f32 %v4204, %v4214
          %v4217 = vsub.f32 %v4205, %v4215
          %v4218 = vmul.f32 %v4216, %v4216
          %v4219 = vmul.f32 %v4217, %v4217
          %v4220 = vsel %vm734, %v4218, 0.0
          %4221 = vadd.xlane.f32.xlu0 %v4220
          %v4222 = vpop.xlane.xlu0 %4221
          %v4223 = vsel %vm734, %v4219, 0.0
          %4224 = vadd.xlane.f32.xlu0 %v4223
          %v4225 = vpop.xlane.xlu0 %4224
          %v4226 = vmul.f32 %v4222, %v741
          %v4227 = vmul.f32 %v4225, %v741
          %v4228 = vadd.f32 %v4226, 1e-05
          %v4229 = vadd.f32 %v4227, 1e-05
          %v4230 = vrsqrt.pop %v4228
          %v4231 = vrsqrt.pop %v4229
          %v4232 = vmul.f32 %v4216, %v4230
          %v4233 = vmul.f32 %v4217, %v4231
          %v4235 = vlaneseq
          %v4236 = vshrl.u32 %v4235, 7
          %v4237 = vsub.s32 0, %v4236
          %v4238 = vrot.slane %v4206, %v4237
          %v4240 = vmul.f32 %v4232, %v4238
          %v4241 = vmul.f32 %v4233, %v4238
          %v4243 = vlaneseq
          %v4244 = vshrl.u32 %v4243, 7
          %v4245 = vsub.s32 0, %v4244
          %v4246 = vrot.slane %v4207, %v4245
          %v4248 = vadd.f32 %v4240, %v4246
          %v4249 = vadd.f32 %v4241, %v4246
          %4250 = vst.msk [vmem:[#allocation4] sm:$0xff] %vm734, %v4248
          %4251 = vst.msk [vmem:[#allocation4 + $0x8] sm:$0xff] %vm734, %v4249
          %v4252 = vld [vmem:[%s19] sm:$0x1]
          %v4254 = vlaneseq
          %v4255 = vshrl.u32 %v4254, 7
          %v4256 = vsub.s32 0, %v4255
          %v4257 = vrot.slane %v4252, %v4256
          %v4259 = vadd.f32 %v4204, %v4257
          %v4260 = vadd.f32 %v4205, %v4257
          %4261 = vst.msk [vmem:[#allocation5] sm:$0xff] %vm734, %v4259
          %4262 = vst.msk [vmem:[#allocation5 + $0x8] sm:$0xff] %vm734, %v4260
        $region116: #{tpu_custom_call.1} parent=99 // pred_fallthru
          _
        %v4263 = vld [vmem:[#allocation4] sm:$0xff]
        %v4264 = vld [vmem:[#allocation4 + $0x8] sm:$0xff]
        %v4265 = vld [vmem:[%s719] sm:$0xff]
        %v4266 = vld [vmem:[%s719 + $0x8] sm:$0xff]
        %v4267 = vld [vmem:[%s719 + $0x10] sm:$0xff]
        %v4268 = vld [vmem:[%s719 + $0x18] sm:$0xff]
        %v4269 = vld [vmem:[#allocation11] sm:$0x1]
        %v4271 = vlaneseq
        %v4272 = vshrl.u32 %v4271, 7
        %v4273 = vsub.s32 0, %v4272
        %v4274 = vrot.slane %v4269, %v4273
        %vm4276 = vcmask 261120
        %v4278 = vsel %vm4276, %v4263, 0
        %v4281 = vsel %vm4276, %v4264, 0
        %4283 = vmatprep.subr.mxu0 0.0
        %4284 = vmatpush1.msra.mxu0 %v4265
        %4285 = vmatprep.subr.mxu0 0.0
        %4286 = vmatpush1.msra.mxu0 %v4266
        %4287 = vmatprep.subr.mxu0 0.0
        %4288 = vmatpush1.msra.mxu0 %v4267
        %4289 = vmatprep.subr.mxu0 0.0
        %4290 = vmatpush1.msra.mxu0 %v4268
        %4291 = vmatprep.subr.mxu0 0.0
        %4292 = vmatpush1.msra.mxu0 0.0
        %4293 = vmatprep.subr.mxu0 0.0
        %4294 = vmatpush1.msra.mxu0 0.0
        %4295 = vmatprep.subr.mxu0 0.0
        %4296 = vmatpush1.msra.mxu0 0.0
        %4297 = vmatprep.subr.mxu0 0.0
        %4298 = vmatpush1.msra.mxu0 0.0
        %4299 = vmatprep.subr.mxu0 0.0
        %4300 = vmatpush1.msra.mxu0 0.0
        %4301 = vmatprep.subr.mxu0 0.0
        %4302 = vmatpush1.msra.mxu0 0.0
        %4303 = vmatprep.subr.mxu0 0.0
        %4304 = vmatpush1.msra.mxu0 0.0
        %4305 = vmatprep.subr.mxu0 0.0
        %4306 = vmatpush1.msra.mxu0 0.0
        %4307 = vmatprep.subr.mxu0 0.0
        %4308 = vmatpush1.msra.mxu0 0.0
        %4309 = vmatprep.subr.mxu0 0.0
        %4310 = vmatpush1.msra.mxu0 0.0
        %4311 = vmatprep.subr.mxu0 0.0
        %4312 = vmatpush1.msra.mxu0 0.0
        %4313 = vmatprep.subr.mxu0 0.0
        %4314 = vmatpush1.msra.mxu0 0.0
        %4315 = vmatprep.subr.mxu0 0.0
        %4316 = vmatpush1.msra.mxu0 0.0
        %4317 = vmatprep.subr.mxu0 0.0
        %4318 = vmatpush1.msra.mxu0 0.0
        %4319 = vmatprep.subr.mxu0 0.0
        %4320 = vmatpush1.msra.mxu0 0.0
        %4321 = vmatprep.subr.mxu0 0.0
        %4322 = vmatpush1.msra.mxu0 0.0
        %4323 = vmatprep.subr.mxu0 0.0
        %4324 = vmatpush1.msra.mxu0 0.0
        %4325 = vmatprep.subr.mxu0 0.0
        %4326 = vmatpush1.msra.mxu0 0.0
        %4327 = vmatprep.subr.mxu0 0.0
        %4328 = vmatpush1.msra.mxu0 0.0
        %4329 = vmatprep.subr.mxu0 0.0
        %4330 = vmatpush1.msra.mxu0 0.0
        %4331 = vmatprep.subr.mxu0 0.0
        %4332 = vmatpush1.msra.mxu0 0.0
        %4333 = vmatprep.subr.mxu0 0.0
        %4334 = vmatpush1.msra.mxu0 0.0
        %4335 = vmatprep.subr.mxu0 0.0
        %4336 = vmatpush1.msra.mxu0 0.0
        %4337 = vmatprep.subr.mxu0 0.0
        %4338 = vmatpush1.msra.mxu0 0.0
        %4339 = vmatprep.subr.mxu0 0.0
        %4340 = vmatpush1.msra.mxu0 0.0
        %4341 = vmatprep.subr.mxu0 0.0
        %4342 = vmatpush1.msra.mxu0 0.0
        %4343 = vmatprep.subr.mxu0 0.0
        %4344 = vmatpush1.msra.mxu0 0.0
        %4345 = vmatprep.subr.mxu0 0.0
        %4346 = vmatpush1.msra.mxu0 0.0
        %4347 = vmatprep.mubr.f32.mxu0 0.0
        %4348 = vmatmul.mubr.f32.gmra.mrb[0].mxu0 %v4278
        %v4349 = vpop.f32.mrb[0].mxu0
        %v4350 = vadd.f32 %v4274, %v4349
        %v4351 = vpop.f32.mrb[0].mxu0
        %4352 = vmatprep.mubr.f32.mxu0 0.0
        %4353 = vmatmul.mubr.f32.gmra.mrb[0].mxu0 %v4281
        %v4354 = vpop.f32.mrb[0].mxu0
        %v4355 = vadd.f32 %v4274, %v4354
        %v4356 = vpop.f32.mrb[0].mxu0
        %4357 = vdwg.mxu0
        %v4358 = vmul.f32 %v4350, 0.5
        %v4359 = vmul.f32 %v4355, 0.5
        %v4360 = vmul.f32 %v4350, 0.70710677
        %v4361 = vmul.f32 %v4355, 0.70710677
        %v4362 = vand.u32 2147483647, %v4360
        %v4363 = vand.u32 2147483647, %v4361
        %v4364 = vmul.f32 %v4362, 0.3275911
        %v4365 = vmul.f32 %v4363, 0.3275911
        %v4366 = vadd.f32 %v4364, 1.0
        %v4367 = vadd.f32 %v4365, 1.0
        %v4368 = vrcp.pop %v4366
        %v4369 = vmul.f32 1.0, %v4368
        %v4370 = vrcp.pop %v4367
        %v4371 = vmul.f32 1.0, %v4370
        %v4372 = vmul.f32 %v4369, 1.0614054
        %v4373 = vmul.f32 %v4371, 1.0614054
        %v4374 = vadd.f32 %v4372, -1.4531521
        %v4375 = vadd.f32 %v4373, -1.4531521
        %v4376 = vmul.f32 %v4374, %v4369
        %v4377 = vmul.f32 %v4375, %v4371
        %v4378 = vadd.f32 %v4376, 1.4214138
        %v4379 = vadd.f32 %v4377, 1.4214138
        %v4380 = vmul.f32 %v4378, %v4369
        %v4381 = vmul.f32 %v4379, %v4371
        %v4382 = vadd.f32 %v4380, -0.28449672
        %v4383 = vadd.f32 %v4381, -0.28449672
        %v4384 = vmul.f32 %v4382, %v4369
        %v4385 = vmul.f32 %v4383, %v4371
        %v4386 = vadd.f32 %v4384, 0.2548296
        %v4387 = vadd.f32 %v4385, 0.2548296
        %v4388 = vmul.f32 %v4386, %v4369
        %v4389 = vmul.f32 %v4387, %v4371
        %v4390 = vsub.f32 0.0, %v4362
        %v4391 = vsub.f32 0.0, %v4363
        %v4392 = vmul.f32 %v4390, %v4362
        %v4393 = vmul.f32 %v4391, %v4363
        %v4394 = vmul.f32 %v4392, 1.442695
        %v4395 = vpow.pop %v4394
        %v4396 = vmul.f32 %v4393, 1.442695
        %v4397 = vpow.pop %v4396
        %v4398 = vmul.f32 %v4388, %v4395
        %v4399 = vmul.f32 %v4389, %v4397
        %v4400 = vsub.f32 1.0, %v4398
        %v4401 = vsub.f32 1.0, %v4399
        %vm4402 = vcmp.ge.f32.partialorder %v4360, 0.0
        %vm4403 = vcmp.ge.f32.partialorder %v4361, 0.0
        %v4404 = vsub.f32 0.0, %v4400
        %v4405 = vsub.f32 0.0, %v4401
        %v4406 = vsel %vm4402, %v4400, %v4404
        %v4407 = vsel %vm4403, %v4401, %v4405
        %v4408 = vadd.f32 %v4406, 1.0
        %v4409 = vadd.f32 %v4407, 1.0
        %v4410 = vmul.f32 %v4358, %v4408
        %v4411 = vmul.f32 %v4359, %v4409
        %v4412 = vld [vmem:[#allocation5] sm:$0xff]
        %v4413 = vld [vmem:[#allocation5 + $0x8] sm:$0xff]
        %v4414 = vld [vmem:[%s724] sm:$0xff]
        %v4415 = vld [vmem:[%s724 + $0x8] sm:$0xff]
        %v4416 = vld [vmem:[%s724 + $0x10] sm:$0xff]
        %v4417 = vld [vmem:[%s724 + $0x18] sm:$0xff]
        %v4418 = vld [vmem:[%s724 + $0x20] sm:$0xff]
        %v4419 = vld [vmem:[%s724 + $0x28] sm:$0xff]
        %v4420 = vld [vmem:[%s724 + $0x30] sm:$0xff]
        %v4421 = vld [vmem:[%s724 + $0x38] sm:$0xff]
        %vm4422 = vcmask 523264
        %v4424 = vsel %vm4422, %v4410, 0
        %v4427 = vsel %vm4422, %v4411, 0
        %4429 = vmatprep.subr.mxu0 0.0
        %4430 = vmatpush1.msra.mxu0 %v4414
        %4431 = vmatprep.subr.mxu0 0.0
        %4432 = vmatpush1.msra.mxu0 %v4415
        %4433 = vmatprep.subr.mxu0 0.0
        %4434 = vmatpush1.msra.mxu0 %v4416
        %4435 = vmatprep.subr.mxu0 0.0
        %4436 = vmatpush1.msra.mxu0 %v4417
        %4437 = vmatprep.subr.mxu0 0.0
        %4438 = vmatpush1.msra.mxu0 %v4418
        %4439 = vmatprep.subr.mxu0 0.0
        %4440 = vmatpush1.msra.mxu0 %v4419
        %4441 = vmatprep.subr.mxu0 0.0
        %4442 = vmatpush1.msra.mxu0 %v4420
        %4443 = vmatprep.subr.mxu0 0.0
        %4444 = vmatpush1.msra.mxu0 %v4421
        %4445 = vmatprep.subr.mxu0 0.0
        %4446 = vmatpush1.msra.mxu0 0.0
        %4447 = vmatprep.subr.mxu0 0.0
        %4448 = vmatpush1.msra.mxu0 0.0
        %4449 = vmatprep.subr.mxu0 0.0
        %4450 = vmatpush1.msra.mxu0 0.0
        %4451 = vmatprep.subr.mxu0 0.0
        %4452 = vmatpush1.msra.mxu0 0.0
        %4453 = vmatprep.subr.mxu0 0.0
        %4454 = vmatpush1.msra.mxu0 0.0
        %4455 = vmatprep.subr.mxu0 0.0
        %4456 = vmatpush1.msra.mxu0 0.0
        %4457 = vmatprep.subr.mxu0 0.0
        %4458 = vmatpush1.msra.mxu0 0.0
        %4459 = vmatprep.subr.mxu0 0.0
        %4460 = vmatpush1.msra.mxu0 0.0
        %4461 = vmatprep.subr.mxu0 0.0
        %4462 = vmatpush1.msra.mxu0 0.0
        %4463 = vmatprep.subr.mxu0 0.0
        %4464 = vmatpush1.msra.mxu0 0.0
        %4465 = vmatprep.subr.mxu0 0.0
        %4466 = vmatpush1.msra.mxu0 0.0
        %4467 = vmatprep.subr.mxu0 0.0
        %4468 = vmatpush1.msra.mxu0 0.0
        %4469 = vmatprep.subr.mxu0 0.0
        %4470 = vmatpush1.msra.mxu0 0.0
        %4471 = vmatprep.subr.mxu0 0.0
        %4472 = vmatpush1.msra.mxu0 0.0
        %4473 = vmatprep.subr.mxu0 0.0
        %4474 = vmatpush1.msra.mxu0 0.0
        %4475 = vmatprep.subr.mxu0 0.0
        %4476 = vmatpush1.msra.mxu0 0.0
        %4477 = vmatprep.subr.mxu0 0.0
        %4478 = vmatpush1.msra.mxu0 0.0
        %4479 = vmatprep.subr.mxu0 0.0
        %4480 = vmatpush1.msra.mxu0 0.0
        %4481 = vmatprep.subr.mxu0 0.0
        %4482 = vmatpush1.msra.mxu0 0.0
        %4483 = vmatprep.subr.mxu0 0.0
        %4484 = vmatpush1.msra.mxu0 0.0
        %4485 = vmatprep.subr.mxu0 0.0
        %4486 = vmatpush1.msra.mxu0 0.0
        %4487 = vmatprep.subr.mxu0 0.0
        %4488 = vmatpush1.msra.mxu0 0.0
        %4489 = vmatprep.subr.mxu0 0.0
        %4490 = vmatpush1.msra.mxu0 0.0
        %4491 = vmatprep.subr.mxu0 0.0
        %4492 = vmatpush1.msra.mxu0 0.0
        %4493 = vmatprep.mubr.f32.mxu0 0.0
        %4494 = vmatmul.mubr.f32.gmra.mrb[0].mxu0 %v4424
        %v4495 = vpop.f32.mrb[0].mxu0
        %v4496 = vadd.f32 0.0, %v4495
        %v4497 = vpop.f32.mrb[0].mxu0
        %4498 = vmatprep.mubr.f32.mxu0 0.0
        %4499 = vmatmul.mubr.f32.gmra.mrb[0].mxu0 %v4427
        %v4500 = vpop.f32.mrb[0].mxu0
        %v4501 = vadd.f32 0.0, %v4500
        %v4502 = vpop.f32.mrb[0].mxu0
        %4503 = vdwg.mxu0
        %v4504 = vadd.f32 %v4412, %v4496
        %v4505 = vadd.f32 %v4413, %v4501
        %4506 = vst.msk [vmem:[#allocation5] sm:$0xff] %vm4276, %v4504
        %4507 = vst.msk [vmem:[#allocation5 + $0x8] sm:$0xff] %vm4276, %v4505
        // Predicated region
        $region117: #{tpu_custom_call.1} parent=99 // pred_check
          %p4508 = pneg %p726
        $region118: #{tpu_custom_call.1} parent=99 // pred_check_branch
          %4510 = sbr.rel (%p4508) target = $region120
        $region119: #{tpu_custom_call.1} parent=99 // pred_region
          %v4511 = vld [vmem:[#allocation5] sm:$0xff]
          %v4512 = vld [vmem:[#allocation5 + $0x8] sm:$0xff]
          %4513 = vst.msk [vmem:[%s710] sm:$0xff] %vm4276, %v4511
          %4514 = vst.msk [vmem:[%s710 + $0x8] sm:$0xff] %vm4276, %v4512
        $region120: #{tpu_custom_call.1} parent=99 // pred_fallthru
          _
        %s4515 = sand.u32 %s496, 1
        %s4516 = scalar_lea.sflag [#allocation8], %s4515
        %s4517 = sand.u32 %s496, 1
        %s4518 = smul.addr %s4517, 16
        %s4519 = scalar_lea.vmem [#allocation12], %s4518
        // Predicated region
        $region121: #{tpu_custom_call.1} parent=99 // pred_check
          %p4520 = pneg %p506
        $region122: #{tpu_custom_call.1} parent=99 // pred_check_branch
          %4522 = sbr.rel (%p4520) target = $region124
        $region123: #{tpu_custom_call.1} parent=99 // pred_region
          %s4524 = ssub.s32 256, 256
          %4525 = vsyncadd %s4516, %s4524
          %s4526 = smul.addr %s40, 2
          %s4527 = smul.addr %s4526, 128
          %s4528 = scalar_lea.hbm %s20, %s4527
          %s4529 = sshll.u32 %s4519, 4
          %s4530 = int_to_ptr.vmem [resolvable:$true] %s4529
          %4535 = dma.vmem_to_hbm [thread:$0]  %s4530, 256, %s4528, %s4516, 128, 128, 8
        $region124: #{tpu_custom_call.1} parent=99 // pred_fallthru
          _
      $region100: #{tpu_custom_call.1} parent=5 // pred_fallthru
        _
      %p4536 = scmp.le.s32.totalorder 2, %s31
      // Predicated region
      $region125: #{tpu_custom_call.1} parent=5 // pred_check
        %p4537 = pneg %p4536
      $region126: #{tpu_custom_call.1} parent=5 // pred_check_branch
        %4539 = sbr.rel (%p4537) target = $region128
      $region127: #{tpu_custom_call.1} parent=5 // pred_region
        %s4540 = ssub.s32 %s31, 2
        // Predicated region
        $region129: #{tpu_custom_call.1} parent=127 // pred_check
          %p4541 = pneg %p512
        $region130: #{tpu_custom_call.1} parent=127 // pred_check_branch
          %4543 = sbr.rel (%p4541) target = $region132
        $region131: #{tpu_custom_call.1} parent=127 // pred_region
          %s4544 = sand.u32 %s497, 1
          %s4545 = scalar_lea.sflag [#allocation8], %s4544
          %s4546 = sand.u32 %s497, 1
          %s4547 = smul.addr %s4546, 16
          %s4548 = scalar_lea.vmem [#allocation12], %s4547
          %4549 = dma.done %s4545, 256
        $region132: #{tpu_custom_call.1} parent=127 // pred_fallthru
          _
      $region128: #{tpu_custom_call.1} parent=5 // pred_fallthru
        _
    $region6: #{tpu_custom_call.1} parent=1 // loop_footer
      %s35 = sadd.s32 1, %s31
    $region7: #{tpu_custom_call.1} parent=1 // loop_footer_branch
      %30 = sbr.rel target = $region3
    $region8: #{tpu_custom_call.1} parent=1 // loop_exit
      _
    %4550 = vsyncpa [#allocation7], 1
    %s4551 = scalar_lea.sflag [#allocation7], 1
    %4552 = vsyncpa %s4551, 1
    %4553 = vsyncpa [#allocation10], 1
    %4554 = vsyncpa [#allocation8], 1
    %s4555 = scalar_lea.sflag [#allocation8], 1
    %4556 = vsyncpa %s4555, 1

</llo_original>
